<compile_context>
chip_gen: v7x
topology: tpu7x:2x2x1
jax: 0.10.0
libtpu: 0.0.40
codegen_flags: <defaults>
</compile_context>

<pallas_src>
import functools
import heapq

import jax
import jax.numpy as jnp
import numpy as np
from jax import lax
from jax.experimental import pallas as pl
from jax.experimental.pallas import tpu as pltpu

# ----------------------------- model config -----------------------------
VOCAB_SIZE = 50
EMBED_DIM = 32            # embedding_dim (small demo; module default is 512)
HIDDEN_NUM = 10           # number of applications of the *shared* hidden Linear
BATCH = 2
SEQ = 16
LABEL_COUNT = [("A", 5), ("B", 9), ("C", 12), ("D", 13), ("E", 16)]
NUM_LABELS = len(LABEL_COUNT)
LN_EPS = 1e-5

# tiling
BATCH_TILE = 8            # sublane-aligned batch tile
OUT_PAD = 128             # lane-dense padded width (labels AND internal nodes)


# ------------------------- Huffman tree (host) --------------------------
# TODO(synk): the original `get_huffman_tree` module is unavailable; we rebuild
# an equivalent Huffman coding (per-label (internal_node_id, bit) paths); the
# exact node/bit ordering of the original deepFirst traversal may differ.
def build_huffman_codes(label_count):
    heap = [(cnt, i, ("leaf", i)) for i, (_, cnt) in enumerate(label_count)]
    heapq.heapify(heap)
    uid = len(label_count)
    n_internal = 0
    while len(heap) > 1:
        c1, _, n1 = heapq.heappop(heap)
        c2, _, n2 = heapq.heappop(heap)
        node = ("internal", n_internal, n1, n2)
        n_internal += 1
        heapq.heappush(heap, (c1 + c2, uid, node))
        uid += 1
    root = heap[0][2]
    codes = [None] * len(label_count)

    def walk(node, path):
        if node[0] == "leaf":
            codes[node[1]] = list(path)
        else:
            walk(node[2], path + [(node[1], 0)])
            walk(node[3], path + [(node[1], 1)])

    walk(root, [])
    return codes, n_internal


HUFFMAN_CODES, NUM_INTERNAL = build_huffman_codes(LABEL_COUNT)


def build_path_matrices(codes, rows, cols):
    """Static 0/1 matrices (node x label), zero-padded to (rows, cols)."""
    m0 = np.zeros((rows, cols), np.float32)   # bit == 0 nodes on label's path
    m1 = np.zeros((rows, cols), np.float32)   # bit == 1 nodes on label's path
    for label, code in enumerate(codes):
        for node, bit in code:
            (m1 if bit else m0)[node, label] = 1.0
    return m0, m1


# ------------------------------ Pallas kernel ----------------------------
def fasttext_kernel(seq_len, ids_ref, emb_hbm, wc_ref, bc_ref, m0_ref, msum_ref,
                    out_ref, row_buf, sem, acc_ref):
    # ids_ref : SMEM (B_pad, S) int32   scalar-prefetched token ids
    # emb_hbm : HBM  (V, E)             raw embedding table (memory_space=ANY)
    # wc_ref  : VMEM (E, 128)           (A^10 @ dtheta_w^T) folded weight, padded
    # bc_ref  : VMEM (1, 128)           folded bias, padded
    # m0_ref  : VMEM (128, 128)         Huffman path matrix, bit==0 nodes
    # msum_ref: VMEM (128, 128)         m0 + m1
    # out_ref : VMEM (TB, 128)          lane-dense padded output block
    # row_buf : VMEM (2, E)             double-buffered gathered embedding row
    # sem     : DMA semaphores (2,)
    # acc_ref : VMEM (TB, E)            per-row embedding sums
    b = pl.program_id(0)
    inv_s = 1.0 / seq_len

    acc_ref[...] = jnp.zeros_like(acc_ref)

    # ---- in-kernel embedding gather: double-buffered per-token row DMAs ----
    # (padded batch rows gather token 0 harmlessly and are sliced off outside)
    for r in range(BATCH_TILE):               # static unroll over tile rows
        base = b * BATCH_TILE + r
        pltpu.make_async_copy(emb_hbm.at[ids_ref[base, 0]],
                              row_buf.at[0], sem.at[0]).start()

        @pl.loop(0, seq_len)
        def _(t):
            slot = t & 1
            pltpu.make_async_copy(emb_hbm.at[0], row_buf.at[slot],
                                  sem.at[slot]).wait()

            @pl.when(t + 1 < seq_len)
            def _():
                nxt = ids_ref[base, t + 1]
                pltpu.make_async_copy(emb_hbm.at[nxt], row_buf.at[1 - slot],
                                      sem.at[1 - slot]).start()

            acc_ref[r, :] = acc_ref[r, :] + row_buf[slot, :]

    # ----------------------------- epilogue --------------------------------
    # mean over the sequence
    x = acc_ref[...] * inv_s                                       # (TB, E)

    # LayerNorm (module builds a fresh nn.LayerNorm each forward -> gamma=1, beta=0)
    mu = jnp.mean(x, axis=-1, keepdims=True)
    var = jnp.mean((x - mu) ** 2, axis=-1, keepdims=True)
    x = (x - mu) * lax.rsqrt(var + LN_EPS)

    # 10x shared Linear + hierarchical-softmax logit deltas, folded on host:
    #   d_n = (l1_n - l0_n) ;  P(bit=1|n) = sigmoid(d_n)
    d = jnp.dot(x, wc_ref[...], preferred_element_type=jnp.float32) + bc_ref[...]

    # single stable log-sigmoid; log sigmoid(-d) = log sigmoid(d) - d
    lp1 = jnp.minimum(d, 0.0) - jnp.log1p(jnp.exp(-jnp.abs(d)))
    logp = (jnp.dot(lp1, msum_ref[...], preferred_element_type=jnp.float32)
            - jnp.dot(d, m0_ref[...], preferred_element_type=jnp.float32))
    # padded label columns get logp 0 -> exp(0)=1, sliced off in the wrapper
    out_ref[...] = jnp.exp(logp)


def fasttext_forward(input_ids, emb_table, w_hidden, b_hidden, theta_w, theta_b):
    B, S = input_ids.shape
    V, E = emb_table.shape
    NI = theta_w.shape[0]

    # --- host-side algebraic preprocessing (float64 keeps the fold exact) ---
    # x_{k+1} = x_k @ W^T + b  =>  x_10 = x_0 @ A^10 + b @ (I + A + ... + A^9)
    A = np.asarray(w_hidden, np.float64).T
    geo = np.zeros((E, E), np.float64)
    P = np.eye(E, dtype=np.float64)
    for _ in range(HIDDEN_NUM):
        geo += P
        P = P @ A
    w_eff = P                                                      # (E, E)
    b_eff = np.asarray(b_hidden, np.float64) @ geo                 # (E,)

    tw = np.asarray(theta_w, np.float64)
    tb = np.asarray(theta_b, np.float64)
    dwt = (tw[:, 1, :] - tw[:, 0, :]).T                            # (E, NI)
    db = tb[:, 1] - tb[:, 0]                                       # (NI,)

    # fold the hidden affine straight into the Huffman projection, pad NI->128
    w_comb = np.zeros((E, OUT_PAD), np.float64)
    w_comb[:, :NI] = w_eff @ dwt
    b_comb = np.zeros((1, OUT_PAD), np.float64)
    b_comb[0, :NI] = b_eff @ dwt + db

    m0_np, m1_np = build_path_matrices(HUFFMAN_CODES, OUT_PAD, OUT_PAD)
    msum_np = m0_np + m1_np

    w_comb = jnp.asarray(w_comb, jnp.float32)
    b_comb = jnp.asarray(b_comb, jnp.float32)
    m0 = jnp.asarray(m0_np)
    msum = jnp.asarray(msum_np)

    # --- sublane-aligned batch padding of the token ids (SMEM prefetch) ---
    b_pad = ((B + BATCH_TILE - 1) // BATCH_TILE) * BATCH_TILE
    ids = jnp.pad(input_ids.astype(jnp.int32), ((0, b_pad - B), (0, 0)))

    grid = (b_pad // BATCH_TILE,)
    out = pl.pallas_call(
        functools.partial(fasttext_kernel, S),
        out_shape=jax.ShapeDtypeStruct((b_pad, OUT_PAD), jnp.float32),
        grid_spec=pltpu.PrefetchScalarGridSpec(
            num_scalar_prefetch=1,
            grid=grid,
            in_specs=[
                pl.BlockSpec(memory_space=pl.ANY),                       # emb table (HBM)
                pl.BlockSpec((E, OUT_PAD), lambda b, ids: (0, 0)),       # W_comb
                pl.BlockSpec((1, OUT_PAD), lambda b, ids: (0, 0)),       # b_comb
                pl.BlockSpec((OUT_PAD, OUT_PAD), lambda b, ids: (0, 0)),  # m0
                pl.BlockSpec((OUT_PAD, OUT_PAD), lambda b, ids: (0, 0)),  # m0+m1
            ],
            out_specs=pl.BlockSpec((BATCH_TILE, OUT_PAD), lambda b, ids: (b, 0)),
            scratch_shapes=[
                pltpu.VMEM((2, E), jnp.float32),        # double-buffered emb row
                pltpu.SemaphoreType.DMA((2,)),
                pltpu.VMEM((BATCH_TILE, E), jnp.float32),  # per-row seq sums
            ],
        ),
        compiler_params=pltpu.CompilerParams(
            dimension_semantics=("parallel",)),
    )(ids, emb_table.astype(jnp.float32), w_comb, b_comb, m0, msum)

    return out[:B, :NUM_LABELS]


# --------------------------- pure-JAX reference ---------------------------
def fasttext_ref(input_ids, emb_table, w_hidden, b_hidden, theta_w, theta_b):
    x = emb_table[input_ids].astype(jnp.float32)
    x = jnp.mean(x, axis=1)
    mu = jnp.mean(x, axis=-1, keepdims=True)
    var = jnp.mean((x - mu) ** 2, axis=-1, keepdims=True)
    x = (x - mu) / jnp.sqrt(var + LN_EPS)
    for _ in range(HIDDEN_NUM):
        x = x @ w_hidden.T + b_hidden
    cols = []
    for code in HUFFMAN_CODES:
        cp = jnp.ones((x.shape[0], 1), jnp.float32)
        for node, bit in code:
            logits = x @ theta_w[node].T + theta_b[node]       # (B, 2)
            probs = jax.nn.softmax(logits, axis=1)
            cp = cp * probs[:, bit:bit + 1]
        cols.append(cp)
    return jnp.concatenate(cols, axis=1)


# --------------------------------- main -----------------------------------
if __name__ == "__main__":
    key = jax.random.PRNGKey(0)
    k_ids, k_emb, k_wh, k_bh, k_tw, k_tb = jax.random.split(key, 6)

    input_ids = jax.random.randint(k_ids, (BATCH, SEQ), 0, VOCAB_SIZE, dtype=jnp.int32)
    emb_table = jax.random.normal(k_emb, (VOCAB_SIZE, EMBED_DIM), jnp.float32) * 0.1
    w_hidden = jax.random.normal(k_wh, (EMBED_DIM, EMBED_DIM), jnp.float32) * (1.0 / np.sqrt(EMBED_DIM))
    b_hidden = jax.random.normal(k_bh, (EMBED_DIM,), jnp.float32) * 0.01
    theta_w = jax.random.normal(k_tw, (NUM_INTERNAL, 2, EMBED_DIM), jnp.float32) * 0.1
    theta_b = jax.random.normal(k_tb, (NUM_INTERNAL, 2), jnp.float32) * 0.01

    out = fasttext_forward(input_ids, emb_table, w_hidden, b_hidden, theta_w, theta_b)
    out = jax.block_until_ready(out)

    ref = fasttext_ref(input_ids, emb_table, w_hidden, b_hidden, theta_w, theta_b)
    # The W^10/Huffman fold + log-sigmoid identity reorder fp ops (exact in
    # real arithmetic); tolerance covers the reference's fp32 chain rounding.
    np.testing.assert_allclose(np.asarray(out), np.asarray(ref), rtol=5e-4, atol=1e-6)
    assert out.shape == (BATCH, NUM_LABELS)

    print("KERNEL_OK")
</pallas_src>

<mosaic_0001>
module attributes {stable_mosaic.version = 11 : i64} {
  func.func @fasttext_kernel(%arg0: i32, %arg1: memref<8x16xi32, #tpu.memory_space<smem>>, %arg2: memref<50x32xf32, #tpu.memory_space<any>>, %arg3: memref<32x128xf32, #tpu.memory_space<vmem>>, %arg4: memref<1x128xf32, #tpu.memory_space<vmem>>, %arg5: memref<128x128xf32, #tpu.memory_space<vmem>>, %arg6: memref<128x128xf32, #tpu.memory_space<vmem>>, %arg7: memref<8x128xf32, #tpu.memory_space<vmem>>, %arg8: memref<2x32xf32, #tpu.memory_space<vmem>>, %arg9: memref<2x!tpu.dma_semaphore, #tpu.memory_space<semaphore_mem>>, %arg10: memref<8x32xf32, #tpu.memory_space<vmem>>) attributes {dimension_semantics = [#tpu.dimension_semantics<parallel>], iteration_bounds = array<i64: 1>, scalar_prefetch = 1 : i64, scratch_operands = 3 : i64, tpu.core_type = #tpu.core_type<tc>, window_params = [{}, {pipeline_mode = #tpu.pipeline_mode<synchronous>, transform_indices = @transform_1, window_bounds = array<i64: 32, 128>}, {pipeline_mode = #tpu.pipeline_mode<synchronous>, transform_indices = @transform_2, window_bounds = array<i64: 1, 128>}, {pipeline_mode = #tpu.pipeline_mode<synchronous>, transform_indices = @transform_3, window_bounds = array<i64: 128, 128>}, {pipeline_mode = #tpu.pipeline_mode<synchronous>, transform_indices = @transform_4, window_bounds = array<i64: 128, 128>}, {transform_indices = @transform_5, window_bounds = array<i64: 8, 128>}]} {
    %cst = arith.constant 0.000000e+00 : f32
    %0 = vector.broadcast %cst : f32 to vector<8x32xf32>
    %c0 = arith.constant 0 : index
    %c0_0 = arith.constant 0 : index
    %1 = vector.load %arg10[%c0, %c0_0] : memref<8x32xf32, #tpu.memory_space<vmem>>, vector<8x32xf32>
    tpu.vector_store %arg10[%c0, %c0_0], %0 {strides = array<i32>} : memref<8x32xf32, #tpu.memory_space<vmem>>, vector<8x32xf32>,
    %c8_i32 = arith.constant 8 : i32
    %2 = arith.muli %arg0, %c8_i32 : i32
    %c0_i32 = arith.constant 0 : i32
    %3 = arith.addi %2, %c0_i32 : i32
    %4 = arith.index_cast %3 : i32 to index
    %c0_1 = arith.constant 0 : index
    %5 = memref.load %arg1[%4, %c0_1] : memref<8x16xi32, #tpu.memory_space<smem>>
    %c0_i32_2 = arith.constant 0 : i32
    %c0_i32_3 = arith.constant 0 : i32
    %c0_i32_4 = arith.constant 0 : i32
    %6 = tpu.memref_slice %arg2[%5, %c0_i32_4] : memref<50x32xf32, #tpu.memory_space<any>> -> memref<1x32xf32, #tpu.memory_space<any>>
    %7 = tpu.memref_squeeze %6 : memref<1x32xf32, #tpu.memory_space<any>> -> memref<32xf32, #tpu.memory_space<any>>
    %c0_i32_5 = arith.constant 0 : i32
    %8 = tpu.memref_slice %arg8[%c0_i32_2, %c0_i32_5] : memref<2x32xf32, #tpu.memory_space<vmem>> -> memref<1x32xf32, #tpu.memory_space<vmem>>
    %9 = tpu.memref_squeeze %8 : memref<1x32xf32, #tpu.memory_space<vmem>> -> memref<32xf32, #tpu.memory_space<vmem>>
    %10 = tpu.memref_slice %arg9[%c0_i32_3] : memref<2x!tpu.dma_semaphore, #tpu.memory_space<semaphore_mem>> -> memref<1x!tpu.dma_semaphore, #tpu.memory_space<semaphore_mem>>
    %11 = tpu.memref_squeeze %10 : memref<1x!tpu.dma_semaphore, #tpu.memory_space<semaphore_mem>> -> memref<!tpu.dma_semaphore, #tpu.memory_space<semaphore_mem>>
    tpu.enqueue_dma source(%7 : memref<32xf32, #tpu.memory_space<any>>) target(%9 : memref<32xf32, #tpu.memory_space<vmem>>) target_semaphore(%11 : memref<!tpu.dma_semaphore, #tpu.memory_space<semaphore_mem>>)
    %c0_i32_6 = arith.constant 0 : i32
    %c16_i32 = arith.constant 16 : i32
    %12 = arith.addi %c0_i32_6, %c16_i32 : i32
    %c1_i32 = arith.constant 1 : i32
    scf.for %arg11 = %c0_i32_6 to %12 step %c1_i32  : i32 {
      %c1_i32_102 = arith.constant 1 : i32
      %131 = arith.muli %arg11, %c1_i32_102 : i32
      %c0_i32_103 = arith.constant 0 : i32
      %132 = arith.addi %c0_i32_103, %131 : i32
      %c1_i32_104 = arith.constant 1 : i32
      %133 = arith.andi %132, %c1_i32_104 : i32
      %c0_i32_105 = arith.constant 0 : i32
      %c0_i32_106 = arith.constant 0 : i32
      %134 = tpu.memref_slice %arg2[%c0_i32_105, %c0_i32_106] : memref<50x32xf32, #tpu.memory_space<any>> -> memref<1x32xf32, #tpu.memory_space<any>>
      %135 = tpu.memref_squeeze %134 : memref<1x32xf32, #tpu.memory_space<any>> -> memref<32xf32, #tpu.memory_space<any>>
      %c0_i32_107 = arith.constant 0 : i32
      %136 = tpu.memref_slice %arg8[%133, %c0_i32_107] : memref<2x32xf32, #tpu.memory_space<vmem>> -> memref<1x32xf32, #tpu.memory_space<vmem>>
      %137 = tpu.memref_squeeze %136 : memref<1x32xf32, #tpu.memory_space<vmem>> -> memref<32xf32, #tpu.memory_space<vmem>>
      %138 = tpu.memref_slice %arg9[%133] : memref<2x!tpu.dma_semaphore, #tpu.memory_space<semaphore_mem>> -> memref<1x!tpu.dma_semaphore, #tpu.memory_space<semaphore_mem>>
      %139 = tpu.memref_squeeze %138 : memref<1x!tpu.dma_semaphore, #tpu.memory_space<semaphore_mem>> -> memref<!tpu.dma_semaphore, #tpu.memory_space<semaphore_mem>>
      tpu.wait_dma2 semaphore(%139 : memref<!tpu.dma_semaphore, #tpu.memory_space<semaphore_mem>>) src(%135 : memref<32xf32, #tpu.memory_space<any>>) dst(%137 : memref<32xf32, #tpu.memory_space<vmem>>)
      %c1_i32_108 = arith.constant 1 : i32
      %140 = arith.addi %132, %c1_i32_108 : i32
      %c16_i32_109 = arith.constant 16 : i32
      %141 = arith.cmpi slt, %140, %c16_i32_109 : i32
      %142 = arith.extui %141 : i1 to i32
      %c0_i32_110 = arith.constant 0 : i32
      %143 = arith.cmpi ne, %142, %c0_i32_110 : i32
      scf.if %143 {
        %c1_i32_116 = arith.constant 1 : i32
        %153 = arith.addi %132, %c1_i32_116 : i32
        %154 = arith.index_cast %3 : i32 to index
        %155 = arith.index_cast %153 : i32 to index
        %156 = memref.load %arg1[%154, %155] : memref<8x16xi32, #tpu.memory_space<smem>>
        %c1_i32_117 = arith.constant 1 : i32
        %157 = arith.subi %c1_i32_117, %133 : i32
        %c1_i32_118 = arith.constant 1 : i32
        %158 = arith.subi %c1_i32_118, %133 : i32
        %c0_i32_119 = arith.constant 0 : i32
        %159 = tpu.memref_slice %arg2[%156, %c0_i32_119] : memref<50x32xf32, #tpu.memory_space<any>> -> memref<1x32xf32, #tpu.memory_space<any>>
        %160 = tpu.memref_squeeze %159 : memref<1x32xf32, #tpu.memory_space<any>> -> memref<32xf32, #tpu.memory_space<any>>
        %c0_i32_120 = arith.constant 0 : i32
        %161 = tpu.memref_slice %arg8[%157, %c0_i32_120] : memref<2x32xf32, #tpu.memory_space<vmem>> -> memref<1x32xf32, #tpu.memory_space<vmem>>
        %162 = tpu.memref_squeeze %161 : memref<1x32xf32, #tpu.memory_space<vmem>> -> memref<32xf32, #tpu.memory_space<vmem>>
        %163 = tpu.memref_slice %arg9[%158] : memref<2x!tpu.dma_semaphore, #tpu.memory_space<semaphore_mem>> -> memref<1x!tpu.dma_semaphore, #tpu.memory_space<semaphore_mem>>
        %164 = tpu.memref_squeeze %163 : memref<1x!tpu.dma_semaphore, #tpu.memory_space<semaphore_mem>> -> memref<!tpu.dma_semaphore, #tpu.memory_space<semaphore_mem>>
        tpu.enqueue_dma source(%160 : memref<32xf32, #tpu.memory_space<any>>) target(%162 : memref<32xf32, #tpu.memory_space<vmem>>) target_semaphore(%164 : memref<!tpu.dma_semaphore, #tpu.memory_space<semaphore_mem>>)
      } else {
      }
      %c0_111 = arith.constant 0 : index
      %c0_112 = arith.constant 0 : index
      %144 = vector.load %arg10[%c0_111, %c0_112] : memref<8x32xf32, #tpu.memory_space<vmem>>, vector<1x32xf32>
      %145 = vector.shape_cast %144 : vector<1x32xf32> to vector<32xf32>
      %146 = arith.index_cast %133 : i32 to index
      %c0_113 = arith.constant 0 : index
      %147 = vector.load %arg8[%146, %c0_113] : memref<2x32xf32, #tpu.memory_space<vmem>>, vector<1x32xf32>
      %148 = vector.shape_cast %147 : vector<1x32xf32> to vector<32xf32>
      %149 = arith.addf %145, %148 : vector<32xf32>
      %c0_114 = arith.constant 0 : index
      %c0_115 = arith.constant 0 : index
      %150 = vector.load %arg10[%c0_114, %c0_115] : memref<8x32xf32, #tpu.memory_space<vmem>>, vector<1x32xf32>
      %151 = vector.shape_cast %150 : vector<1x32xf32> to vector<32xf32>
      %152 = vector.shape_cast %149 : vector<32xf32> to vector<1x32xf32>
      tpu.vector_store %arg10[%c0_114, %c0_115], %152 {strides = array<i32>} : memref<8x32xf32, #tpu.memory_space<vmem>>, vector<1x32xf32>,
    }
    %c16_i32_7 = arith.constant 16 : i32
    %c8_i32_8 = arith.constant 8 : i32
    %13 = arith.muli %arg0, %c8_i32_8 : i32
    %c1_i32_9 = arith.constant 1 : i32
    %14 = arith.addi %13, %c1_i32_9 : i32
    %15 = arith.index_cast %14 : i32 to index
    %c0_10 = arith.constant 0 : index
    %16 = memref.load %arg1[%15, %c0_10] : memref<8x16xi32, #tpu.memory_space<smem>>
    %c0_i32_11 = arith.constant 0 : i32
    %c0_i32_12 = arith.constant 0 : i32
    %c0_i32_13 = arith.constant 0 : i32
    %17 = tpu.memref_slice %arg2[%16, %c0_i32_13] : memref<50x32xf32, #tpu.memory_space<any>> -> memref<1x32xf32, #tpu.memory_space<any>>
    %18 = tpu.memref_squeeze %17 : memref<1x32xf32, #tpu.memory_space<any>> -> memref<32xf32, #tpu.memory_space<any>>
    %c0_i32_14 = arith.constant 0 : i32
    %19 = tpu.memref_slice %arg8[%c0_i32_11, %c0_i32_14] : memref<2x32xf32, #tpu.memory_space<vmem>> -> memref<1x32xf32, #tpu.memory_space<vmem>>
    %20 = tpu.memref_squeeze %19 : memref<1x32xf32, #tpu.memory_space<vmem>> -> memref<32xf32, #tpu.memory_space<vmem>>
    %21 = tpu.memref_slice %arg9[%c0_i32_12] : memref<2x!tpu.dma_semaphore, #tpu.memory_space<semaphore_mem>> -> memref<1x!tpu.dma_semaphore, #tpu.memory_space<semaphore_mem>>
    %22 = tpu.memref_squeeze %21 : memref<1x!tpu.dma_semaphore, #tpu.memory_space<semaphore_mem>> -> memref<!tpu.dma_semaphore, #tpu.memory_space<semaphore_mem>>
    tpu.enqueue_dma source(%18 : memref<32xf32, #tpu.memory_space<any>>) target(%20 : memref<32xf32, #tpu.memory_space<vmem>>) target_semaphore(%22 : memref<!tpu.dma_semaphore, #tpu.memory_space<semaphore_mem>>)
    %c0_i32_15 = arith.constant 0 : i32
    %c16_i32_16 = arith.constant 16 : i32
    %23 = arith.addi %c0_i32_15, %c16_i32_16 : i32
    %c1_i32_17 = arith.constant 1 : i32
    scf.for %arg11 = %c0_i32_15 to %23 step %c1_i32_17  : i32 {
      %c1_i32_102 = arith.constant 1 : i32
      %131 = arith.muli %arg11, %c1_i32_102 : i32
      %c0_i32_103 = arith.constant 0 : i32
      %132 = arith.addi %c0_i32_103, %131 : i32
      %c1_i32_104 = arith.constant 1 : i32
      %133 = arith.andi %132, %c1_i32_104 : i32
      %c0_i32_105 = arith.constant 0 : i32
      %c0_i32_106 = arith.constant 0 : i32
      %134 = tpu.memref_slice %arg2[%c0_i32_105, %c0_i32_106] : memref<50x32xf32, #tpu.memory_space<any>> -> memref<1x32xf32, #tpu.memory_space<any>>
      %135 = tpu.memref_squeeze %134 : memref<1x32xf32, #tpu.memory_space<any>> -> memref<32xf32, #tpu.memory_space<any>>
      %c0_i32_107 = arith.constant 0 : i32
      %136 = tpu.memref_slice %arg8[%133, %c0_i32_107] : memref<2x32xf32, #tpu.memory_space<vmem>> -> memref<1x32xf32, #tpu.memory_space<vmem>>
      %137 = tpu.memref_squeeze %136 : memref<1x32xf32, #tpu.memory_space<vmem>> -> memref<32xf32, #tpu.memory_space<vmem>>
      %138 = tpu.memref_slice %arg9[%133] : memref<2x!tpu.dma_semaphore, #tpu.memory_space<semaphore_mem>> -> memref<1x!tpu.dma_semaphore, #tpu.memory_space<semaphore_mem>>
      %139 = tpu.memref_squeeze %138 : memref<1x!tpu.dma_semaphore, #tpu.memory_space<semaphore_mem>> -> memref<!tpu.dma_semaphore, #tpu.memory_space<semaphore_mem>>
      tpu.wait_dma2 semaphore(%139 : memref<!tpu.dma_semaphore, #tpu.memory_space<semaphore_mem>>) src(%135 : memref<32xf32, #tpu.memory_space<any>>) dst(%137 : memref<32xf32, #tpu.memory_space<vmem>>)
      %c1_i32_108 = arith.constant 1 : i32
      %140 = arith.addi %132, %c1_i32_108 : i32
      %c16_i32_109 = arith.constant 16 : i32
      %141 = arith.cmpi slt, %140, %c16_i32_109 : i32
      %142 = arith.extui %141 : i1 to i32
      %c0_i32_110 = arith.constant 0 : i32
      %143 = arith.cmpi ne, %142, %c0_i32_110 : i32
      scf.if %143 {
        %c1_i32_115 = arith.constant 1 : i32
        %153 = arith.addi %132, %c1_i32_115 : i32
        %154 = arith.index_cast %14 : i32 to index
        %155 = arith.index_cast %153 : i32 to index
        %156 = memref.load %arg1[%154, %155] : memref<8x16xi32, #tpu.memory_space<smem>>
        %c1_i32_116 = arith.constant 1 : i32
        %157 = arith.subi %c1_i32_116, %133 : i32
        %c1_i32_117 = arith.constant 1 : i32
        %158 = arith.subi %c1_i32_117, %133 : i32
        %c0_i32_118 = arith.constant 0 : i32
        %159 = tpu.memref_slice %arg2[%156, %c0_i32_118] : memref<50x32xf32, #tpu.memory_space<any>> -> memref<1x32xf32, #tpu.memory_space<any>>
        %160 = tpu.memref_squeeze %159 : memref<1x32xf32, #tpu.memory_space<any>> -> memref<32xf32, #tpu.memory_space<any>>
        %c0_i32_119 = arith.constant 0 : i32
        %161 = tpu.memref_slice %arg8[%157, %c0_i32_119] : memref<2x32xf32, #tpu.memory_space<vmem>> -> memref<1x32xf32, #tpu.memory_space<vmem>>
        %162 = tpu.memref_squeeze %161 : memref<1x32xf32, #tpu.memory_space<vmem>> -> memref<32xf32, #tpu.memory_space<vmem>>
        %163 = tpu.memref_slice %arg9[%158] : memref<2x!tpu.dma_semaphore, #tpu.memory_space<semaphore_mem>> -> memref<1x!tpu.dma_semaphore, #tpu.memory_space<semaphore_mem>>
        %164 = tpu.memref_squeeze %163 : memref<1x!tpu.dma_semaphore, #tpu.memory_space<semaphore_mem>> -> memref<!tpu.dma_semaphore, #tpu.memory_space<semaphore_mem>>
        tpu.enqueue_dma source(%160 : memref<32xf32, #tpu.memory_space<any>>) target(%162 : memref<32xf32, #tpu.memory_space<vmem>>) target_semaphore(%164 : memref<!tpu.dma_semaphore, #tpu.memory_space<semaphore_mem>>)
      } else {
      }
      %c1 = arith.constant 1 : index
      %c0_111 = arith.constant 0 : index
      %144 = vector.load %arg10[%c1, %c0_111] : memref<8x32xf32, #tpu.memory_space<vmem>>, vector<1x32xf32>
      %145 = vector.shape_cast %144 : vector<1x32xf32> to vector<32xf32>
      %146 = arith.index_cast %133 : i32 to index
      %c0_112 = arith.constant 0 : index
      %147 = vector.load %arg8[%146, %c0_112] : memref<2x32xf32, #tpu.memory_space<vmem>>, vector<1x32xf32>
      %148 = vector.shape_cast %147 : vector<1x32xf32> to vector<32xf32>
      %149 = arith.addf %145, %148 : vector<32xf32>
      %c1_113 = arith.constant 1 : index
      %c0_114 = arith.constant 0 : index
      %150 = vector.load %arg10[%c1_113, %c0_114] : memref<8x32xf32, #tpu.memory_space<vmem>>, vector<1x32xf32>
      %151 = vector.shape_cast %150 : vector<1x32xf32> to vector<32xf32>
      %152 = vector.shape_cast %149 : vector<32xf32> to vector<1x32xf32>
      tpu.vector_store %arg10[%c1_113, %c0_114], %152 {strides = array<i32>} : memref<8x32xf32, #tpu.memory_space<vmem>>, vector<1x32xf32>,
    }
    %c16_i32_18 = arith.constant 16 : i32
    %c8_i32_19 = arith.constant 8 : i32
    %24 = arith.muli %arg0, %c8_i32_19 : i32
    %c2_i32 = arith.constant 2 : i32
    %25 = arith.addi %24, %c2_i32 : i32
    %26 = arith.index_cast %25 : i32 to index
    %c0_20 = arith.constant 0 : index
    %27 = memref.load %arg1[%26, %c0_20] : memref<8x16xi32, #tpu.memory_space<smem>>
    %c0_i32_21 = arith.constant 0 : i32
    %c0_i32_22 = arith.constant 0 : i32
    %c0_i32_23 = arith.constant 0 : i32
    %28 = tpu.memref_slice %arg2[%27, %c0_i32_23] : memref<50x32xf32, #tpu.memory_space<any>> -> memref<1x32xf32, #tpu.memory_space<any>>
    %29 = tpu.memref_squeeze %28 : memref<1x32xf32, #tpu.memory_space<any>> -> memref<32xf32, #tpu.memory_space<any>>
    %c0_i32_24 = arith.constant 0 : i32
    %30 = tpu.memref_slice %arg8[%c0_i32_21, %c0_i32_24] : memref<2x32xf32, #tpu.memory_space<vmem>> -> memref<1x32xf32, #tpu.memory_space<vmem>>
    %31 = tpu.memref_squeeze %30 : memref<1x32xf32, #tpu.memory_space<vmem>> -> memref<32xf32, #tpu.memory_space<vmem>>
    %32 = tpu.memref_slice %arg9[%c0_i32_22] : memref<2x!tpu.dma_semaphore, #tpu.memory_space<semaphore_mem>> -> memref<1x!tpu.dma_semaphore, #tpu.memory_space<semaphore_mem>>
    %33 = tpu.memref_squeeze %32 : memref<1x!tpu.dma_semaphore, #tpu.memory_space<semaphore_mem>> -> memref<!tpu.dma_semaphore, #tpu.memory_space<semaphore_mem>>
    tpu.enqueue_dma source(%29 : memref<32xf32, #tpu.memory_space<any>>) target(%31 : memref<32xf32, #tpu.memory_space<vmem>>) target_semaphore(%33 : memref<!tpu.dma_semaphore, #tpu.memory_space<semaphore_mem>>)
    %c0_i32_25 = arith.constant 0 : i32
    %c16_i32_26 = arith.constant 16 : i32
    %34 = arith.addi %c0_i32_25, %c16_i32_26 : i32
    %c1_i32_27 = arith.constant 1 : i32
    scf.for %arg11 = %c0_i32_25 to %34 step %c1_i32_27  : i32 {
      %c1_i32_102 = arith.constant 1 : i32
      %131 = arith.muli %arg11, %c1_i32_102 : i32
      %c0_i32_103 = arith.constant 0 : i32
      %132 = arith.addi %c0_i32_103, %131 : i32
      %c1_i32_104 = arith.constant 1 : i32
      %133 = arith.andi %132, %c1_i32_104 : i32
      %c0_i32_105 = arith.constant 0 : i32
      %c0_i32_106 = arith.constant 0 : i32
      %134 = tpu.memref_slice %arg2[%c0_i32_105, %c0_i32_106] : memref<50x32xf32, #tpu.memory_space<any>> -> memref<1x32xf32, #tpu.memory_space<any>>
      %135 = tpu.memref_squeeze %134 : memref<1x32xf32, #tpu.memory_space<any>> -> memref<32xf32, #tpu.memory_space<any>>
      %c0_i32_107 = arith.constant 0 : i32
      %136 = tpu.memref_slice %arg8[%133, %c0_i32_107] : memref<2x32xf32, #tpu.memory_space<vmem>> -> memref<1x32xf32, #tpu.memory_space<vmem>>
      %137 = tpu.memref_squeeze %136 : memref<1x32xf32, #tpu.memory_space<vmem>> -> memref<32xf32, #tpu.memory_space<vmem>>
      %138 = tpu.memref_slice %arg9[%133] : memref<2x!tpu.dma_semaphore, #tpu.memory_space<semaphore_mem>> -> memref<1x!tpu.dma_semaphore, #tpu.memory_space<semaphore_mem>>
      %139 = tpu.memref_squeeze %138 : memref<1x!tpu.dma_semaphore, #tpu.memory_space<semaphore_mem>> -> memref<!tpu.dma_semaphore, #tpu.memory_space<semaphore_mem>>
      tpu.wait_dma2 semaphore(%139 : memref<!tpu.dma_semaphore, #tpu.memory_space<semaphore_mem>>) src(%135 : memref<32xf32, #tpu.memory_space<any>>) dst(%137 : memref<32xf32, #tpu.memory_space<vmem>>)
      %c1_i32_108 = arith.constant 1 : i32
      %140 = arith.addi %132, %c1_i32_108 : i32
      %c16_i32_109 = arith.constant 16 : i32
      %141 = arith.cmpi slt, %140, %c16_i32_109 : i32
      %142 = arith.extui %141 : i1 to i32
      %c0_i32_110 = arith.constant 0 : i32
      %143 = arith.cmpi ne, %142, %c0_i32_110 : i32
      scf.if %143 {
        %c1_i32_115 = arith.constant 1 : i32
        %153 = arith.addi %132, %c1_i32_115 : i32
        %154 = arith.index_cast %25 : i32 to index
        %155 = arith.index_cast %153 : i32 to index
        %156 = memref.load %arg1[%154, %155] : memref<8x16xi32, #tpu.memory_space<smem>>
        %c1_i32_116 = arith.constant 1 : i32
        %157 = arith.subi %c1_i32_116, %133 : i32
        %c1_i32_117 = arith.constant 1 : i32
        %158 = arith.subi %c1_i32_117, %133 : i32
        %c0_i32_118 = arith.constant 0 : i32
        %159 = tpu.memref_slice %arg2[%156, %c0_i32_118] : memref<50x32xf32, #tpu.memory_space<any>> -> memref<1x32xf32, #tpu.memory_space<any>>
        %160 = tpu.memref_squeeze %159 : memref<1x32xf32, #tpu.memory_space<any>> -> memref<32xf32, #tpu.memory_space<any>>
        %c0_i32_119 = arith.constant 0 : i32
        %161 = tpu.memref_slice %arg8[%157, %c0_i32_119] : memref<2x32xf32, #tpu.memory_space<vmem>> -> memref<1x32xf32, #tpu.memory_space<vmem>>
        %162 = tpu.memref_squeeze %161 : memref<1x32xf32, #tpu.memory_space<vmem>> -> memref<32xf32, #tpu.memory_space<vmem>>
        %163 = tpu.memref_slice %arg9[%158] : memref<2x!tpu.dma_semaphore, #tpu.memory_space<semaphore_mem>> -> memref<1x!tpu.dma_semaphore, #tpu.memory_space<semaphore_mem>>
        %164 = tpu.memref_squeeze %163 : memref<1x!tpu.dma_semaphore, #tpu.memory_space<semaphore_mem>> -> memref<!tpu.dma_semaphore, #tpu.memory_space<semaphore_mem>>
        tpu.enqueue_dma source(%160 : memref<32xf32, #tpu.memory_space<any>>) target(%162 : memref<32xf32, #tpu.memory_space<vmem>>) target_semaphore(%164 : memref<!tpu.dma_semaphore, #tpu.memory_space<semaphore_mem>>)
      } else {
      }
      %c2 = arith.constant 2 : index
      %c0_111 = arith.constant 0 : index
      %144 = vector.load %arg10[%c2, %c0_111] : memref<8x32xf32, #tpu.memory_space<vmem>>, vector<1x32xf32>
      %145 = vector.shape_cast %144 : vector<1x32xf32> to vector<32xf32>
      %146 = arith.index_cast %133 : i32 to index
      %c0_112 = arith.constant 0 : index
      %147 = vector.load %arg8[%146, %c0_112] : memref<2x32xf32, #tpu.memory_space<vmem>>, vector<1x32xf32>
      %148 = vector.shape_cast %147 : vector<1x32xf32> to vector<32xf32>
      %149 = arith.addf %145, %148 : vector<32xf32>
      %c2_113 = arith.constant 2 : index
      %c0_114 = arith.constant 0 : index
      %150 = vector.load %arg10[%c2_113, %c0_114] : memref<8x32xf32, #tpu.memory_space<vmem>>, vector<1x32xf32>
      %151 = vector.shape_cast %150 : vector<1x32xf32> to vector<32xf32>
      %152 = vector.shape_cast %149 : vector<32xf32> to vector<1x32xf32>
      tpu.vector_store %arg10[%c2_113, %c0_114], %152 {strides = array<i32>} : memref<8x32xf32, #tpu.memory_space<vmem>>, vector<1x32xf32>,
    }
    %c16_i32_28 = arith.constant 16 : i32
    %c8_i32_29 = arith.constant 8 : i32
    %35 = arith.muli %arg0, %c8_i32_29 : i32
    %c3_i32 = arith.constant 3 : i32
    %36 = arith.addi %35, %c3_i32 : i32
    %37 = arith.index_cast %36 : i32 to index
    %c0_30 = arith.constant 0 : index
    %38 = memref.load %arg1[%37, %c0_30] : memref<8x16xi32, #tpu.memory_space<smem>>
    %c0_i32_31 = arith.constant 0 : i32
    %c0_i32_32 = arith.constant 0 : i32
    %c0_i32_33 = arith.constant 0 : i32
    %39 = tpu.memref_slice %arg2[%38, %c0_i32_33] : memref<50x32xf32, #tpu.memory_space<any>> -> memref<1x32xf32, #tpu.memory_space<any>>
    %40 = tpu.memref_squeeze %39 : memref<1x32xf32, #tpu.memory_space<any>> -> memref<32xf32, #tpu.memory_space<any>>
    %c0_i32_34 = arith.constant 0 : i32
    %41 = tpu.memref_slice %arg8[%c0_i32_31, %c0_i32_34] : memref<2x32xf32, #tpu.memory_space<vmem>> -> memref<1x32xf32, #tpu.memory_space<vmem>>
    %42 = tpu.memref_squeeze %41 : memref<1x32xf32, #tpu.memory_space<vmem>> -> memref<32xf32, #tpu.memory_space<vmem>>
    %43 = tpu.memref_slice %arg9[%c0_i32_32] : memref<2x!tpu.dma_semaphore, #tpu.memory_space<semaphore_mem>> -> memref<1x!tpu.dma_semaphore, #tpu.memory_space<semaphore_mem>>
    %44 = tpu.memref_squeeze %43 : memref<1x!tpu.dma_semaphore, #tpu.memory_space<semaphore_mem>> -> memref<!tpu.dma_semaphore, #tpu.memory_space<semaphore_mem>>
    tpu.enqueue_dma source(%40 : memref<32xf32, #tpu.memory_space<any>>) target(%42 : memref<32xf32, #tpu.memory_space<vmem>>) target_semaphore(%44 : memref<!tpu.dma_semaphore, #tpu.memory_space<semaphore_mem>>)
    %c0_i32_35 = arith.constant 0 : i32
    %c16_i32_36 = arith.constant 16 : i32
    %45 = arith.addi %c0_i32_35, %c16_i32_36 : i32
    %c1_i32_37 = arith.constant 1 : i32
    scf.for %arg11 = %c0_i32_35 to %45 step %c1_i32_37  : i32 {
      %c1_i32_102 = arith.constant 1 : i32
      %131 = arith.muli %arg11, %c1_i32_102 : i32
      %c0_i32_103 = arith.constant 0 : i32
      %132 = arith.addi %c0_i32_103, %131 : i32
      %c1_i32_104 = arith.constant 1 : i32
      %133 = arith.andi %132, %c1_i32_104 : i32
      %c0_i32_105 = arith.constant 0 : i32
      %c0_i32_106 = arith.constant 0 : i32
      %134 = tpu.memref_slice %arg2[%c0_i32_105, %c0_i32_106] : memref<50x32xf32, #tpu.memory_space<any>> -> memref<1x32xf32, #tpu.memory_space<any>>
      %135 = tpu.memref_squeeze %134 : memref<1x32xf32, #tpu.memory_space<any>> -> memref<32xf32, #tpu.memory_space<any>>
      %c0_i32_107 = arith.constant 0 : i32
      %136 = tpu.memref_slice %arg8[%133, %c0_i32_107] : memref<2x32xf32, #tpu.memory_space<vmem>> -> memref<1x32xf32, #tpu.memory_space<vmem>>
      %137 = tpu.memref_squeeze %136 : memref<1x32xf32, #tpu.memory_space<vmem>> -> memref<32xf32, #tpu.memory_space<vmem>>
      %138 = tpu.memref_slice %arg9[%133] : memref<2x!tpu.dma_semaphore, #tpu.memory_space<semaphore_mem>> -> memref<1x!tpu.dma_semaphore, #tpu.memory_space<semaphore_mem>>
      %139 = tpu.memref_squeeze %138 : memref<1x!tpu.dma_semaphore, #tpu.memory_space<semaphore_mem>> -> memref<!tpu.dma_semaphore, #tpu.memory_space<semaphore_mem>>
      tpu.wait_dma2 semaphore(%139 : memref<!tpu.dma_semaphore, #tpu.memory_space<semaphore_mem>>) src(%135 : memref<32xf32, #tpu.memory_space<any>>) dst(%137 : memref<32xf32, #tpu.memory_space<vmem>>)
      %c1_i32_108 = arith.constant 1 : i32
      %140 = arith.addi %132, %c1_i32_108 : i32
      %c16_i32_109 = arith.constant 16 : i32
      %141 = arith.cmpi slt, %140, %c16_i32_109 : i32
      %142 = arith.extui %141 : i1 to i32
      %c0_i32_110 = arith.constant 0 : i32
      %143 = arith.cmpi ne, %142, %c0_i32_110 : i32
      scf.if %143 {
        %c1_i32_115 = arith.constant 1 : i32
        %153 = arith.addi %132, %c1_i32_115 : i32
        %154 = arith.index_cast %36 : i32 to index
        %155 = arith.index_cast %153 : i32 to index
        %156 = memref.load %arg1[%154, %155] : memref<8x16xi32, #tpu.memory_space<smem>>
        %c1_i32_116 = arith.constant 1 : i32
        %157 = arith.subi %c1_i32_116, %133 : i32
        %c1_i32_117 = arith.constant 1 : i32
        %158 = arith.subi %c1_i32_117, %133 : i32
        %c0_i32_118 = arith.constant 0 : i32
        %159 = tpu.memref_slice %arg2[%156, %c0_i32_118] : memref<50x32xf32, #tpu.memory_space<any>> -> memref<1x32xf32, #tpu.memory_space<any>>
        %160 = tpu.memref_squeeze %159 : memref<1x32xf32, #tpu.memory_space<any>> -> memref<32xf32, #tpu.memory_space<any>>
        %c0_i32_119 = arith.constant 0 : i32
        %161 = tpu.memref_slice %arg8[%157, %c0_i32_119] : memref<2x32xf32, #tpu.memory_space<vmem>> -> memref<1x32xf32, #tpu.memory_space<vmem>>
        %162 = tpu.memref_squeeze %161 : memref<1x32xf32, #tpu.memory_space<vmem>> -> memref<32xf32, #tpu.memory_space<vmem>>
        %163 = tpu.memref_slice %arg9[%158] : memref<2x!tpu.dma_semaphore, #tpu.memory_space<semaphore_mem>> -> memref<1x!tpu.dma_semaphore, #tpu.memory_space<semaphore_mem>>
        %164 = tpu.memref_squeeze %163 : memref<1x!tpu.dma_semaphore, #tpu.memory_space<semaphore_mem>> -> memref<!tpu.dma_semaphore, #tpu.memory_space<semaphore_mem>>
        tpu.enqueue_dma source(%160 : memref<32xf32, #tpu.memory_space<any>>) target(%162 : memref<32xf32, #tpu.memory_space<vmem>>) target_semaphore(%164 : memref<!tpu.dma_semaphore, #tpu.memory_space<semaphore_mem>>)
      } else {
      }
      %c3 = arith.constant 3 : index
      %c0_111 = arith.constant 0 : index
      %144 = vector.load %arg10[%c3, %c0_111] : memref<8x32xf32, #tpu.memory_space<vmem>>, vector<1x32xf32>
      %145 = vector.shape_cast %144 : vector<1x32xf32> to vector<32xf32>
      %146 = arith.index_cast %133 : i32 to index
      %c0_112 = arith.constant 0 : index
      %147 = vector.load %arg8[%146, %c0_112] : memref<2x32xf32, #tpu.memory_space<vmem>>, vector<1x32xf32>
      %148 = vector.shape_cast %147 : vector<1x32xf32> to vector<32xf32>
      %149 = arith.addf %145, %148 : vector<32xf32>
      %c3_113 = arith.constant 3 : index
      %c0_114 = arith.constant 0 : index
      %150 = vector.load %arg10[%c3_113, %c0_114] : memref<8x32xf32, #tpu.memory_space<vmem>>, vector<1x32xf32>
      %151 = vector.shape_cast %150 : vector<1x32xf32> to vector<32xf32>
      %152 = vector.shape_cast %149 : vector<32xf32> to vector<1x32xf32>
      tpu.vector_store %arg10[%c3_113, %c0_114], %152 {strides = array<i32>} : memref<8x32xf32, #tpu.memory_space<vmem>>, vector<1x32xf32>,
    }
    %c16_i32_38 = arith.constant 16 : i32
    %c8_i32_39 = arith.constant 8 : i32
    %46 = arith.muli %arg0, %c8_i32_39 : i32
    %c4_i32 = arith.constant 4 : i32
    %47 = arith.addi %46, %c4_i32 : i32
    %48 = arith.index_cast %47 : i32 to index
    %c0_40 = arith.constant 0 : index
    %49 = memref.load %arg1[%48, %c0_40] : memref<8x16xi32, #tpu.memory_space<smem>>
    %c0_i32_41 = arith.constant 0 : i32
    %c0_i32_42 = arith.constant 0 : i32
    %c0_i32_43 = arith.constant 0 : i32
    %50 = tpu.memref_slice %arg2[%49, %c0_i32_43] : memref<50x32xf32, #tpu.memory_space<any>> -> memref<1x32xf32, #tpu.memory_space<any>>
    %51 = tpu.memref_squeeze %50 : memref<1x32xf32, #tpu.memory_space<any>> -> memref<32xf32, #tpu.memory_space<any>>
    %c0_i32_44 = arith.constant 0 : i32
    %52 = tpu.memref_slice %arg8[%c0_i32_41, %c0_i32_44] : memref<2x32xf32, #tpu.memory_space<vmem>> -> memref<1x32xf32, #tpu.memory_space<vmem>>
    %53 = tpu.memref_squeeze %52 : memref<1x32xf32, #tpu.memory_space<vmem>> -> memref<32xf32, #tpu.memory_space<vmem>>
    %54 = tpu.memref_slice %arg9[%c0_i32_42] : memref<2x!tpu.dma_semaphore, #tpu.memory_space<semaphore_mem>> -> memref<1x!tpu.dma_semaphore, #tpu.memory_space<semaphore_mem>>
    %55 = tpu.memref_squeeze %54 : memref<1x!tpu.dma_semaphore, #tpu.memory_space<semaphore_mem>> -> memref<!tpu.dma_semaphore, #tpu.memory_space<semaphore_mem>>
    tpu.enqueue_dma source(%51 : memref<32xf32, #tpu.memory_space<any>>) target(%53 : memref<32xf32, #tpu.memory_space<vmem>>) target_semaphore(%55 : memref<!tpu.dma_semaphore, #tpu.memory_space<semaphore_mem>>)
    %c0_i32_45 = arith.constant 0 : i32
    %c16_i32_46 = arith.constant 16 : i32
    %56 = arith.addi %c0_i32_45, %c16_i32_46 : i32
    %c1_i32_47 = arith.constant 1 : i32
    scf.for %arg11 = %c0_i32_45 to %56 step %c1_i32_47  : i32 {
      %c1_i32_102 = arith.constant 1 : i32
      %131 = arith.muli %arg11, %c1_i32_102 : i32
      %c0_i32_103 = arith.constant 0 : i32
      %132 = arith.addi %c0_i32_103, %131 : i32
      %c1_i32_104 = arith.constant 1 : i32
      %133 = arith.andi %132, %c1_i32_104 : i32
      %c0_i32_105 = arith.constant 0 : i32
      %c0_i32_106 = arith.constant 0 : i32
      %134 = tpu.memref_slice %arg2[%c0_i32_105, %c0_i32_106] : memref<50x32xf32, #tpu.memory_space<any>> -> memref<1x32xf32, #tpu.memory_space<any>>
      %135 = tpu.memref_squeeze %134 : memref<1x32xf32, #tpu.memory_space<any>> -> memref<32xf32, #tpu.memory_space<any>>
      %c0_i32_107 = arith.constant 0 : i32
      %136 = tpu.memref_slice %arg8[%133, %c0_i32_107] : memref<2x32xf32, #tpu.memory_space<vmem>> -> memref<1x32xf32, #tpu.memory_space<vmem>>
      %137 = tpu.memref_squeeze %136 : memref<1x32xf32, #tpu.memory_space<vmem>> -> memref<32xf32, #tpu.memory_space<vmem>>
      %138 = tpu.memref_slice %arg9[%133] : memref<2x!tpu.dma_semaphore, #tpu.memory_space<semaphore_mem>> -> memref<1x!tpu.dma_semaphore, #tpu.memory_space<semaphore_mem>>
      %139 = tpu.memref_squeeze %138 : memref<1x!tpu.dma_semaphore, #tpu.memory_space<semaphore_mem>> -> memref<!tpu.dma_semaphore, #tpu.memory_space<semaphore_mem>>
      tpu.wait_dma2 semaphore(%139 : memref<!tpu.dma_semaphore, #tpu.memory_space<semaphore_mem>>) src(%135 : memref<32xf32, #tpu.memory_space<any>>) dst(%137 : memref<32xf32, #tpu.memory_space<vmem>>)
      %c1_i32_108 = arith.constant 1 : i32
      %140 = arith.addi %132, %c1_i32_108 : i32
      %c16_i32_109 = arith.constant 16 : i32
      %141 = arith.cmpi slt, %140, %c16_i32_109 : i32
      %142 = arith.extui %141 : i1 to i32
      %c0_i32_110 = arith.constant 0 : i32
      %143 = arith.cmpi ne, %142, %c0_i32_110 : i32
      scf.if %143 {
        %c1_i32_115 = arith.constant 1 : i32
        %153 = arith.addi %132, %c1_i32_115 : i32
        %154 = arith.index_cast %47 : i32 to index
        %155 = arith.index_cast %153 : i32 to index
        %156 = memref.load %arg1[%154, %155] : memref<8x16xi32, #tpu.memory_space<smem>>
        %c1_i32_116 = arith.constant 1 : i32
        %157 = arith.subi %c1_i32_116, %133 : i32
        %c1_i32_117 = arith.constant 1 : i32
        %158 = arith.subi %c1_i32_117, %133 : i32
        %c0_i32_118 = arith.constant 0 : i32
        %159 = tpu.memref_slice %arg2[%156, %c0_i32_118] : memref<50x32xf32, #tpu.memory_space<any>> -> memref<1x32xf32, #tpu.memory_space<any>>
        %160 = tpu.memref_squeeze %159 : memref<1x32xf32, #tpu.memory_space<any>> -> memref<32xf32, #tpu.memory_space<any>>
        %c0_i32_119 = arith.constant 0 : i32
        %161 = tpu.memref_slice %arg8[%157, %c0_i32_119] : memref<2x32xf32, #tpu.memory_space<vmem>> -> memref<1x32xf32, #tpu.memory_space<vmem>>
        %162 = tpu.memref_squeeze %161 : memref<1x32xf32, #tpu.memory_space<vmem>> -> memref<32xf32, #tpu.memory_space<vmem>>
        %163 = tpu.memref_slice %arg9[%158] : memref<2x!tpu.dma_semaphore, #tpu.memory_space<semaphore_mem>> -> memref<1x!tpu.dma_semaphore, #tpu.memory_space<semaphore_mem>>
        %164 = tpu.memref_squeeze %163 : memref<1x!tpu.dma_semaphore, #tpu.memory_space<semaphore_mem>> -> memref<!tpu.dma_semaphore, #tpu.memory_space<semaphore_mem>>
        tpu.enqueue_dma source(%160 : memref<32xf32, #tpu.memory_space<any>>) target(%162 : memref<32xf32, #tpu.memory_space<vmem>>) target_semaphore(%164 : memref<!tpu.dma_semaphore, #tpu.memory_space<semaphore_mem>>)
      } else {
      }
      %c4 = arith.constant 4 : index
      %c0_111 = arith.constant 0 : index
      %144 = vector.load %arg10[%c4, %c0_111] : memref<8x32xf32, #tpu.memory_space<vmem>>, vector<1x32xf32>
      %145 = vector.shape_cast %144 : vector<1x32xf32> to vector<32xf32>
      %146 = arith.index_cast %133 : i32 to index
      %c0_112 = arith.constant 0 : index
      %147 = vector.load %arg8[%146, %c0_112] : memref<2x32xf32, #tpu.memory_space<vmem>>, vector<1x32xf32>
      %148 = vector.shape_cast %147 : vector<1x32xf32> to vector<32xf32>
      %149 = arith.addf %145, %148 : vector<32xf32>
      %c4_113 = arith.constant 4 : index
      %c0_114 = arith.constant 0 : index
      %150 = vector.load %arg10[%c4_113, %c0_114] : memref<8x32xf32, #tpu.memory_space<vmem>>, vector<1x32xf32>
      %151 = vector.shape_cast %150 : vector<1x32xf32> to vector<32xf32>
      %152 = vector.shape_cast %149 : vector<32xf32> to vector<1x32xf32>
      tpu.vector_store %arg10[%c4_113, %c0_114], %152 {strides = array<i32>} : memref<8x32xf32, #tpu.memory_space<vmem>>, vector<1x32xf32>,
    }
    %c16_i32_48 = arith.constant 16 : i32
    %c8_i32_49 = arith.constant 8 : i32
    %57 = arith.muli %arg0, %c8_i32_49 : i32
    %c5_i32 = arith.constant 5 : i32
    %58 = arith.addi %57, %c5_i32 : i32
    %59 = arith.index_cast %58 : i32 to index
    %c0_50 = arith.constant 0 : index
    %60 = memref.load %arg1[%59, %c0_50] : memref<8x16xi32, #tpu.memory_space<smem>>
    %c0_i32_51 = arith.constant 0 : i32
    %c0_i32_52 = arith.constant 0 : i32
    %c0_i32_53 = arith.constant 0 : i32
    %61 = tpu.memref_slice %arg2[%60, %c0_i32_53] : memref<50x32xf32, #tpu.memory_space<any>> -> memref<1x32xf32, #tpu.memory_space<any>>
    %62 = tpu.memref_squeeze %61 : memref<1x32xf32, #tpu.memory_space<any>> -> memref<32xf32, #tpu.memory_space<any>>
    %c0_i32_54 = arith.constant 0 : i32
    %63 = tpu.memref_slice %arg8[%c0_i32_51, %c0_i32_54] : memref<2x32xf32, #tpu.memory_space<vmem>> -> memref<1x32xf32, #tpu.memory_space<vmem>>
    %64 = tpu.memref_squeeze %63 : memref<1x32xf32, #tpu.memory_space<vmem>> -> memref<32xf32, #tpu.memory_space<vmem>>
    %65 = tpu.memref_slice %arg9[%c0_i32_52] : memref<2x!tpu.dma_semaphore, #tpu.memory_space<semaphore_mem>> -> memref<1x!tpu.dma_semaphore, #tpu.memory_space<semaphore_mem>>
    %66 = tpu.memref_squeeze %65 : memref<1x!tpu.dma_semaphore, #tpu.memory_space<semaphore_mem>> -> memref<!tpu.dma_semaphore, #tpu.memory_space<semaphore_mem>>
    tpu.enqueue_dma source(%62 : memref<32xf32, #tpu.memory_space<any>>) target(%64 : memref<32xf32, #tpu.memory_space<vmem>>) target_semaphore(%66 : memref<!tpu.dma_semaphore, #tpu.memory_space<semaphore_mem>>)
    %c0_i32_55 = arith.constant 0 : i32
    %c16_i32_56 = arith.constant 16 : i32
    %67 = arith.addi %c0_i32_55, %c16_i32_56 : i32
    %c1_i32_57 = arith.constant 1 : i32
    scf.for %arg11 = %c0_i32_55 to %67 step %c1_i32_57  : i32 {
      %c1_i32_102 = arith.constant 1 : i32
      %131 = arith.muli %arg11, %c1_i32_102 : i32
      %c0_i32_103 = arith.constant 0 : i32
      %132 = arith.addi %c0_i32_103, %131 : i32
      %c1_i32_104 = arith.constant 1 : i32
      %133 = arith.andi %132, %c1_i32_104 : i32
      %c0_i32_105 = arith.constant 0 : i32
      %c0_i32_106 = arith.constant 0 : i32
      %134 = tpu.memref_slice %arg2[%c0_i32_105, %c0_i32_106] : memref<50x32xf32, #tpu.memory_space<any>> -> memref<1x32xf32, #tpu.memory_space<any>>
      %135 = tpu.memref_squeeze %134 : memref<1x32xf32, #tpu.memory_space<any>> -> memref<32xf32, #tpu.memory_space<any>>
      %c0_i32_107 = arith.constant 0 : i32
      %136 = tpu.memref_slice %arg8[%133, %c0_i32_107] : memref<2x32xf32, #tpu.memory_space<vmem>> -> memref<1x32xf32, #tpu.memory_space<vmem>>
      %137 = tpu.memref_squeeze %136 : memref<1x32xf32, #tpu.memory_space<vmem>> -> memref<32xf32, #tpu.memory_space<vmem>>
      %138 = tpu.memref_slice %arg9[%133] : memref<2x!tpu.dma_semaphore, #tpu.memory_space<semaphore_mem>> -> memref<1x!tpu.dma_semaphore, #tpu.memory_space<semaphore_mem>>
      %139 = tpu.memref_squeeze %138 : memref<1x!tpu.dma_semaphore, #tpu.memory_space<semaphore_mem>> -> memref<!tpu.dma_semaphore, #tpu.memory_space<semaphore_mem>>
      tpu.wait_dma2 semaphore(%139 : memref<!tpu.dma_semaphore, #tpu.memory_space<semaphore_mem>>) src(%135 : memref<32xf32, #tpu.memory_space<any>>) dst(%137 : memref<32xf32, #tpu.memory_space<vmem>>)
      %c1_i32_108 = arith.constant 1 : i32
      %140 = arith.addi %132, %c1_i32_108 : i32
      %c16_i32_109 = arith.constant 16 : i32
      %141 = arith.cmpi slt, %140, %c16_i32_109 : i32
      %142 = arith.extui %141 : i1 to i32
      %c0_i32_110 = arith.constant 0 : i32
      %143 = arith.cmpi ne, %142, %c0_i32_110 : i32
      scf.if %143 {
        %c1_i32_115 = arith.constant 1 : i32
        %153 = arith.addi %132, %c1_i32_115 : i32
        %154 = arith.index_cast %58 : i32 to index
        %155 = arith.index_cast %153 : i32 to index
        %156 = memref.load %arg1[%154, %155] : memref<8x16xi32, #tpu.memory_space<smem>>
        %c1_i32_116 = arith.constant 1 : i32
        %157 = arith.subi %c1_i32_116, %133 : i32
        %c1_i32_117 = arith.constant 1 : i32
        %158 = arith.subi %c1_i32_117, %133 : i32
        %c0_i32_118 = arith.constant 0 : i32
        %159 = tpu.memref_slice %arg2[%156, %c0_i32_118] : memref<50x32xf32, #tpu.memory_space<any>> -> memref<1x32xf32, #tpu.memory_space<any>>
        %160 = tpu.memref_squeeze %159 : memref<1x32xf32, #tpu.memory_space<any>> -> memref<32xf32, #tpu.memory_space<any>>
        %c0_i32_119 = arith.constant 0 : i32
        %161 = tpu.memref_slice %arg8[%157, %c0_i32_119] : memref<2x32xf32, #tpu.memory_space<vmem>> -> memref<1x32xf32, #tpu.memory_space<vmem>>
        %162 = tpu.memref_squeeze %161 : memref<1x32xf32, #tpu.memory_space<vmem>> -> memref<32xf32, #tpu.memory_space<vmem>>
        %163 = tpu.memref_slice %arg9[%158] : memref<2x!tpu.dma_semaphore, #tpu.memory_space<semaphore_mem>> -> memref<1x!tpu.dma_semaphore, #tpu.memory_space<semaphore_mem>>
        %164 = tpu.memref_squeeze %163 : memref<1x!tpu.dma_semaphore, #tpu.memory_space<semaphore_mem>> -> memref<!tpu.dma_semaphore, #tpu.memory_space<semaphore_mem>>
        tpu.enqueue_dma source(%160 : memref<32xf32, #tpu.memory_space<any>>) target(%162 : memref<32xf32, #tpu.memory_space<vmem>>) target_semaphore(%164 : memref<!tpu.dma_semaphore, #tpu.memory_space<semaphore_mem>>)
      } else {
      }
      %c5 = arith.constant 5 : index
      %c0_111 = arith.constant 0 : index
      %144 = vector.load %arg10[%c5, %c0_111] : memref<8x32xf32, #tpu.memory_space<vmem>>, vector<1x32xf32>
      %145 = vector.shape_cast %144 : vector<1x32xf32> to vector<32xf32>
      %146 = arith.index_cast %133 : i32 to index
      %c0_112 = arith.constant 0 : index
      %147 = vector.load %arg8[%146, %c0_112] : memref<2x32xf32, #tpu.memory_space<vmem>>, vector<1x32xf32>
      %148 = vector.shape_cast %147 : vector<1x32xf32> to vector<32xf32>
      %149 = arith.addf %145, %148 : vector<32xf32>
      %c5_113 = arith.constant 5 : index
      %c0_114 = arith.constant 0 : index
      %150 = vector.load %arg10[%c5_113, %c0_114] : memref<8x32xf32, #tpu.memory_space<vmem>>, vector<1x32xf32>
      %151 = vector.shape_cast %150 : vector<1x32xf32> to vector<32xf32>
      %152 = vector.shape_cast %149 : vector<32xf32> to vector<1x32xf32>
      tpu.vector_store %arg10[%c5_113, %c0_114], %152 {strides = array<i32>} : memref<8x32xf32, #tpu.memory_space<vmem>>, vector<1x32xf32>,
    }
    %c16_i32_58 = arith.constant 16 : i32
    %c8_i32_59 = arith.constant 8 : i32
    %68 = arith.muli %arg0, %c8_i32_59 : i32
    %c6_i32 = arith.constant 6 : i32
    %69 = arith.addi %68, %c6_i32 : i32
    %70 = arith.index_cast %69 : i32 to index
    %c0_60 = arith.constant 0 : index
    %71 = memref.load %arg1[%70, %c0_60] : memref<8x16xi32, #tpu.memory_space<smem>>
    %c0_i32_61 = arith.constant 0 : i32
    %c0_i32_62 = arith.constant 0 : i32
    %c0_i32_63 = arith.constant 0 : i32
    %72 = tpu.memref_slice %arg2[%71, %c0_i32_63] : memref<50x32xf32, #tpu.memory_space<any>> -> memref<1x32xf32, #tpu.memory_space<any>>
    %73 = tpu.memref_squeeze %72 : memref<1x32xf32, #tpu.memory_space<any>> -> memref<32xf32, #tpu.memory_space<any>>
    %c0_i32_64 = arith.constant 0 : i32
    %74 = tpu.memref_slice %arg8[%c0_i32_61, %c0_i32_64] : memref<2x32xf32, #tpu.memory_space<vmem>> -> memref<1x32xf32, #tpu.memory_space<vmem>>
    %75 = tpu.memref_squeeze %74 : memref<1x32xf32, #tpu.memory_space<vmem>> -> memref<32xf32, #tpu.memory_space<vmem>>
    %76 = tpu.memref_slice %arg9[%c0_i32_62] : memref<2x!tpu.dma_semaphore, #tpu.memory_space<semaphore_mem>> -> memref<1x!tpu.dma_semaphore, #tpu.memory_space<semaphore_mem>>
    %77 = tpu.memref_squeeze %76 : memref<1x!tpu.dma_semaphore, #tpu.memory_space<semaphore_mem>> -> memref<!tpu.dma_semaphore, #tpu.memory_space<semaphore_mem>>
    tpu.enqueue_dma source(%73 : memref<32xf32, #tpu.memory_space<any>>) target(%75 : memref<32xf32, #tpu.memory_space<vmem>>) target_semaphore(%77 : memref<!tpu.dma_semaphore, #tpu.memory_space<semaphore_mem>>)
    %c0_i32_65 = arith.constant 0 : i32
    %c16_i32_66 = arith.constant 16 : i32
    %78 = arith.addi %c0_i32_65, %c16_i32_66 : i32
    %c1_i32_67 = arith.constant 1 : i32
    scf.for %arg11 = %c0_i32_65 to %78 step %c1_i32_67  : i32 {
      %c1_i32_102 = arith.constant 1 : i32
      %131 = arith.muli %arg11, %c1_i32_102 : i32
      %c0_i32_103 = arith.constant 0 : i32
      %132 = arith.addi %c0_i32_103, %131 : i32
      %c1_i32_104 = arith.constant 1 : i32
      %133 = arith.andi %132, %c1_i32_104 : i32
      %c0_i32_105 = arith.constant 0 : i32
      %c0_i32_106 = arith.constant 0 : i32
      %134 = tpu.memref_slice %arg2[%c0_i32_105, %c0_i32_106] : memref<50x32xf32, #tpu.memory_space<any>> -> memref<1x32xf32, #tpu.memory_space<any>>
      %135 = tpu.memref_squeeze %134 : memref<1x32xf32, #tpu.memory_space<any>> -> memref<32xf32, #tpu.memory_space<any>>
      %c0_i32_107 = arith.constant 0 : i32
      %136 = tpu.memref_slice %arg8[%133, %c0_i32_107] : memref<2x32xf32, #tpu.memory_space<vmem>> -> memref<1x32xf32, #tpu.memory_space<vmem>>
      %137 = tpu.memref_squeeze %136 : memref<1x32xf32, #tpu.memory_space<vmem>> -> memref<32xf32, #tpu.memory_space<vmem>>
      %138 = tpu.memref_slice %arg9[%133] : memref<2x!tpu.dma_semaphore, #tpu.memory_space<semaphore_mem>> -> memref<1x!tpu.dma_semaphore, #tpu.memory_space<semaphore_mem>>
      %139 = tpu.memref_squeeze %138 : memref<1x!tpu.dma_semaphore, #tpu.memory_space<semaphore_mem>> -> memref<!tpu.dma_semaphore, #tpu.memory_space<semaphore_mem>>
      tpu.wait_dma2 semaphore(%139 : memref<!tpu.dma_semaphore, #tpu.memory_space<semaphore_mem>>) src(%135 : memref<32xf32, #tpu.memory_space<any>>) dst(%137 : memref<32xf32, #tpu.memory_space<vmem>>)
      %c1_i32_108 = arith.constant 1 : i32
      %140 = arith.addi %132, %c1_i32_108 : i32
      %c16_i32_109 = arith.constant 16 : i32
      %141 = arith.cmpi slt, %140, %c16_i32_109 : i32
      %142 = arith.extui %141 : i1 to i32
      %c0_i32_110 = arith.constant 0 : i32
      %143 = arith.cmpi ne, %142, %c0_i32_110 : i32
      scf.if %143 {
        %c1_i32_115 = arith.constant 1 : i32
        %153 = arith.addi %132, %c1_i32_115 : i32
        %154 = arith.index_cast %69 : i32 to index
        %155 = arith.index_cast %153 : i32 to index
        %156 = memref.load %arg1[%154, %155] : memref<8x16xi32, #tpu.memory_space<smem>>
        %c1_i32_116 = arith.constant 1 : i32
        %157 = arith.subi %c1_i32_116, %133 : i32
        %c1_i32_117 = arith.constant 1 : i32
        %158 = arith.subi %c1_i32_117, %133 : i32
        %c0_i32_118 = arith.constant 0 : i32
        %159 = tpu.memref_slice %arg2[%156, %c0_i32_118] : memref<50x32xf32, #tpu.memory_space<any>> -> memref<1x32xf32, #tpu.memory_space<any>>
        %160 = tpu.memref_squeeze %159 : memref<1x32xf32, #tpu.memory_space<any>> -> memref<32xf32, #tpu.memory_space<any>>
        %c0_i32_119 = arith.constant 0 : i32
        %161 = tpu.memref_slice %arg8[%157, %c0_i32_119] : memref<2x32xf32, #tpu.memory_space<vmem>> -> memref<1x32xf32, #tpu.memory_space<vmem>>
        %162 = tpu.memref_squeeze %161 : memref<1x32xf32, #tpu.memory_space<vmem>> -> memref<32xf32, #tpu.memory_space<vmem>>
        %163 = tpu.memref_slice %arg9[%158] : memref<2x!tpu.dma_semaphore, #tpu.memory_space<semaphore_mem>> -> memref<1x!tpu.dma_semaphore, #tpu.memory_space<semaphore_mem>>
        %164 = tpu.memref_squeeze %163 : memref<1x!tpu.dma_semaphore, #tpu.memory_space<semaphore_mem>> -> memref<!tpu.dma_semaphore, #tpu.memory_space<semaphore_mem>>
        tpu.enqueue_dma source(%160 : memref<32xf32, #tpu.memory_space<any>>) target(%162 : memref<32xf32, #tpu.memory_space<vmem>>) target_semaphore(%164 : memref<!tpu.dma_semaphore, #tpu.memory_space<semaphore_mem>>)
      } else {
      }
      %c6 = arith.constant 6 : index
      %c0_111 = arith.constant 0 : index
      %144 = vector.load %arg10[%c6, %c0_111] : memref<8x32xf32, #tpu.memory_space<vmem>>, vector<1x32xf32>
      %145 = vector.shape_cast %144 : vector<1x32xf32> to vector<32xf32>
      %146 = arith.index_cast %133 : i32 to index
      %c0_112 = arith.constant 0 : index
      %147 = vector.load %arg8[%146, %c0_112] : memref<2x32xf32, #tpu.memory_space<vmem>>, vector<1x32xf32>
      %148 = vector.shape_cast %147 : vector<1x32xf32> to vector<32xf32>
      %149 = arith.addf %145, %148 : vector<32xf32>
      %c6_113 = arith.constant 6 : index
      %c0_114 = arith.constant 0 : index
      %150 = vector.load %arg10[%c6_113, %c0_114] : memref<8x32xf32, #tpu.memory_space<vmem>>, vector<1x32xf32>
      %151 = vector.shape_cast %150 : vector<1x32xf32> to vector<32xf32>
      %152 = vector.shape_cast %149 : vector<32xf32> to vector<1x32xf32>
      tpu.vector_store %arg10[%c6_113, %c0_114], %152 {strides = array<i32>} : memref<8x32xf32, #tpu.memory_space<vmem>>, vector<1x32xf32>,
    }
    %c16_i32_68 = arith.constant 16 : i32
    %c8_i32_69 = arith.constant 8 : i32
    %79 = arith.muli %arg0, %c8_i32_69 : i32
    %c7_i32 = arith.constant 7 : i32
    %80 = arith.addi %79, %c7_i32 : i32
    %81 = arith.index_cast %80 : i32 to index
    %c0_70 = arith.constant 0 : index
    %82 = memref.load %arg1[%81, %c0_70] : memref<8x16xi32, #tpu.memory_space<smem>>
    %c0_i32_71 = arith.constant 0 : i32
    %c0_i32_72 = arith.constant 0 : i32
    %c0_i32_73 = arith.constant 0 : i32
    %83 = tpu.memref_slice %arg2[%82, %c0_i32_73] : memref<50x32xf32, #tpu.memory_space<any>> -> memref<1x32xf32, #tpu.memory_space<any>>
    %84 = tpu.memref_squeeze %83 : memref<1x32xf32, #tpu.memory_space<any>> -> memref<32xf32, #tpu.memory_space<any>>
    %c0_i32_74 = arith.constant 0 : i32
    %85 = tpu.memref_slice %arg8[%c0_i32_71, %c0_i32_74] : memref<2x32xf32, #tpu.memory_space<vmem>> -> memref<1x32xf32, #tpu.memory_space<vmem>>
    %86 = tpu.memref_squeeze %85 : memref<1x32xf32, #tpu.memory_space<vmem>> -> memref<32xf32, #tpu.memory_space<vmem>>
    %87 = tpu.memref_slice %arg9[%c0_i32_72] : memref<2x!tpu.dma_semaphore, #tpu.memory_space<semaphore_mem>> -> memref<1x!tpu.dma_semaphore, #tpu.memory_space<semaphore_mem>>
    %88 = tpu.memref_squeeze %87 : memref<1x!tpu.dma_semaphore, #tpu.memory_space<semaphore_mem>> -> memref<!tpu.dma_semaphore, #tpu.memory_space<semaphore_mem>>
    tpu.enqueue_dma source(%84 : memref<32xf32, #tpu.memory_space<any>>) target(%86 : memref<32xf32, #tpu.memory_space<vmem>>) target_semaphore(%88 : memref<!tpu.dma_semaphore, #tpu.memory_space<semaphore_mem>>)
    %c0_i32_75 = arith.constant 0 : i32
    %c16_i32_76 = arith.constant 16 : i32
    %89 = arith.addi %c0_i32_75, %c16_i32_76 : i32
    %c1_i32_77 = arith.constant 1 : i32
    scf.for %arg11 = %c0_i32_75 to %89 step %c1_i32_77  : i32 {
      %c1_i32_102 = arith.constant 1 : i32
      %131 = arith.muli %arg11, %c1_i32_102 : i32
      %c0_i32_103 = arith.constant 0 : i32
      %132 = arith.addi %c0_i32_103, %131 : i32
      %c1_i32_104 = arith.constant 1 : i32
      %133 = arith.andi %132, %c1_i32_104 : i32
      %c0_i32_105 = arith.constant 0 : i32
      %c0_i32_106 = arith.constant 0 : i32
      %134 = tpu.memref_slice %arg2[%c0_i32_105, %c0_i32_106] : memref<50x32xf32, #tpu.memory_space<any>> -> memref<1x32xf32, #tpu.memory_space<any>>
      %135 = tpu.memref_squeeze %134 : memref<1x32xf32, #tpu.memory_space<any>> -> memref<32xf32, #tpu.memory_space<any>>
      %c0_i32_107 = arith.constant 0 : i32
      %136 = tpu.memref_slice %arg8[%133, %c0_i32_107] : memref<2x32xf32, #tpu.memory_space<vmem>> -> memref<1x32xf32, #tpu.memory_space<vmem>>
      %137 = tpu.memref_squeeze %136 : memref<1x32xf32, #tpu.memory_space<vmem>> -> memref<32xf32, #tpu.memory_space<vmem>>
      %138 = tpu.memref_slice %arg9[%133] : memref<2x!tpu.dma_semaphore, #tpu.memory_space<semaphore_mem>> -> memref<1x!tpu.dma_semaphore, #tpu.memory_space<semaphore_mem>>
      %139 = tpu.memref_squeeze %138 : memref<1x!tpu.dma_semaphore, #tpu.memory_space<semaphore_mem>> -> memref<!tpu.dma_semaphore, #tpu.memory_space<semaphore_mem>>
      tpu.wait_dma2 semaphore(%139 : memref<!tpu.dma_semaphore, #tpu.memory_space<semaphore_mem>>) src(%135 : memref<32xf32, #tpu.memory_space<any>>) dst(%137 : memref<32xf32, #tpu.memory_space<vmem>>)
      %c1_i32_108 = arith.constant 1 : i32
      %140 = arith.addi %132, %c1_i32_108 : i32
      %c16_i32_109 = arith.constant 16 : i32
      %141 = arith.cmpi slt, %140, %c16_i32_109 : i32
      %142 = arith.extui %141 : i1 to i32
      %c0_i32_110 = arith.constant 0 : i32
      %143 = arith.cmpi ne, %142, %c0_i32_110 : i32
      scf.if %143 {
        %c1_i32_115 = arith.constant 1 : i32
        %153 = arith.addi %132, %c1_i32_115 : i32
        %154 = arith.index_cast %80 : i32 to index
        %155 = arith.index_cast %153 : i32 to index
        %156 = memref.load %arg1[%154, %155] : memref<8x16xi32, #tpu.memory_space<smem>>
        %c1_i32_116 = arith.constant 1 : i32
        %157 = arith.subi %c1_i32_116, %133 : i32
        %c1_i32_117 = arith.constant 1 : i32
        %158 = arith.subi %c1_i32_117, %133 : i32
        %c0_i32_118 = arith.constant 0 : i32
        %159 = tpu.memref_slice %arg2[%156, %c0_i32_118] : memref<50x32xf32, #tpu.memory_space<any>> -> memref<1x32xf32, #tpu.memory_space<any>>
        %160 = tpu.memref_squeeze %159 : memref<1x32xf32, #tpu.memory_space<any>> -> memref<32xf32, #tpu.memory_space<any>>
        %c0_i32_119 = arith.constant 0 : i32
        %161 = tpu.memref_slice %arg8[%157, %c0_i32_119] : memref<2x32xf32, #tpu.memory_space<vmem>> -> memref<1x32xf32, #tpu.memory_space<vmem>>
        %162 = tpu.memref_squeeze %161 : memref<1x32xf32, #tpu.memory_space<vmem>> -> memref<32xf32, #tpu.memory_space<vmem>>
        %163 = tpu.memref_slice %arg9[%158] : memref<2x!tpu.dma_semaphore, #tpu.memory_space<semaphore_mem>> -> memref<1x!tpu.dma_semaphore, #tpu.memory_space<semaphore_mem>>
        %164 = tpu.memref_squeeze %163 : memref<1x!tpu.dma_semaphore, #tpu.memory_space<semaphore_mem>> -> memref<!tpu.dma_semaphore, #tpu.memory_space<semaphore_mem>>
        tpu.enqueue_dma source(%160 : memref<32xf32, #tpu.memory_space<any>>) target(%162 : memref<32xf32, #tpu.memory_space<vmem>>) target_semaphore(%164 : memref<!tpu.dma_semaphore, #tpu.memory_space<semaphore_mem>>)
      } else {
      }
      %c7 = arith.constant 7 : index
      %c0_111 = arith.constant 0 : index
      %144 = vector.load %arg10[%c7, %c0_111] : memref<8x32xf32, #tpu.memory_space<vmem>>, vector<1x32xf32>
      %145 = vector.shape_cast %144 : vector<1x32xf32> to vector<32xf32>
      %146 = arith.index_cast %133 : i32 to index
      %c0_112 = arith.constant 0 : index
      %147 = vector.load %arg8[%146, %c0_112] : memref<2x32xf32, #tpu.memory_space<vmem>>, vector<1x32xf32>
      %148 = vector.shape_cast %147 : vector<1x32xf32> to vector<32xf32>
      %149 = arith.addf %145, %148 : vector<32xf32>
      %c7_113 = arith.constant 7 : index
      %c0_114 = arith.constant 0 : index
      %150 = vector.load %arg10[%c7_113, %c0_114] : memref<8x32xf32, #tpu.memory_space<vmem>>, vector<1x32xf32>
      %151 = vector.shape_cast %150 : vector<1x32xf32> to vector<32xf32>
      %152 = vector.shape_cast %149 : vector<32xf32> to vector<1x32xf32>
      tpu.vector_store %arg10[%c7_113, %c0_114], %152 {strides = array<i32>} : memref<8x32xf32, #tpu.memory_space<vmem>>, vector<1x32xf32>,
    }
    %c16_i32_78 = arith.constant 16 : i32
    %c0_79 = arith.constant 0 : index
    %c0_80 = arith.constant 0 : index
    %90 = vector.load %arg10[%c0_79, %c0_80] : memref<8x32xf32, #tpu.memory_space<vmem>>, vector<8x32xf32>
    %cst_81 = arith.constant 6.250000e-02 : f32
    %91 = vector.broadcast %cst_81 : f32 to vector<8x32xf32>
    %92 = arith.mulf %90, %91 : vector<8x32xf32>
    %cst_82 = arith.constant dense<0.000000e+00> : vector<8xf32>
    %93 = vector.multi_reduction <add>, %92, %cst_82 [1] : vector<8x32xf32> to vector<8xf32>
    %94 = vector.shape_cast %93 : vector<8xf32> to vector<8x1xf32>
    %cst_83 = arith.constant 3.200000e+01 : f32
    %95 = vector.broadcast %cst_83 : f32 to vector<8x1xf32>
    %96 = arith.divf %94, %95 : vector<8x1xf32>
    %97 = vector.broadcast %96 : vector<8x1xf32> to vector<8x32xf32>
    %98 = arith.subf %92, %97 : vector<8x32xf32>
    %99 = arith.mulf %98, %98 : vector<8x32xf32>
    %cst_84 = arith.constant dense<0.000000e+00> : vector<8xf32>
    %100 = vector.multi_reduction <add>, %99, %cst_84 [1] : vector<8x32xf32> to vector<8xf32>
    %101 = vector.shape_cast %100 : vector<8xf32> to vector<8x1xf32>
    %cst_85 = arith.constant 3.200000e+01 : f32
    %102 = vector.broadcast %cst_85 : f32 to vector<8x1xf32>
    %103 = arith.divf %101, %102 : vector<8x1xf32>
    %104 = vector.broadcast %96 : vector<8x1xf32> to vector<8x32xf32>
    %105 = arith.subf %92, %104 : vector<8x32xf32>
    %cst_86 = arith.constant 9.99999974E-6 : f32
    %106 = vector.broadcast %cst_86 : f32 to vector<8x1xf32>
    %107 = arith.addf %103, %106 : vector<8x1xf32>
    %108 = math.rsqrt %107 : vector<8x1xf32>
    %109 = vector.broadcast %108 : vector<8x1xf32> to vector<8x32xf32>
    %110 = arith.mulf %105, %109 : vector<8x32xf32>
    %c0_87 = arith.constant 0 : index
    %c0_88 = arith.constant 0 : index
    %111 = vector.load %arg3[%c0_87, %c0_88] : memref<32x128xf32, #tpu.memory_space<vmem>>, vector<32x128xf32>
    %cst_89 = arith.constant dense<0.000000e+00> : vector<8x128xf32>
    %112 = tpu.matmul %110, %111, %cst_89 {dimension_numbers = #tpu.dot_dimension_numbers<[1], [0], [0], [1], [0, 0, 1, 1], [], []>} : vector<8x32xf32>, vector<32x128xf32>, vector<8x128xf32> -> vector<8x128xf32>
    %c0_90 = arith.constant 0 : index
    %c0_91 = arith.constant 0 : index
    %113 = vector.load %arg4[%c0_90, %c0_91] : memref<1x128xf32, #tpu.memory_space<vmem>>, vector<1x128xf32>
    %114 = vector.broadcast %113 : vector<1x128xf32> to vector<8x128xf32>
    %115 = arith.addf %112, %114 : vector<8x128xf32>
    %cst_92 = arith.constant 0.000000e+00 : f32
    %116 = vector.broadcast %cst_92 : f32 to vector<8x128xf32>
    %117 = arith.minimumf %115, %116 : vector<8x128xf32>
    %118 = math.absf %115 : vector<8x128xf32>
    %cst_93 = arith.constant 0.000000e+00 : f32
    %119 = vector.broadcast %cst_93 : f32 to vector<8x128xf32>
    %120 = arith.subf %119, %118 : vector<8x128xf32>
    %121 = math.exp %120 : vector<8x128xf32>
    %122 = math.log1p %121 : vector<8x128xf32>
    %123 = arith.subf %117, %122 : vector<8x128xf32>
    %c0_94 = arith.constant 0 : index
    %c0_95 = arith.constant 0 : index
    %124 = vector.load %arg6[%c0_94, %c0_95] : memref<128x128xf32, #tpu.memory_space<vmem>>, vector<128x128xf32>
    %cst_96 = arith.constant dense<0.000000e+00> : vector<8x128xf32>
    %125 = tpu.matmul %123, %124, %cst_96 {dimension_numbers = #tpu.dot_dimension_numbers<[1], [0], [0], [1], [0, 0, 1, 1], [], []>} : vector<8x128xf32>, vector<128x128xf32>, vector<8x128xf32> -> vector<8x128xf32>
    %c0_97 = arith.constant 0 : index
    %c0_98 = arith.constant 0 : index
    %126 = vector.load %arg5[%c0_97, %c0_98] : memref<128x128xf32, #tpu.memory_space<vmem>>, vector<128x128xf32>
    %cst_99 = arith.constant dense<0.000000e+00> : vector<8x128xf32>
    %127 = tpu.matmul %115, %126, %cst_99 {dimension_numbers = #tpu.dot_dimension_numbers<[1], [0], [0], [1], [0, 0, 1, 1], [], []>} : vector<8x128xf32>, vector<128x128xf32>, vector<8x128xf32> -> vector<8x128xf32>
    %128 = arith.subf %125, %127 : vector<8x128xf32>
    %129 = math.exp %128 : vector<8x128xf32>
    %c0_100 = arith.constant 0 : index
    %c0_101 = arith.constant 0 : index
    %130 = vector.load %arg7[%c0_100, %c0_101] : memref<8x128xf32, #tpu.memory_space<vmem>>, vector<8x128xf32>
    tpu.vector_store %arg7[%c0_100, %c0_101], %129 {strides = array<i32>} : memref<8x128xf32, #tpu.memory_space<vmem>>, vector<8x128xf32>,
    return
  }
  func.func @transform_1(%arg0: i32, %arg1: memref<8x16xi32, #tpu.memory_space<smem>>) -> (i32, i32) {
    %c0_i32 = arith.constant 0 : i32
    %c0_i32_0 = arith.constant 0 : i32
    %c0_i32_1 = arith.constant 0 : i32
    return %c0_i32, %c0_i32_0 : i32, i32
  }
  func.func @transform_2(%arg0: i32, %arg1: memref<8x16xi32, #tpu.memory_space<smem>>) -> (i32, i32) {
    %c0_i32 = arith.constant 0 : i32
    %c0_i32_0 = arith.constant 0 : i32
    %c0_i32_1 = arith.constant 0 : i32
    return %c0_i32, %c0_i32_0 : i32, i32
  }
  func.func @transform_3(%arg0: i32, %arg1: memref<8x16xi32, #tpu.memory_space<smem>>) -> (i32, i32) {
    %c0_i32 = arith.constant 0 : i32
    %c0_i32_0 = arith.constant 0 : i32
    %c0_i32_1 = arith.constant 0 : i32
    return %c0_i32, %c0_i32_0 : i32, i32
  }
  func.func @transform_4(%arg0: i32, %arg1: memref<8x16xi32, #tpu.memory_space<smem>>) -> (i32, i32) {
    %c0_i32 = arith.constant 0 : i32
    %c0_i32_0 = arith.constant 0 : i32
    %c0_i32_1 = arith.constant 0 : i32
    return %c0_i32, %c0_i32_0 : i32, i32
  }
  func.func @transform_5(%arg0: i32, %arg1: memref<8x16xi32, #tpu.memory_space<smem>>) -> (i32, i32) {
    %c0_i32 = arith.constant 0 : i32
    %c0_i32_0 = arith.constant 0 : i32
    return %arg0, %c0_i32 : i32, i32
  }
}

</mosaic_0001>

<llo_original>
// kernel: tpu_custom_call.1
$region0: #{tpu_custom_call.1}
  #allocation0 [shape = 'u32[]', space=smem, size = 0x4, offset = 0x4, fixed_abs, tag = 'smem constant byte address 0x4 - core index']
  #allocation1 [shape = 'u32[144,128]{1,0:T(1,128)}', space=vmem, size = 0x12000, scoped, tag = 'internal scratch']
  #allocation2 [shape = 'f32[2,32]{1,0:T(2,128)}', space=vmem, size = 0x400, scoped, tag = 'scratch operand']
  #allocation3 [shape = 's32[2]{0}', space=sflag, size = 0x8, scoped, tag = 'scratch operand']
  #allocation4 [shape = 'f32[8,32]{1,0:T(8,128)}', space=vmem, size = 0x1000, scoped, tag = 'scratch operand']
  #allocation5 [shape = 's32[1]{0}', space=sflag, size = 0x4, scoped, tag = 'scoped memory for tpu_custom_call.1']
  #allocation6 [shape = 'u8[4096]{0}', space=smem, size = 0x1000, scoped, tag = 'prefetched SMEM operand 0']
  #allocation13 [shape = 's32[]', space=sflag, size = 0x4, offset = 0, fixed_abs, tag = 'sflag constant byte address 0x0 - dummy sync flag']
  #allocation14 [shape = 's32[]', space=sflag, size = 0x4, offset = 0, fixed_abs, tag = 'sflag constant byte address 0x0 - dummy sync flag']
  #allocation15 [shape = 's32[]', space=sflag, size = 0x4, offset = 0, fixed_abs, tag = 'sflag constant byte address 0x0 - dummy sync flag']
  #allocation16 [shape = 's32[]', space=sflag, size = 0x4, offset = 0, fixed_abs, tag = 'sflag constant byte address 0x0 - dummy sync flag']
  #allocation17 [shape = 's32[]', space=sflag, size = 0x4, offset = 0, fixed_abs, tag = 'sflag constant byte address 0x0 - dummy sync flag']
  #allocation18 [shape = 's32[]', space=sflag, size = 0x4, offset = 0, fixed_abs, tag = 'sflag constant byte address 0x0 - dummy sync flag']
  #allocation19 [shape = 's32[]', space=sflag, size = 0x4, offset = 0, fixed_abs, tag = 'sflag constant byte address 0x0 - dummy sync flag']
  #allocation20 [shape = 's32[]', space=sflag, size = 0x4, offset = 0, fixed_abs, tag = 'sflag constant byte address 0x0 - dummy sync flag']
  #allocation21 [shape = 's32[]', space=sflag, size = 0x4, offset = 0, fixed_abs, tag = 'sflag constant byte address 0x0 - dummy sync flag']
  #allocation22 [shape = 's32[]', space=sflag, size = 0x4, offset = 0, fixed_abs, tag = 'sflag constant byte address 0x0 - dummy sync flag']
  #allocation23 [shape = 's32[]', space=sflag, size = 0x4, offset = 0, fixed_abs, tag = 'sflag constant byte address 0x0 - dummy sync flag']
  #allocation24 [shape = 's32[]', space=sflag, size = 0x4, offset = 0, fixed_abs, tag = 'sflag constant byte address 0x0 - dummy sync flag']
  #allocation25 [shape = 's32[]', space=sflag, size = 0x4, offset = 0, fixed_abs, tag = 'sflag constant byte address 0x0 - dummy sync flag']
  #allocation26 [shape = 's32[]', space=sflag, size = 0x4, offset = 0, fixed_abs, tag = 'sflag constant byte address 0x0 - dummy sync flag']
  #allocation27 [shape = 's32[]', space=sflag, size = 0x4, offset = 0, fixed_abs, tag = 'sflag constant byte address 0x0 - dummy sync flag']
  #allocation28 [shape = 's32[]', space=sflag, size = 0x4, offset = 0, fixed_abs, tag = 'sflag constant byte address 0x0 - dummy sync flag']
  %s0 = inlined_call_operand.vmem [shape: s32[8,16], index: 0, kind: input, shape index: {}]
  %s1 = inlined_call_operand.vmem [shape: f32[50,32], index: 1, kind: input, shape index: {}]
  %s2 = inlined_call_operand.vmem [shape: f32[32,128], index: 2, kind: input, shape index: {}]
  %s3 = inlined_call_operand.vmem [shape: f32[1,128], index: 3, kind: input, shape index: {}]
  %s4 = inlined_call_operand.hbm [shape: f32[128,128], index: 4, kind: input, shape index: {}]
  %s5 = inlined_call_operand.hbm [shape: f32[128,128], index: 5, kind: input, shape index: {}]
  %s6 = inlined_call_operand.hbm [shape: f32[8,128], index: 6, kind: output, shape index: {}]
  %s7 = sld [smem:[#allocation0]]
  $region602: #{tpu_custom_call.1} parent=0
    _
  %s9 = ssub.s32 1, %s7
  %s10 = scalar_select 0, %s9, %s7
  %s11 = sshll.u32 %s0, 4
  %s12 = int_to_ptr.vmem [resolvable:$true] %s11
  %14 = dma.vmem_to_smem %s12, 128, [#allocation6], [#allocation5]
  %15 = dma.done [#allocation5], 128
  %16 = sfence
  $region1: #{tpu_custom_call.1} parent=0
    #allocation7 [shape = 'u8[65536]{0}', space=vmem, size = 0x10000, scoped, tag = 'input window, operand 4, single buffered']
    #allocation8 [shape = 's32[1]{0}', space=sflag, size = 0x4, scoped, tag = 'scoped memory for tpu_custom_call.1']
    #allocation9 [shape = 's32[1]{0}', space=sflag, size = 0x4, scoped, tag = 'scoped memory for tpu_custom_call.1']
    #allocation10 [shape = 'u8[65536]{0}', space=vmem, size = 0x10000, scoped, tag = 'input window, operand 5, single buffered']
    #allocation11 [shape = 's32[1]{0}', space=sflag, size = 0x4, scoped, tag = 'scoped memory for tpu_custom_call.1']
    #allocation12 [shape = 'u8[4096]{0}', space=vmem, size = 0x1000, scoped, tag = 'output window, operand 0, single buffered']
    %17 = vsyncpa [#allocation8], 0
    %18 = vsyncpa [#allocation11], 0
    %19 = vsyncpa [#allocation9], 0
    // Predicated region
    $region2: #{tpu_custom_call.1} parent=1 // pred_check
      _
    $region3: #{tpu_custom_call.1} parent=1 // pred_check_branch
      %21 = sbr.rel (0) target = $region5
    $region4: #{tpu_custom_call.1} parent=1 // pred_region
      _
    $region5: #{tpu_custom_call.1} parent=1 // pred_fallthru
      _
    // Predicated region
    $region6: #{tpu_custom_call.1} parent=1 // pred_check
      _
    $region7: #{tpu_custom_call.1} parent=1 // pred_check_branch
      %23 = sbr.rel (0) target = $region9
    $region8: #{tpu_custom_call.1} parent=1 // pred_region
      _
    $region9: #{tpu_custom_call.1} parent=1 // pred_fallthru
      _
    // Predicated region
    $region10: #{tpu_custom_call.1} parent=1 // pred_check
      _
    $region11: #{tpu_custom_call.1} parent=1 // pred_check_branch
      %25 = sbr.rel (0) target = $region13
    $region12: #{tpu_custom_call.1} parent=1 // pred_region
      %s27 = ssub.s32 2048, 2048
      %28 = vsyncadd [#allocation8], %s27
      %s29 = sshll.u32 [#allocation7], 4
      %s30 = int_to_ptr.vmem [resolvable:$true] %s29
      %35 = dma.hbm_to_vmem [thread:$0]  %s4, 2048, %s30, [#allocation8], 128, 128, 8
    $region13: #{tpu_custom_call.1} parent=1 // pred_fallthru
      _
    // Predicated region
    $region14: #{tpu_custom_call.1} parent=1 // pred_check
      _
    $region15: #{tpu_custom_call.1} parent=1 // pred_check_branch
      %37 = sbr.rel (0) target = $region17
    $region16: #{tpu_custom_call.1} parent=1 // pred_region
      %s39 = ssub.s32 2048, 2048
      %40 = vsyncadd [#allocation11], %s39
      %s41 = sshll.u32 [#allocation10], 4
      %s42 = int_to_ptr.vmem [resolvable:$true] %s41
      %47 = dma.hbm_to_vmem [thread:$0]  %s5, 2048, %s42, [#allocation11], 128, 128, 8
    $region17: #{tpu_custom_call.1} parent=1 // pred_fallthru
      _
    // Predicated region
    $region18: #{tpu_custom_call.1} parent=1 // pred_check
      _
    $region19: #{tpu_custom_call.1} parent=1 // pred_check_branch
      %49 = sbr.rel (0) target = $region21
    $region20: #{tpu_custom_call.1} parent=1 // pred_region
      %50 = dma.done [#allocation8], 2048
    $region21: #{tpu_custom_call.1} parent=1 // pred_fallthru
      _
    // Predicated region
    $region22: #{tpu_custom_call.1} parent=1 // pred_check
      _
    $region23: #{tpu_custom_call.1} parent=1 // pred_check_branch
      %52 = sbr.rel (0) target = $region25
    $region24: #{tpu_custom_call.1} parent=1 // pred_region
      %53 = dma.done [#allocation11], 2048
    $region25: #{tpu_custom_call.1} parent=1 // pred_fallthru
      _
    %vm54 = vcmask 261120
    %55 = vst.msk [vmem:[#allocation4] sm:$0xff] %vm54, 0.0
    %s56 = smul.u32 0, 8
    %s57 = smul.u32 %s56, 128
    %s58 = sld [smem:[#allocation6 + %s57]]
    %s59 = scalar_lea.vmem %s1, %s58
    %p61 = scmp.lt.u32.totalorder 1, 8
    %p62 = pneg %p61
    // Predicated region
    $region26: #{tpu_custom_call.1} parent=1 // pred_check
      _
    $region27: #{tpu_custom_call.1} parent=1 // pred_check_branch
      %64 = sbr.rel (%p61) target = $region29
    $region28: #{tpu_custom_call.1} parent=1 // pred_region
      %s79 = sand.u32 1, 7
      %p80 = scmp.eq.s32.totalorder %s79, 0
      %p81 = pneg %p80
      // Predicated region
      $region41: #{tpu_custom_call.1} parent=28 // pred_check
        _
      $region42: #{tpu_custom_call.1} parent=28 // pred_check_branch
        %83 = sbr.rel (%p80) target = $region44
      $region43: #{tpu_custom_call.1} parent=28 // pred_region
        %s84 = sand.u32 1, 7
        %s85 = ssub.s32 1, %s84
        %s86 = scalar_lea.vmem %s59, %s85
        %s87 = ssub.s32 1, %s84
        %s88 = scalar_lea.vmem [#allocation2], %s87
        %s89 = sshllo.u32 0, %s84
        loop: start=0, step=1, limit=1
        $region45: #{tpu_custom_call.1} parent=43 // loop_pre_header
          _
        $region46: #{tpu_custom_call.1} parent=43 // loop_header
          %s91 = sphi 0, %s95
          %p92 = scmp.ge.s32.totalorder %s91, 1
          %s96 = sphi %s86, %s86
          %s97 = sphi %s88, %s88
        $region47: #{tpu_custom_call.1} parent=43 // loop_header_branch
          %94 = sbr.rel (%p92) target = $region51
        $region48: #{tpu_custom_call.1} parent=43 // loop_body
          %v98 = vld [vmem:[%s96] sm:%s89]
          %99 = vst [vmem:[%s97] sm:%s89] %v98
        $region49: #{tpu_custom_call.1} parent=43 // loop_footer
          %s95 = sadd.s32 1, %s91
        $region50: #{tpu_custom_call.1} parent=43 // loop_footer_branch
          %90 = sbr.rel target = $region46
        $region51: #{tpu_custom_call.1} parent=43 // loop_exit
          _
      $region44: #{tpu_custom_call.1} parent=28 // pred_fallthru
        _
    $region29: #{tpu_custom_call.1} parent=1 // pred_fallthru
      _
    // Predicated region
    $region30: #{tpu_custom_call.1} parent=1 // pred_check
      %p65 = pneg %p61
    $region31: #{tpu_custom_call.1} parent=1 // pred_check_branch
      %67 = sbr.rel (%p65) target = $region33
    $region32: #{tpu_custom_call.1} parent=1 // pred_region
      %s68 = sshllo.u32 0, 1
      loop: start=0, step=1, limit=1
      $region34: #{tpu_custom_call.1} parent=32 // loop_pre_header
        _
      $region35: #{tpu_custom_call.1} parent=32 // loop_header
        %s70 = sphi 0, %s74
        %p71 = scmp.ge.s32.totalorder %s70, 1
        %s75 = sphi %s59, %s59
        %s76 = sphi [#allocation2], [#allocation2]
      $region36: #{tpu_custom_call.1} parent=32 // loop_header_branch
        %73 = sbr.rel (%p71) target = $region40
      $region37: #{tpu_custom_call.1} parent=32 // loop_body
        %v77 = vld [vmem:[%s75] sm:%s68]
        %78 = vst [vmem:[%s76] sm:%s68] %v77
      $region38: #{tpu_custom_call.1} parent=32 // loop_footer
        %s74 = sadd.s32 1, %s70
      $region39: #{tpu_custom_call.1} parent=32 // loop_footer_branch
        %69 = sbr.rel target = $region35
      $region40: #{tpu_custom_call.1} parent=32 // loop_exit
        _
    $region33: #{tpu_custom_call.1} parent=1 // pred_fallthru
      _
    // Predicated region
    $region52: #{tpu_custom_call.1} parent=1 // pred_check
      _
    $region53: #{tpu_custom_call.1} parent=1 // pred_check_branch
      %102 = sbr.rel (0) target = $region55
    $region54: #{tpu_custom_call.1} parent=1 // pred_region
      %103 = vsyncadd [#allocation3], 16
    $region55: #{tpu_custom_call.1} parent=1 // pred_fallthru
      _
    loop: start=0, step=1, limit=16
    $region56: #{tpu_custom_call.1} parent=1 // loop_pre_header
      _
    $region57: #{tpu_custom_call.1} parent=1 // loop_header
      %s105 = sphi 0, %s109
      %p106 = scmp.ge.s32.totalorder %s105, 16
    $region58: #{tpu_custom_call.1} parent=1 // loop_header_branch
      %108 = sbr.rel (%p106) target = $region62
    $region59: #{tpu_custom_call.1} parent=1 // loop_body
      %s110 = sand.u32 %s105, 1
      %s111 = scalar_lea.sflag [#allocation3], %s110
      %113 = dma.done %s111, 16
      %s114 = sadd.s32 %s105, 1
      %p115 = scmp.lt.s32.totalorder %s114, 16
      // Predicated region
      $region63: #{tpu_custom_call.1} parent=59 // pred_check
        %p116 = pneg %p115
      $region64: #{tpu_custom_call.1} parent=59 // pred_check_branch
        %118 = sbr.rel (%p116) target = $region66
      $region65: #{tpu_custom_call.1} parent=59 // pred_region
        %s119 = sshra.s32 %s114, 7
        %s120 = sand.u32 %s114, 127
        %s121 = sadd.s32 %s119, %s56
        %s122 = smul.u32 %s121, 128
        %s123 = sshra.s32 %s114, 7
        %s124 = sand.u32 %s114, 127
        %s125 = sadd.s32 %s122, %s124
        %s126 = sld [smem:[#allocation6 + %s125]]
        %s127 = ssub.s32 1, %s110
        %s128 = scalar_lea.vmem %s1, %s126
        %s129 = scalar_lea.vmem [#allocation2], %s127
        %s130 = scalar_lea.sflag [#allocation3], %s127
        %p132 = scmp.lt.u32.totalorder 1, 8
        %p133 = pneg %p132
        // Predicated region
        $region67: #{tpu_custom_call.1} parent=65 // pred_check
          _
        $region68: #{tpu_custom_call.1} parent=65 // pred_check_branch
          %135 = sbr.rel (%p132) target = $region70
        $region69: #{tpu_custom_call.1} parent=65 // pred_region
          %s150 = sand.u32 1, 7
          %p151 = scmp.eq.s32.totalorder %s150, 0
          %p152 = pneg %p151
          // Predicated region
          $region82: #{tpu_custom_call.1} parent=69 // pred_check
            _
          $region83: #{tpu_custom_call.1} parent=69 // pred_check_branch
            %154 = sbr.rel (%p151) target = $region85
          $region84: #{tpu_custom_call.1} parent=69 // pred_region
            %s155 = sand.u32 1, 7
            %s156 = ssub.s32 1, %s155
            %s157 = scalar_lea.vmem %s128, %s156
            %s158 = ssub.s32 1, %s155
            %s159 = scalar_lea.vmem %s129, %s158 [#allocation2]
            %s160 = sshllo.u32 0, %s155
            loop: start=0, step=1, limit=1
            $region86: #{tpu_custom_call.1} parent=84 // loop_pre_header
              _
            $region87: #{tpu_custom_call.1} parent=84 // loop_header
              %s162 = sphi 0, %s166
              %p163 = scmp.ge.s32.totalorder %s162, 1
              %s167 = sphi %s157, %s157
              %s168 = sphi %s159, %s159
            $region88: #{tpu_custom_call.1} parent=84 // loop_header_branch
              %165 = sbr.rel (%p163) target = $region92
            $region89: #{tpu_custom_call.1} parent=84 // loop_body
              %v169 = vld [vmem:[%s167] sm:%s160]
              %170 = vst [vmem:[%s168] sm:%s160] %v169
            $region90: #{tpu_custom_call.1} parent=84 // loop_footer
              %s166 = sadd.s32 1, %s162
            $region91: #{tpu_custom_call.1} parent=84 // loop_footer_branch
              %161 = sbr.rel target = $region87
            $region92: #{tpu_custom_call.1} parent=84 // loop_exit
              _
          $region85: #{tpu_custom_call.1} parent=69 // pred_fallthru
            _
        $region70: #{tpu_custom_call.1} parent=65 // pred_fallthru
          _
        // Predicated region
        $region71: #{tpu_custom_call.1} parent=65 // pred_check
          %p136 = pneg %p132
        $region72: #{tpu_custom_call.1} parent=65 // pred_check_branch
          %138 = sbr.rel (%p136) target = $region74
        $region73: #{tpu_custom_call.1} parent=65 // pred_region
          %s139 = sshllo.u32 0, 1
          loop: start=0, step=1, limit=1
          $region75: #{tpu_custom_call.1} parent=73 // loop_pre_header
            _
          $region76: #{tpu_custom_call.1} parent=73 // loop_header
            %s141 = sphi 0, %s145
            %p142 = scmp.ge.s32.totalorder %s141, 1
            %s146 = sphi %s128, %s128
            %s147 = sphi %s129, %s129
          $region77: #{tpu_custom_call.1} parent=73 // loop_header_branch
            %144 = sbr.rel (%p142) target = $region81
          $region78: #{tpu_custom_call.1} parent=73 // loop_body
            %v148 = vld [vmem:[%s146] sm:%s139]
            %149 = vst [vmem:[%s147] sm:%s139] %v148
          $region79: #{tpu_custom_call.1} parent=73 // loop_footer
            %s145 = sadd.s32 1, %s141
          $region80: #{tpu_custom_call.1} parent=73 // loop_footer_branch
            %140 = sbr.rel target = $region76
          $region81: #{tpu_custom_call.1} parent=73 // loop_exit
            _
        $region74: #{tpu_custom_call.1} parent=65 // pred_fallthru
          _
        // Predicated region
        $region93: #{tpu_custom_call.1} parent=65 // pred_check
          _
        $region94: #{tpu_custom_call.1} parent=65 // pred_check_branch
          %173 = sbr.rel (0) target = $region96
        $region95: #{tpu_custom_call.1} parent=65 // pred_region
          %174 = vsyncadd %s130, 16
        $region96: #{tpu_custom_call.1} parent=65 // pred_fallthru
          _
      $region66: #{tpu_custom_call.1} parent=59 // pred_fallthru
        _
      %v175 = vld [vmem:[#allocation4] sm:$0x1]
      %s176 = scalar_lea.vmem [#allocation2], %s110
      %v177 = vld [vmem:[%s176] sm:$0x1]
      %v178 = vadd.f32 %v175, %v177
      %vm179 = vcmask 253952
      %180 = vst.msk [vmem:[#allocation4] sm:$0x1] %vm179, %v178
    $region60: #{tpu_custom_call.1} parent=1 // loop_footer
      %s109 = sadd.s32 1, %s105
    $region61: #{tpu_custom_call.1} parent=1 // loop_footer_branch
      %104 = sbr.rel target = $region57
    $region62: #{tpu_custom_call.1} parent=1 // loop_exit
      _
    %s181 = sadd.s32 %s56, 1
    %s182 = smul.u32 %s181, 128
    %s183 = sld [smem:[#allocation6 + %s182]]
    %s184 = scalar_lea.vmem %s1, %s183
    %p186 = scmp.lt.u32.totalorder 1, 8
    %p187 = pneg %p186
    // Predicated region
    $region97: #{tpu_custom_call.1} parent=1 // pred_check
      _
    $region98: #{tpu_custom_call.1} parent=1 // pred_check_branch
      %189 = sbr.rel (%p186) target = $region100
    $region99: #{tpu_custom_call.1} parent=1 // pred_region
      %s204 = sand.u32 1, 7
      %p205 = scmp.eq.s32.totalorder %s204, 0
      %p206 = pneg %p205
      // Predicated region
      $region112: #{tpu_custom_call.1} parent=99 // pred_check
        _
      $region113: #{tpu_custom_call.1} parent=99 // pred_check_branch
        %208 = sbr.rel (%p205) target = $region115
      $region114: #{tpu_custom_call.1} parent=99 // pred_region
        %s209 = sand.u32 1, 7
        %s210 = ssub.s32 1, %s209
        %s211 = scalar_lea.vmem %s184, %s210
        %s212 = ssub.s32 1, %s209
        %s213 = scalar_lea.vmem [#allocation2], %s212
        %s214 = sshllo.u32 0, %s209
        loop: start=0, step=1, limit=1
        $region116: #{tpu_custom_call.1} parent=114 // loop_pre_header
          _
        $region117: #{tpu_custom_call.1} parent=114 // loop_header
          %s216 = sphi 0, %s220
          %p217 = scmp.ge.s32.totalorder %s216, 1
          %s221 = sphi %s211, %s211
          %s222 = sphi %s213, %s213
        $region118: #{tpu_custom_call.1} parent=114 // loop_header_branch
          %219 = sbr.rel (%p217) target = $region122
        $region119: #{tpu_custom_call.1} parent=114 // loop_body
          %v223 = vld [vmem:[%s221] sm:%s214]
          %224 = vst [vmem:[%s222] sm:%s214] %v223
        $region120: #{tpu_custom_call.1} parent=114 // loop_footer
          %s220 = sadd.s32 1, %s216
        $region121: #{tpu_custom_call.1} parent=114 // loop_footer_branch
          %215 = sbr.rel target = $region117
        $region122: #{tpu_custom_call.1} parent=114 // loop_exit
          _
      $region115: #{tpu_custom_call.1} parent=99 // pred_fallthru
        _
    $region100: #{tpu_custom_call.1} parent=1 // pred_fallthru
      _
    // Predicated region
    $region101: #{tpu_custom_call.1} parent=1 // pred_check
      %p190 = pneg %p186
    $region102: #{tpu_custom_call.1} parent=1 // pred_check_branch
      %192 = sbr.rel (%p190) target = $region104
    $region103: #{tpu_custom_call.1} parent=1 // pred_region
      %s193 = sshllo.u32 0, 1
      loop: start=0, step=1, limit=1
      $region105: #{tpu_custom_call.1} parent=103 // loop_pre_header
        _
      $region106: #{tpu_custom_call.1} parent=103 // loop_header
        %s195 = sphi 0, %s199
        %p196 = scmp.ge.s32.totalorder %s195, 1
        %s200 = sphi %s184, %s184
        %s201 = sphi [#allocation2], [#allocation2]
      $region107: #{tpu_custom_call.1} parent=103 // loop_header_branch
        %198 = sbr.rel (%p196) target = $region111
      $region108: #{tpu_custom_call.1} parent=103 // loop_body
        %v202 = vld [vmem:[%s200] sm:%s193]
        %203 = vst [vmem:[%s201] sm:%s193] %v202
      $region109: #{tpu_custom_call.1} parent=103 // loop_footer
        %s199 = sadd.s32 1, %s195
      $region110: #{tpu_custom_call.1} parent=103 // loop_footer_branch
        %194 = sbr.rel target = $region106
      $region111: #{tpu_custom_call.1} parent=103 // loop_exit
        _
    $region104: #{tpu_custom_call.1} parent=1 // pred_fallthru
      _
    // Predicated region
    $region123: #{tpu_custom_call.1} parent=1 // pred_check
      _
    $region124: #{tpu_custom_call.1} parent=1 // pred_check_branch
      %227 = sbr.rel (0) target = $region126
    $region125: #{tpu_custom_call.1} parent=1 // pred_region
      %228 = vsyncadd [#allocation3], 16
    $region126: #{tpu_custom_call.1} parent=1 // pred_fallthru
      _
    loop: start=0, step=1, limit=16
    $region127: #{tpu_custom_call.1} parent=1 // loop_pre_header
      _
    $region128: #{tpu_custom_call.1} parent=1 // loop_header
      %s230 = sphi 0, %s234
      %p231 = scmp.ge.s32.totalorder %s230, 16
    $region129: #{tpu_custom_call.1} parent=1 // loop_header_branch
      %233 = sbr.rel (%p231) target = $region133
    $region130: #{tpu_custom_call.1} parent=1 // loop_body
      %s235 = sand.u32 %s230, 1
      %s236 = scalar_lea.sflag [#allocation3], %s235
      %238 = dma.done %s236, 16
      %s239 = sadd.s32 %s230, 1
      %p240 = scmp.lt.s32.totalorder %s239, 16
      // Predicated region
      $region134: #{tpu_custom_call.1} parent=130 // pred_check
        %p241 = pneg %p240
      $region135: #{tpu_custom_call.1} parent=130 // pred_check_branch
        %243 = sbr.rel (%p241) target = $region137
      $region136: #{tpu_custom_call.1} parent=130 // pred_region
        %s244 = sshra.s32 %s239, 7
        %s245 = sand.u32 %s239, 127
        %s246 = sadd.s32 %s244, %s181
        %s247 = smul.u32 %s246, 128
        %s248 = sshra.s32 %s239, 7
        %s249 = sand.u32 %s239, 127
        %s250 = sadd.s32 %s247, %s249
        %s251 = sld [smem:[#allocation6 + %s250]]
        %s252 = ssub.s32 1, %s235
        %s253 = scalar_lea.vmem %s1, %s251
        %s254 = scalar_lea.vmem [#allocation2], %s252
        %s255 = scalar_lea.sflag [#allocation3], %s252
        %p257 = scmp.lt.u32.totalorder 1, 8
        %p258 = pneg %p257
        // Predicated region
        $region138: #{tpu_custom_call.1} parent=136 // pred_check
          _
        $region139: #{tpu_custom_call.1} parent=136 // pred_check_branch
          %260 = sbr.rel (%p257) target = $region141
        $region140: #{tpu_custom_call.1} parent=136 // pred_region
          %s275 = sand.u32 1, 7
          %p276 = scmp.eq.s32.totalorder %s275, 0
          %p277 = pneg %p276
          // Predicated region
          $region153: #{tpu_custom_call.1} parent=140 // pred_check
            _
          $region154: #{tpu_custom_call.1} parent=140 // pred_check_branch
            %279 = sbr.rel (%p276) target = $region156
          $region155: #{tpu_custom_call.1} parent=140 // pred_region
            %s280 = sand.u32 1, 7
            %s281 = ssub.s32 1, %s280
            %s282 = scalar_lea.vmem %s253, %s281
            %s283 = ssub.s32 1, %s280
            %s284 = scalar_lea.vmem %s254, %s283 [#allocation2]
            %s285 = sshllo.u32 0, %s280
            loop: start=0, step=1, limit=1
            $region157: #{tpu_custom_call.1} parent=155 // loop_pre_header
              _
            $region158: #{tpu_custom_call.1} parent=155 // loop_header
              %s287 = sphi 0, %s291
              %p288 = scmp.ge.s32.totalorder %s287, 1
              %s292 = sphi %s282, %s282
              %s293 = sphi %s284, %s284
            $region159: #{tpu_custom_call.1} parent=155 // loop_header_branch
              %290 = sbr.rel (%p288) target = $region163
            $region160: #{tpu_custom_call.1} parent=155 // loop_body
              %v294 = vld [vmem:[%s292] sm:%s285]
              %295 = vst [vmem:[%s293] sm:%s285] %v294
            $region161: #{tpu_custom_call.1} parent=155 // loop_footer
              %s291 = sadd.s32 1, %s287
            $region162: #{tpu_custom_call.1} parent=155 // loop_footer_branch
              %286 = sbr.rel target = $region158
            $region163: #{tpu_custom_call.1} parent=155 // loop_exit
              _
          $region156: #{tpu_custom_call.1} parent=140 // pred_fallthru
            _
        $region141: #{tpu_custom_call.1} parent=136 // pred_fallthru
          _
        // Predicated region
        $region142: #{tpu_custom_call.1} parent=136 // pred_check
          %p261 = pneg %p257
        $region143: #{tpu_custom_call.1} parent=136 // pred_check_branch
          %263 = sbr.rel (%p261) target = $region145
        $region144: #{tpu_custom_call.1} parent=136 // pred_region
          %s264 = sshllo.u32 0, 1
          loop: start=0, step=1, limit=1
          $region146: #{tpu_custom_call.1} parent=144 // loop_pre_header
            _
          $region147: #{tpu_custom_call.1} parent=144 // loop_header
            %s266 = sphi 0, %s270
            %p267 = scmp.ge.s32.totalorder %s266, 1
            %s271 = sphi %s253, %s253
            %s272 = sphi %s254, %s254
          $region148: #{tpu_custom_call.1} parent=144 // loop_header_branch
            %269 = sbr.rel (%p267) target = $region152
          $region149: #{tpu_custom_call.1} parent=144 // loop_body
            %v273 = vld [vmem:[%s271] sm:%s264]
            %274 = vst [vmem:[%s272] sm:%s264] %v273
          $region150: #{tpu_custom_call.1} parent=144 // loop_footer
            %s270 = sadd.s32 1, %s266
          $region151: #{tpu_custom_call.1} parent=144 // loop_footer_branch
            %265 = sbr.rel target = $region147
          $region152: #{tpu_custom_call.1} parent=144 // loop_exit
            _
        $region145: #{tpu_custom_call.1} parent=136 // pred_fallthru
          _
        // Predicated region
        $region164: #{tpu_custom_call.1} parent=136 // pred_check
          _
        $region165: #{tpu_custom_call.1} parent=136 // pred_check_branch
          %298 = sbr.rel (0) target = $region167
        $region166: #{tpu_custom_call.1} parent=136 // pred_region
          %299 = vsyncadd %s255, 16
        $region167: #{tpu_custom_call.1} parent=136 // pred_fallthru
          _
      $region137: #{tpu_custom_call.1} parent=130 // pred_fallthru
        _
      %v300 = vld [vmem:[#allocation4 + $0x1] sm:$0x1]
      %s301 = scalar_lea.vmem [#allocation2], %s235
      %v302 = vld [vmem:[%s301] sm:$0x1]
      %v303 = vadd.f32 %v300, %v302
      %vm304 = vcmask 253952
      %305 = vst.msk [vmem:[#allocation4 + $0x1] sm:$0x1] %vm304, %v303
    $region131: #{tpu_custom_call.1} parent=1 // loop_footer
      %s234 = sadd.s32 1, %s230
    $region132: #{tpu_custom_call.1} parent=1 // loop_footer_branch
      %229 = sbr.rel target = $region128
    $region133: #{tpu_custom_call.1} parent=1 // loop_exit
      _
    %s306 = sadd.s32 %s56, 2
    %s307 = smul.u32 %s306, 128
    %s308 = sld [smem:[#allocation6 + %s307]]
    %s309 = scalar_lea.vmem %s1, %s308
    %p311 = scmp.lt.u32.totalorder 1, 8
    %p312 = pneg %p311
    // Predicated region
    $region168: #{tpu_custom_call.1} parent=1 // pred_check
      _
    $region169: #{tpu_custom_call.1} parent=1 // pred_check_branch
      %314 = sbr.rel (%p311) target = $region171
    $region170: #{tpu_custom_call.1} parent=1 // pred_region
      %s329 = sand.u32 1, 7
      %p330 = scmp.eq.s32.totalorder %s329, 0
      %p331 = pneg %p330
      // Predicated region
      $region183: #{tpu_custom_call.1} parent=170 // pred_check
        _
      $region184: #{tpu_custom_call.1} parent=170 // pred_check_branch
        %333 = sbr.rel (%p330) target = $region186
      $region185: #{tpu_custom_call.1} parent=170 // pred_region
        %s334 = sand.u32 1, 7
        %s335 = ssub.s32 1, %s334
        %s336 = scalar_lea.vmem %s309, %s335
        %s337 = ssub.s32 1, %s334
        %s338 = scalar_lea.vmem [#allocation2], %s337
        %s339 = sshllo.u32 0, %s334
        loop: start=0, step=1, limit=1
        $region187: #{tpu_custom_call.1} parent=185 // loop_pre_header
          _
        $region188: #{tpu_custom_call.1} parent=185 // loop_header
          %s341 = sphi 0, %s345
          %p342 = scmp.ge.s32.totalorder %s341, 1
          %s346 = sphi %s336, %s336
          %s347 = sphi %s338, %s338
        $region189: #{tpu_custom_call.1} parent=185 // loop_header_branch
          %344 = sbr.rel (%p342) target = $region193
        $region190: #{tpu_custom_call.1} parent=185 // loop_body
          %v348 = vld [vmem:[%s346] sm:%s339]
          %349 = vst [vmem:[%s347] sm:%s339] %v348
        $region191: #{tpu_custom_call.1} parent=185 // loop_footer
          %s345 = sadd.s32 1, %s341
        $region192: #{tpu_custom_call.1} parent=185 // loop_footer_branch
          %340 = sbr.rel target = $region188
        $region193: #{tpu_custom_call.1} parent=185 // loop_exit
          _
      $region186: #{tpu_custom_call.1} parent=170 // pred_fallthru
        _
    $region171: #{tpu_custom_call.1} parent=1 // pred_fallthru
      _
    // Predicated region
    $region172: #{tpu_custom_call.1} parent=1 // pred_check
      %p315 = pneg %p311
    $region173: #{tpu_custom_call.1} parent=1 // pred_check_branch
      %317 = sbr.rel (%p315) target = $region175
    $region174: #{tpu_custom_call.1} parent=1 // pred_region
      %s318 = sshllo.u32 0, 1
      loop: start=0, step=1, limit=1
      $region176: #{tpu_custom_call.1} parent=174 // loop_pre_header
        _
      $region177: #{tpu_custom_call.1} parent=174 // loop_header
        %s320 = sphi 0, %s324
        %p321 = scmp.ge.s32.totalorder %s320, 1
        %s325 = sphi %s309, %s309
        %s326 = sphi [#allocation2], [#allocation2]
      $region178: #{tpu_custom_call.1} parent=174 // loop_header_branch
        %323 = sbr.rel (%p321) target = $region182
      $region179: #{tpu_custom_call.1} parent=174 // loop_body
        %v327 = vld [vmem:[%s325] sm:%s318]
        %328 = vst [vmem:[%s326] sm:%s318] %v327
      $region180: #{tpu_custom_call.1} parent=174 // loop_footer
        %s324 = sadd.s32 1, %s320
      $region181: #{tpu_custom_call.1} parent=174 // loop_footer_branch
        %319 = sbr.rel target = $region177
      $region182: #{tpu_custom_call.1} parent=174 // loop_exit
        _
    $region175: #{tpu_custom_call.1} parent=1 // pred_fallthru
      _
    // Predicated region
    $region194: #{tpu_custom_call.1} parent=1 // pred_check
      _
    $region195: #{tpu_custom_call.1} parent=1 // pred_check_branch
      %352 = sbr.rel (0) target = $region197
    $region196: #{tpu_custom_call.1} parent=1 // pred_region
      %353 = vsyncadd [#allocation3], 16
    $region197: #{tpu_custom_call.1} parent=1 // pred_fallthru
      _
    loop: start=0, step=1, limit=16
    $region198: #{tpu_custom_call.1} parent=1 // loop_pre_header
      _
    $region199: #{tpu_custom_call.1} parent=1 // loop_header
      %s355 = sphi 0, %s359
      %p356 = scmp.ge.s32.totalorder %s355, 16
    $region200: #{tpu_custom_call.1} parent=1 // loop_header_branch
      %358 = sbr.rel (%p356) target = $region204
    $region201: #{tpu_custom_call.1} parent=1 // loop_body
      %s360 = sand.u32 %s355, 1
      %s361 = scalar_lea.sflag [#allocation3], %s360
      %363 = dma.done %s361, 16
      %s364 = sadd.s32 %s355, 1
      %p365 = scmp.lt.s32.totalorder %s364, 16
      // Predicated region
      $region205: #{tpu_custom_call.1} parent=201 // pred_check
        %p366 = pneg %p365
      $region206: #{tpu_custom_call.1} parent=201 // pred_check_branch
        %368 = sbr.rel (%p366) target = $region208
      $region207: #{tpu_custom_call.1} parent=201 // pred_region
        %s369 = sshra.s32 %s364, 7
        %s370 = sand.u32 %s364, 127
        %s371 = sadd.s32 %s369, %s306
        %s372 = smul.u32 %s371, 128
        %s373 = sshra.s32 %s364, 7
        %s374 = sand.u32 %s364, 127
        %s375 = sadd.s32 %s372, %s374
        %s376 = sld [smem:[#allocation6 + %s375]]
        %s377 = ssub.s32 1, %s360
        %s378 = scalar_lea.vmem %s1, %s376
        %s379 = scalar_lea.vmem [#allocation2], %s377
        %s380 = scalar_lea.sflag [#allocation3], %s377
        %p382 = scmp.lt.u32.totalorder 1, 8
        %p383 = pneg %p382
        // Predicated region
        $region209: #{tpu_custom_call.1} parent=207 // pred_check
          _
        $region210: #{tpu_custom_call.1} parent=207 // pred_check_branch
          %385 = sbr.rel (%p382) target = $region212
        $region211: #{tpu_custom_call.1} parent=207 // pred_region
          %s400 = sand.u32 1, 7
          %p401 = scmp.eq.s32.totalorder %s400, 0
          %p402 = pneg %p401
          // Predicated region
          $region224: #{tpu_custom_call.1} parent=211 // pred_check
            _
          $region225: #{tpu_custom_call.1} parent=211 // pred_check_branch
            %404 = sbr.rel (%p401) target = $region227
          $region226: #{tpu_custom_call.1} parent=211 // pred_region
            %s405 = sand.u32 1, 7
            %s406 = ssub.s32 1, %s405
            %s407 = scalar_lea.vmem %s378, %s406
            %s408 = ssub.s32 1, %s405
            %s409 = scalar_lea.vmem %s379, %s408 [#allocation2]
            %s410 = sshllo.u32 0, %s405
            loop: start=0, step=1, limit=1
            $region228: #{tpu_custom_call.1} parent=226 // loop_pre_header
              _
            $region229: #{tpu_custom_call.1} parent=226 // loop_header
              %s412 = sphi 0, %s416
              %p413 = scmp.ge.s32.totalorder %s412, 1
              %s417 = sphi %s407, %s407
              %s418 = sphi %s409, %s409
            $region230: #{tpu_custom_call.1} parent=226 // loop_header_branch
              %415 = sbr.rel (%p413) target = $region234
            $region231: #{tpu_custom_call.1} parent=226 // loop_body
              %v419 = vld [vmem:[%s417] sm:%s410]
              %420 = vst [vmem:[%s418] sm:%s410] %v419
            $region232: #{tpu_custom_call.1} parent=226 // loop_footer
              %s416 = sadd.s32 1, %s412
            $region233: #{tpu_custom_call.1} parent=226 // loop_footer_branch
              %411 = sbr.rel target = $region229
            $region234: #{tpu_custom_call.1} parent=226 // loop_exit
              _
          $region227: #{tpu_custom_call.1} parent=211 // pred_fallthru
            _
        $region212: #{tpu_custom_call.1} parent=207 // pred_fallthru
          _
        // Predicated region
        $region213: #{tpu_custom_call.1} parent=207 // pred_check
          %p386 = pneg %p382
        $region214: #{tpu_custom_call.1} parent=207 // pred_check_branch
          %388 = sbr.rel (%p386) target = $region216
        $region215: #{tpu_custom_call.1} parent=207 // pred_region
          %s389 = sshllo.u32 0, 1
          loop: start=0, step=1, limit=1
          $region217: #{tpu_custom_call.1} parent=215 // loop_pre_header
            _
          $region218: #{tpu_custom_call.1} parent=215 // loop_header
            %s391 = sphi 0, %s395
            %p392 = scmp.ge.s32.totalorder %s391, 1
            %s396 = sphi %s378, %s378
            %s397 = sphi %s379, %s379
          $region219: #{tpu_custom_call.1} parent=215 // loop_header_branch
            %394 = sbr.rel (%p392) target = $region223
          $region220: #{tpu_custom_call.1} parent=215 // loop_body
            %v398 = vld [vmem:[%s396] sm:%s389]
            %399 = vst [vmem:[%s397] sm:%s389] %v398
          $region221: #{tpu_custom_call.1} parent=215 // loop_footer
            %s395 = sadd.s32 1, %s391
          $region222: #{tpu_custom_call.1} parent=215 // loop_footer_branch
            %390 = sbr.rel target = $region218
          $region223: #{tpu_custom_call.1} parent=215 // loop_exit
            _
        $region216: #{tpu_custom_call.1} parent=207 // pred_fallthru
          _
        // Predicated region
        $region235: #{tpu_custom_call.1} parent=207 // pred_check
          _
        $region236: #{tpu_custom_call.1} parent=207 // pred_check_branch
          %423 = sbr.rel (0) target = $region238
        $region237: #{tpu_custom_call.1} parent=207 // pred_region
          %424 = vsyncadd %s380, 16
        $region238: #{tpu_custom_call.1} parent=207 // pred_fallthru
          _
      $region208: #{tpu_custom_call.1} parent=201 // pred_fallthru
        _
      %v425 = vld [vmem:[#allocation4 + $0x2] sm:$0x1]
      %s426 = scalar_lea.vmem [#allocation2], %s360
      %v427 = vld [vmem:[%s426] sm:$0x1]
      %v428 = vadd.f32 %v425, %v427
      %vm429 = vcmask 253952
      %430 = vst.msk [vmem:[#allocation4 + $0x2] sm:$0x1] %vm429, %v428
    $region202: #{tpu_custom_call.1} parent=1 // loop_footer
      %s359 = sadd.s32 1, %s355
    $region203: #{tpu_custom_call.1} parent=1 // loop_footer_branch
      %354 = sbr.rel target = $region199
    $region204: #{tpu_custom_call.1} parent=1 // loop_exit
      _
    %s431 = sadd.s32 %s56, 3
    %s432 = smul.u32 %s431, 128
    %s433 = sld [smem:[#allocation6 + %s432]]
    %s434 = scalar_lea.vmem %s1, %s433
    %p436 = scmp.lt.u32.totalorder 1, 8
    %p437 = pneg %p436
    // Predicated region
    $region239: #{tpu_custom_call.1} parent=1 // pred_check
      _
    $region240: #{tpu_custom_call.1} parent=1 // pred_check_branch
      %439 = sbr.rel (%p436) target = $region242
    $region241: #{tpu_custom_call.1} parent=1 // pred_region
      %s454 = sand.u32 1, 7
      %p455 = scmp.eq.s32.totalorder %s454, 0
      %p456 = pneg %p455
      // Predicated region
      $region254: #{tpu_custom_call.1} parent=241 // pred_check
        _
      $region255: #{tpu_custom_call.1} parent=241 // pred_check_branch
        %458 = sbr.rel (%p455) target = $region257
      $region256: #{tpu_custom_call.1} parent=241 // pred_region
        %s459 = sand.u32 1, 7
        %s460 = ssub.s32 1, %s459
        %s461 = scalar_lea.vmem %s434, %s460
        %s462 = ssub.s32 1, %s459
        %s463 = scalar_lea.vmem [#allocation2], %s462
        %s464 = sshllo.u32 0, %s459
        loop: start=0, step=1, limit=1
        $region258: #{tpu_custom_call.1} parent=256 // loop_pre_header
          _
        $region259: #{tpu_custom_call.1} parent=256 // loop_header
          %s466 = sphi 0, %s470
          %p467 = scmp.ge.s32.totalorder %s466, 1
          %s471 = sphi %s461, %s461
          %s472 = sphi %s463, %s463
        $region260: #{tpu_custom_call.1} parent=256 // loop_header_branch
          %469 = sbr.rel (%p467) target = $region264
        $region261: #{tpu_custom_call.1} parent=256 // loop_body
          %v473 = vld [vmem:[%s471] sm:%s464]
          %474 = vst [vmem:[%s472] sm:%s464] %v473
        $region262: #{tpu_custom_call.1} parent=256 // loop_footer
          %s470 = sadd.s32 1, %s466
        $region263: #{tpu_custom_call.1} parent=256 // loop_footer_branch
          %465 = sbr.rel target = $region259
        $region264: #{tpu_custom_call.1} parent=256 // loop_exit
          _
      $region257: #{tpu_custom_call.1} parent=241 // pred_fallthru
        _
    $region242: #{tpu_custom_call.1} parent=1 // pred_fallthru
      _
    // Predicated region
    $region243: #{tpu_custom_call.1} parent=1 // pred_check
      %p440 = pneg %p436
    $region244: #{tpu_custom_call.1} parent=1 // pred_check_branch
      %442 = sbr.rel (%p440) target = $region246
    $region245: #{tpu_custom_call.1} parent=1 // pred_region
      %s443 = sshllo.u32 0, 1
      loop: start=0, step=1, limit=1
      $region247: #{tpu_custom_call.1} parent=245 // loop_pre_header
        _
      $region248: #{tpu_custom_call.1} parent=245 // loop_header
        %s445 = sphi 0, %s449
        %p446 = scmp.ge.s32.totalorder %s445, 1
        %s450 = sphi %s434, %s434
        %s451 = sphi [#allocation2], [#allocation2]
      $region249: #{tpu_custom_call.1} parent=245 // loop_header_branch
        %448 = sbr.rel (%p446) target = $region253
      $region250: #{tpu_custom_call.1} parent=245 // loop_body
        %v452 = vld [vmem:[%s450] sm:%s443]
        %453 = vst [vmem:[%s451] sm:%s443] %v452
      $region251: #{tpu_custom_call.1} parent=245 // loop_footer
        %s449 = sadd.s32 1, %s445
      $region252: #{tpu_custom_call.1} parent=245 // loop_footer_branch
        %444 = sbr.rel target = $region248
      $region253: #{tpu_custom_call.1} parent=245 // loop_exit
        _
    $region246: #{tpu_custom_call.1} parent=1 // pred_fallthru
      _
    // Predicated region
    $region265: #{tpu_custom_call.1} parent=1 // pred_check
      _
    $region266: #{tpu_custom_call.1} parent=1 // pred_check_branch
      %477 = sbr.rel (0) target = $region268
    $region267: #{tpu_custom_call.1} parent=1 // pred_region
      %478 = vsyncadd [#allocation3], 16
    $region268: #{tpu_custom_call.1} parent=1 // pred_fallthru
      _
    loop: start=0, step=1, limit=16
    $region269: #{tpu_custom_call.1} parent=1 // loop_pre_header
      _
    $region270: #{tpu_custom_call.1} parent=1 // loop_header
      %s480 = sphi 0, %s484
      %p481 = scmp.ge.s32.totalorder %s480, 16
    $region271: #{tpu_custom_call.1} parent=1 // loop_header_branch
      %483 = sbr.rel (%p481) target = $region275
    $region272: #{tpu_custom_call.1} parent=1 // loop_body
      %s485 = sand.u32 %s480, 1
      %s486 = scalar_lea.sflag [#allocation3], %s485
      %488 = dma.done %s486, 16
      %s489 = sadd.s32 %s480, 1
      %p490 = scmp.lt.s32.totalorder %s489, 16
      // Predicated region
      $region276: #{tpu_custom_call.1} parent=272 // pred_check
        %p491 = pneg %p490
      $region277: #{tpu_custom_call.1} parent=272 // pred_check_branch
        %493 = sbr.rel (%p491) target = $region279
      $region278: #{tpu_custom_call.1} parent=272 // pred_region
        %s494 = sshra.s32 %s489, 7
        %s495 = sand.u32 %s489, 127
        %s496 = sadd.s32 %s494, %s431
        %s497 = smul.u32 %s496, 128
        %s498 = sshra.s32 %s489, 7
        %s499 = sand.u32 %s489, 127
        %s500 = sadd.s32 %s497, %s499
        %s501 = sld [smem:[#allocation6 + %s500]]
        %s502 = ssub.s32 1, %s485
        %s503 = scalar_lea.vmem %s1, %s501
        %s504 = scalar_lea.vmem [#allocation2], %s502
        %s505 = scalar_lea.sflag [#allocation3], %s502
        %p507 = scmp.lt.u32.totalorder 1, 8
        %p508 = pneg %p507
        // Predicated region
        $region280: #{tpu_custom_call.1} parent=278 // pred_check
          _
        $region281: #{tpu_custom_call.1} parent=278 // pred_check_branch
          %510 = sbr.rel (%p507) target = $region283
        $region282: #{tpu_custom_call.1} parent=278 // pred_region
          %s525 = sand.u32 1, 7
          %p526 = scmp.eq.s32.totalorder %s525, 0
          %p527 = pneg %p526
          // Predicated region
          $region295: #{tpu_custom_call.1} parent=282 // pred_check
            _
          $region296: #{tpu_custom_call.1} parent=282 // pred_check_branch
            %529 = sbr.rel (%p526) target = $region298
          $region297: #{tpu_custom_call.1} parent=282 // pred_region
            %s530 = sand.u32 1, 7
            %s531 = ssub.s32 1, %s530
            %s532 = scalar_lea.vmem %s503, %s531
            %s533 = ssub.s32 1, %s530
            %s534 = scalar_lea.vmem %s504, %s533 [#allocation2]
            %s535 = sshllo.u32 0, %s530
            loop: start=0, step=1, limit=1
            $region299: #{tpu_custom_call.1} parent=297 // loop_pre_header
              _
            $region300: #{tpu_custom_call.1} parent=297 // loop_header
              %s537 = sphi 0, %s541
              %p538 = scmp.ge.s32.totalorder %s537, 1
              %s542 = sphi %s532, %s532
              %s543 = sphi %s534, %s534
            $region301: #{tpu_custom_call.1} parent=297 // loop_header_branch
              %540 = sbr.rel (%p538) target = $region305
            $region302: #{tpu_custom_call.1} parent=297 // loop_body
              %v544 = vld [vmem:[%s542] sm:%s535]
              %545 = vst [vmem:[%s543] sm:%s535] %v544
            $region303: #{tpu_custom_call.1} parent=297 // loop_footer
              %s541 = sadd.s32 1, %s537
            $region304: #{tpu_custom_call.1} parent=297 // loop_footer_branch
              %536 = sbr.rel target = $region300
            $region305: #{tpu_custom_call.1} parent=297 // loop_exit
              _
          $region298: #{tpu_custom_call.1} parent=282 // pred_fallthru
            _
        $region283: #{tpu_custom_call.1} parent=278 // pred_fallthru
          _
        // Predicated region
        $region284: #{tpu_custom_call.1} parent=278 // pred_check
          %p511 = pneg %p507
        $region285: #{tpu_custom_call.1} parent=278 // pred_check_branch
          %513 = sbr.rel (%p511) target = $region287
        $region286: #{tpu_custom_call.1} parent=278 // pred_region
          %s514 = sshllo.u32 0, 1
          loop: start=0, step=1, limit=1
          $region288: #{tpu_custom_call.1} parent=286 // loop_pre_header
            _
          $region289: #{tpu_custom_call.1} parent=286 // loop_header
            %s516 = sphi 0, %s520
            %p517 = scmp.ge.s32.totalorder %s516, 1
            %s521 = sphi %s503, %s503
            %s522 = sphi %s504, %s504
          $region290: #{tpu_custom_call.1} parent=286 // loop_header_branch
            %519 = sbr.rel (%p517) target = $region294
          $region291: #{tpu_custom_call.1} parent=286 // loop_body
            %v523 = vld [vmem:[%s521] sm:%s514]
            %524 = vst [vmem:[%s522] sm:%s514] %v523
          $region292: #{tpu_custom_call.1} parent=286 // loop_footer
            %s520 = sadd.s32 1, %s516
          $region293: #{tpu_custom_call.1} parent=286 // loop_footer_branch
            %515 = sbr.rel target = $region289
          $region294: #{tpu_custom_call.1} parent=286 // loop_exit
            _
        $region287: #{tpu_custom_call.1} parent=278 // pred_fallthru
          _
        // Predicated region
        $region306: #{tpu_custom_call.1} parent=278 // pred_check
          _
        $region307: #{tpu_custom_call.1} parent=278 // pred_check_branch
          %548 = sbr.rel (0) target = $region309
        $region308: #{tpu_custom_call.1} parent=278 // pred_region
          %549 = vsyncadd %s505, 16
        $region309: #{tpu_custom_call.1} parent=278 // pred_fallthru
          _
      $region279: #{tpu_custom_call.1} parent=272 // pred_fallthru
        _
      %v550 = vld [vmem:[#allocation4 + $0x3] sm:$0x1]
      %s551 = scalar_lea.vmem [#allocation2], %s485
      %v552 = vld [vmem:[%s551] sm:$0x1]
      %v553 = vadd.f32 %v550, %v552
      %vm554 = vcmask 253952
      %555 = vst.msk [vmem:[#allocation4 + $0x3] sm:$0x1] %vm554, %v553
    $region273: #{tpu_custom_call.1} parent=1 // loop_footer
      %s484 = sadd.s32 1, %s480
    $region274: #{tpu_custom_call.1} parent=1 // loop_footer_branch
      %479 = sbr.rel target = $region270
    $region275: #{tpu_custom_call.1} parent=1 // loop_exit
      _
    %s556 = sadd.s32 %s56, 4
    %s557 = smul.u32 %s556, 128
    %s558 = sld [smem:[#allocation6 + %s557]]
    %s559 = scalar_lea.vmem %s1, %s558
    %p561 = scmp.lt.u32.totalorder 1, 8
    %p562 = pneg %p561
    // Predicated region
    $region310: #{tpu_custom_call.1} parent=1 // pred_check
      _
    $region311: #{tpu_custom_call.1} parent=1 // pred_check_branch
      %564 = sbr.rel (%p561) target = $region313
    $region312: #{tpu_custom_call.1} parent=1 // pred_region
      %s579 = sand.u32 1, 7
      %p580 = scmp.eq.s32.totalorder %s579, 0
      %p581 = pneg %p580
      // Predicated region
      $region325: #{tpu_custom_call.1} parent=312 // pred_check
        _
      $region326: #{tpu_custom_call.1} parent=312 // pred_check_branch
        %583 = sbr.rel (%p580) target = $region328
      $region327: #{tpu_custom_call.1} parent=312 // pred_region
        %s584 = sand.u32 1, 7
        %s585 = ssub.s32 1, %s584
        %s586 = scalar_lea.vmem %s559, %s585
        %s587 = ssub.s32 1, %s584
        %s588 = scalar_lea.vmem [#allocation2], %s587
        %s589 = sshllo.u32 0, %s584
        loop: start=0, step=1, limit=1
        $region329: #{tpu_custom_call.1} parent=327 // loop_pre_header
          _
        $region330: #{tpu_custom_call.1} parent=327 // loop_header
          %s591 = sphi 0, %s595
          %p592 = scmp.ge.s32.totalorder %s591, 1
          %s596 = sphi %s586, %s586
          %s597 = sphi %s588, %s588
        $region331: #{tpu_custom_call.1} parent=327 // loop_header_branch
          %594 = sbr.rel (%p592) target = $region335
        $region332: #{tpu_custom_call.1} parent=327 // loop_body
          %v598 = vld [vmem:[%s596] sm:%s589]
          %599 = vst [vmem:[%s597] sm:%s589] %v598
        $region333: #{tpu_custom_call.1} parent=327 // loop_footer
          %s595 = sadd.s32 1, %s591
        $region334: #{tpu_custom_call.1} parent=327 // loop_footer_branch
          %590 = sbr.rel target = $region330
        $region335: #{tpu_custom_call.1} parent=327 // loop_exit
          _
      $region328: #{tpu_custom_call.1} parent=312 // pred_fallthru
        _
    $region313: #{tpu_custom_call.1} parent=1 // pred_fallthru
      _
    // Predicated region
    $region314: #{tpu_custom_call.1} parent=1 // pred_check
      %p565 = pneg %p561
    $region315: #{tpu_custom_call.1} parent=1 // pred_check_branch
      %567 = sbr.rel (%p565) target = $region317
    $region316: #{tpu_custom_call.1} parent=1 // pred_region
      %s568 = sshllo.u32 0, 1
      loop: start=0, step=1, limit=1
      $region318: #{tpu_custom_call.1} parent=316 // loop_pre_header
        _
      $region319: #{tpu_custom_call.1} parent=316 // loop_header
        %s570 = sphi 0, %s574
        %p571 = scmp.ge.s32.totalorder %s570, 1
        %s575 = sphi %s559, %s559
        %s576 = sphi [#allocation2], [#allocation2]
      $region320: #{tpu_custom_call.1} parent=316 // loop_header_branch
        %573 = sbr.rel (%p571) target = $region324
      $region321: #{tpu_custom_call.1} parent=316 // loop_body
        %v577 = vld [vmem:[%s575] sm:%s568]
        %578 = vst [vmem:[%s576] sm:%s568] %v577
      $region322: #{tpu_custom_call.1} parent=316 // loop_footer
        %s574 = sadd.s32 1, %s570
      $region323: #{tpu_custom_call.1} parent=316 // loop_footer_branch
        %569 = sbr.rel target = $region319
      $region324: #{tpu_custom_call.1} parent=316 // loop_exit
        _
    $region317: #{tpu_custom_call.1} parent=1 // pred_fallthru
      _
    // Predicated region
    $region336: #{tpu_custom_call.1} parent=1 // pred_check
      _
    $region337: #{tpu_custom_call.1} parent=1 // pred_check_branch
      %602 = sbr.rel (0) target = $region339
    $region338: #{tpu_custom_call.1} parent=1 // pred_region
      %603 = vsyncadd [#allocation3], 16
    $region339: #{tpu_custom_call.1} parent=1 // pred_fallthru
      _
    loop: start=0, step=1, limit=16
    $region340: #{tpu_custom_call.1} parent=1 // loop_pre_header
      _
    $region341: #{tpu_custom_call.1} parent=1 // loop_header
      %s605 = sphi 0, %s609
      %p606 = scmp.ge.s32.totalorder %s605, 16
    $region342: #{tpu_custom_call.1} parent=1 // loop_header_branch
      %608 = sbr.rel (%p606) target = $region346
    $region343: #{tpu_custom_call.1} parent=1 // loop_body
      %s610 = sand.u32 %s605, 1
      %s611 = scalar_lea.sflag [#allocation3], %s610
      %613 = dma.done %s611, 16
      %s614 = sadd.s32 %s605, 1
      %p615 = scmp.lt.s32.totalorder %s614, 16
      // Predicated region
      $region347: #{tpu_custom_call.1} parent=343 // pred_check
        %p616 = pneg %p615
      $region348: #{tpu_custom_call.1} parent=343 // pred_check_branch
        %618 = sbr.rel (%p616) target = $region350
      $region349: #{tpu_custom_call.1} parent=343 // pred_region
        %s619 = sshra.s32 %s614, 7
        %s620 = sand.u32 %s614, 127
        %s621 = sadd.s32 %s619, %s556
        %s622 = smul.u32 %s621, 128
        %s623 = sshra.s32 %s614, 7
        %s624 = sand.u32 %s614, 127
        %s625 = sadd.s32 %s622, %s624
        %s626 = sld [smem:[#allocation6 + %s625]]
        %s627 = ssub.s32 1, %s610
        %s628 = scalar_lea.vmem %s1, %s626
        %s629 = scalar_lea.vmem [#allocation2], %s627
        %s630 = scalar_lea.sflag [#allocation3], %s627
        %p632 = scmp.lt.u32.totalorder 1, 8
        %p633 = pneg %p632
        // Predicated region
        $region351: #{tpu_custom_call.1} parent=349 // pred_check
          _
        $region352: #{tpu_custom_call.1} parent=349 // pred_check_branch
          %635 = sbr.rel (%p632) target = $region354
        $region353: #{tpu_custom_call.1} parent=349 // pred_region
          %s650 = sand.u32 1, 7
          %p651 = scmp.eq.s32.totalorder %s650, 0
          %p652 = pneg %p651
          // Predicated region
          $region366: #{tpu_custom_call.1} parent=353 // pred_check
            _
          $region367: #{tpu_custom_call.1} parent=353 // pred_check_branch
            %654 = sbr.rel (%p651) target = $region369
          $region368: #{tpu_custom_call.1} parent=353 // pred_region
            %s655 = sand.u32 1, 7
            %s656 = ssub.s32 1, %s655
            %s657 = scalar_lea.vmem %s628, %s656
            %s658 = ssub.s32 1, %s655
            %s659 = scalar_lea.vmem %s629, %s658 [#allocation2]
            %s660 = sshllo.u32 0, %s655
            loop: start=0, step=1, limit=1
            $region370: #{tpu_custom_call.1} parent=368 // loop_pre_header
              _
            $region371: #{tpu_custom_call.1} parent=368 // loop_header
              %s662 = sphi 0, %s666
              %p663 = scmp.ge.s32.totalorder %s662, 1
              %s667 = sphi %s657, %s657
              %s668 = sphi %s659, %s659
            $region372: #{tpu_custom_call.1} parent=368 // loop_header_branch
              %665 = sbr.rel (%p663) target = $region376
            $region373: #{tpu_custom_call.1} parent=368 // loop_body
              %v669 = vld [vmem:[%s667] sm:%s660]
              %670 = vst [vmem:[%s668] sm:%s660] %v669
            $region374: #{tpu_custom_call.1} parent=368 // loop_footer
              %s666 = sadd.s32 1, %s662
            $region375: #{tpu_custom_call.1} parent=368 // loop_footer_branch
              %661 = sbr.rel target = $region371
            $region376: #{tpu_custom_call.1} parent=368 // loop_exit
              _
          $region369: #{tpu_custom_call.1} parent=353 // pred_fallthru
            _
        $region354: #{tpu_custom_call.1} parent=349 // pred_fallthru
          _
        // Predicated region
        $region355: #{tpu_custom_call.1} parent=349 // pred_check
          %p636 = pneg %p632
        $region356: #{tpu_custom_call.1} parent=349 // pred_check_branch
          %638 = sbr.rel (%p636) target = $region358
        $region357: #{tpu_custom_call.1} parent=349 // pred_region
          %s639 = sshllo.u32 0, 1
          loop: start=0, step=1, limit=1
          $region359: #{tpu_custom_call.1} parent=357 // loop_pre_header
            _
          $region360: #{tpu_custom_call.1} parent=357 // loop_header
            %s641 = sphi 0, %s645
            %p642 = scmp.ge.s32.totalorder %s641, 1
            %s646 = sphi %s628, %s628
            %s647 = sphi %s629, %s629
          $region361: #{tpu_custom_call.1} parent=357 // loop_header_branch
            %644 = sbr.rel (%p642) target = $region365
          $region362: #{tpu_custom_call.1} parent=357 // loop_body
            %v648 = vld [vmem:[%s646] sm:%s639]
            %649 = vst [vmem:[%s647] sm:%s639] %v648
          $region363: #{tpu_custom_call.1} parent=357 // loop_footer
            %s645 = sadd.s32 1, %s641
          $region364: #{tpu_custom_call.1} parent=357 // loop_footer_branch
            %640 = sbr.rel target = $region360
          $region365: #{tpu_custom_call.1} parent=357 // loop_exit
            _
        $region358: #{tpu_custom_call.1} parent=349 // pred_fallthru
          _
        // Predicated region
        $region377: #{tpu_custom_call.1} parent=349 // pred_check
          _
        $region378: #{tpu_custom_call.1} parent=349 // pred_check_branch
          %673 = sbr.rel (0) target = $region380
        $region379: #{tpu_custom_call.1} parent=349 // pred_region
          %674 = vsyncadd %s630, 16
        $region380: #{tpu_custom_call.1} parent=349 // pred_fallthru
          _
      $region350: #{tpu_custom_call.1} parent=343 // pred_fallthru
        _
      %v675 = vld [vmem:[#allocation4 + $0x4] sm:$0x1]
      %s676 = scalar_lea.vmem [#allocation2], %s610
      %v677 = vld [vmem:[%s676] sm:$0x1]
      %v678 = vadd.f32 %v675, %v677
      %vm679 = vcmask 253952
      %680 = vst.msk [vmem:[#allocation4 + $0x4] sm:$0x1] %vm679, %v678
    $region344: #{tpu_custom_call.1} parent=1 // loop_footer
      %s609 = sadd.s32 1, %s605
    $region345: #{tpu_custom_call.1} parent=1 // loop_footer_branch
      %604 = sbr.rel target = $region341
    $region346: #{tpu_custom_call.1} parent=1 // loop_exit
      _
    %s681 = sadd.s32 %s56, 5
    %s682 = smul.u32 %s681, 128
    %s683 = sld [smem:[#allocation6 + %s682]]
    %s684 = scalar_lea.vmem %s1, %s683
    %p686 = scmp.lt.u32.totalorder 1, 8
    %p687 = pneg %p686
    // Predicated region
    $region381: #{tpu_custom_call.1} parent=1 // pred_check
      _
    $region382: #{tpu_custom_call.1} parent=1 // pred_check_branch
      %689 = sbr.rel (%p686) target = $region384
    $region383: #{tpu_custom_call.1} parent=1 // pred_region
      %s704 = sand.u32 1, 7
      %p705 = scmp.eq.s32.totalorder %s704, 0
      %p706 = pneg %p705
      // Predicated region
      $region396: #{tpu_custom_call.1} parent=383 // pred_check
        _
      $region397: #{tpu_custom_call.1} parent=383 // pred_check_branch
        %708 = sbr.rel (%p705) target = $region399
      $region398: #{tpu_custom_call.1} parent=383 // pred_region
        %s709 = sand.u32 1, 7
        %s710 = ssub.s32 1, %s709
        %s711 = scalar_lea.vmem %s684, %s710
        %s712 = ssub.s32 1, %s709
        %s713 = scalar_lea.vmem [#allocation2], %s712
        %s714 = sshllo.u32 0, %s709
        loop: start=0, step=1, limit=1
        $region400: #{tpu_custom_call.1} parent=398 // loop_pre_header
          _
        $region401: #{tpu_custom_call.1} parent=398 // loop_header
          %s716 = sphi 0, %s720
          %p717 = scmp.ge.s32.totalorder %s716, 1
          %s721 = sphi %s711, %s711
          %s722 = sphi %s713, %s713
        $region402: #{tpu_custom_call.1} parent=398 // loop_header_branch
          %719 = sbr.rel (%p717) target = $region406
        $region403: #{tpu_custom_call.1} parent=398 // loop_body
          %v723 = vld [vmem:[%s721] sm:%s714]
          %724 = vst [vmem:[%s722] sm:%s714] %v723
        $region404: #{tpu_custom_call.1} parent=398 // loop_footer
          %s720 = sadd.s32 1, %s716
        $region405: #{tpu_custom_call.1} parent=398 // loop_footer_branch
          %715 = sbr.rel target = $region401
        $region406: #{tpu_custom_call.1} parent=398 // loop_exit
          _
      $region399: #{tpu_custom_call.1} parent=383 // pred_fallthru
        _
    $region384: #{tpu_custom_call.1} parent=1 // pred_fallthru
      _
    // Predicated region
    $region385: #{tpu_custom_call.1} parent=1 // pred_check
      %p690 = pneg %p686
    $region386: #{tpu_custom_call.1} parent=1 // pred_check_branch
      %692 = sbr.rel (%p690) target = $region388
    $region387: #{tpu_custom_call.1} parent=1 // pred_region
      %s693 = sshllo.u32 0, 1
      loop: start=0, step=1, limit=1
      $region389: #{tpu_custom_call.1} parent=387 // loop_pre_header
        _
      $region390: #{tpu_custom_call.1} parent=387 // loop_header
        %s695 = sphi 0, %s699
        %p696 = scmp.ge.s32.totalorder %s695, 1
        %s700 = sphi %s684, %s684
        %s701 = sphi [#allocation2], [#allocation2]
      $region391: #{tpu_custom_call.1} parent=387 // loop_header_branch
        %698 = sbr.rel (%p696) target = $region395
      $region392: #{tpu_custom_call.1} parent=387 // loop_body
        %v702 = vld [vmem:[%s700] sm:%s693]
        %703 = vst [vmem:[%s701] sm:%s693] %v702
      $region393: #{tpu_custom_call.1} parent=387 // loop_footer
        %s699 = sadd.s32 1, %s695
      $region394: #{tpu_custom_call.1} parent=387 // loop_footer_branch
        %694 = sbr.rel target = $region390
      $region395: #{tpu_custom_call.1} parent=387 // loop_exit
        _
    $region388: #{tpu_custom_call.1} parent=1 // pred_fallthru
      _
    // Predicated region
    $region407: #{tpu_custom_call.1} parent=1 // pred_check
      _
    $region408: #{tpu_custom_call.1} parent=1 // pred_check_branch
      %727 = sbr.rel (0) target = $region410
    $region409: #{tpu_custom_call.1} parent=1 // pred_region
      %728 = vsyncadd [#allocation3], 16
    $region410: #{tpu_custom_call.1} parent=1 // pred_fallthru
      _
    loop: start=0, step=1, limit=16
    $region411: #{tpu_custom_call.1} parent=1 // loop_pre_header
      _
    $region412: #{tpu_custom_call.1} parent=1 // loop_header
      %s730 = sphi 0, %s734
      %p731 = scmp.ge.s32.totalorder %s730, 16
    $region413: #{tpu_custom_call.1} parent=1 // loop_header_branch
      %733 = sbr.rel (%p731) target = $region417
    $region414: #{tpu_custom_call.1} parent=1 // loop_body
      %s735 = sand.u32 %s730, 1
      %s736 = scalar_lea.sflag [#allocation3], %s735
      %738 = dma.done %s736, 16
      %s739 = sadd.s32 %s730, 1
      %p740 = scmp.lt.s32.totalorder %s739, 16
      // Predicated region
      $region418: #{tpu_custom_call.1} parent=414 // pred_check
        %p741 = pneg %p740
      $region419: #{tpu_custom_call.1} parent=414 // pred_check_branch
        %743 = sbr.rel (%p741) target = $region421
      $region420: #{tpu_custom_call.1} parent=414 // pred_region
        %s744 = sshra.s32 %s739, 7
        %s745 = sand.u32 %s739, 127
        %s746 = sadd.s32 %s744, %s681
        %s747 = smul.u32 %s746, 128
        %s748 = sshra.s32 %s739, 7
        %s749 = sand.u32 %s739, 127
        %s750 = sadd.s32 %s747, %s749
        %s751 = sld [smem:[#allocation6 + %s750]]
        %s752 = ssub.s32 1, %s735
        %s753 = scalar_lea.vmem %s1, %s751
        %s754 = scalar_lea.vmem [#allocation2], %s752
        %s755 = scalar_lea.sflag [#allocation3], %s752
        %p757 = scmp.lt.u32.totalorder 1, 8
        %p758 = pneg %p757
        // Predicated region
        $region422: #{tpu_custom_call.1} parent=420 // pred_check
          _
        $region423: #{tpu_custom_call.1} parent=420 // pred_check_branch
          %760 = sbr.rel (%p757) target = $region425
        $region424: #{tpu_custom_call.1} parent=420 // pred_region
          %s775 = sand.u32 1, 7
          %p776 = scmp.eq.s32.totalorder %s775, 0
          %p777 = pneg %p776
          // Predicated region
          $region437: #{tpu_custom_call.1} parent=424 // pred_check
            _
          $region438: #{tpu_custom_call.1} parent=424 // pred_check_branch
            %779 = sbr.rel (%p776) target = $region440
          $region439: #{tpu_custom_call.1} parent=424 // pred_region
            %s780 = sand.u32 1, 7
            %s781 = ssub.s32 1, %s780
            %s782 = scalar_lea.vmem %s753, %s781
            %s783 = ssub.s32 1, %s780
            %s784 = scalar_lea.vmem %s754, %s783 [#allocation2]
            %s785 = sshllo.u32 0, %s780
            loop: start=0, step=1, limit=1
            $region441: #{tpu_custom_call.1} parent=439 // loop_pre_header
              _
            $region442: #{tpu_custom_call.1} parent=439 // loop_header
              %s787 = sphi 0, %s791
              %p788 = scmp.ge.s32.totalorder %s787, 1
              %s792 = sphi %s782, %s782
              %s793 = sphi %s784, %s784
            $region443: #{tpu_custom_call.1} parent=439 // loop_header_branch
              %790 = sbr.rel (%p788) target = $region447
            $region444: #{tpu_custom_call.1} parent=439 // loop_body
              %v794 = vld [vmem:[%s792] sm:%s785]
              %795 = vst [vmem:[%s793] sm:%s785] %v794
            $region445: #{tpu_custom_call.1} parent=439 // loop_footer
              %s791 = sadd.s32 1, %s787
            $region446: #{tpu_custom_call.1} parent=439 // loop_footer_branch
              %786 = sbr.rel target = $region442
            $region447: #{tpu_custom_call.1} parent=439 // loop_exit
              _
          $region440: #{tpu_custom_call.1} parent=424 // pred_fallthru
            _
        $region425: #{tpu_custom_call.1} parent=420 // pred_fallthru
          _
        // Predicated region
        $region426: #{tpu_custom_call.1} parent=420 // pred_check
          %p761 = pneg %p757
        $region427: #{tpu_custom_call.1} parent=420 // pred_check_branch
          %763 = sbr.rel (%p761) target = $region429
        $region428: #{tpu_custom_call.1} parent=420 // pred_region
          %s764 = sshllo.u32 0, 1
          loop: start=0, step=1, limit=1
          $region430: #{tpu_custom_call.1} parent=428 // loop_pre_header
            _
          $region431: #{tpu_custom_call.1} parent=428 // loop_header
            %s766 = sphi 0, %s770
            %p767 = scmp.ge.s32.totalorder %s766, 1
            %s771 = sphi %s753, %s753
            %s772 = sphi %s754, %s754
          $region432: #{tpu_custom_call.1} parent=428 // loop_header_branch
            %769 = sbr.rel (%p767) target = $region436
          $region433: #{tpu_custom_call.1} parent=428 // loop_body
            %v773 = vld [vmem:[%s771] sm:%s764]
            %774 = vst [vmem:[%s772] sm:%s764] %v773
          $region434: #{tpu_custom_call.1} parent=428 // loop_footer
            %s770 = sadd.s32 1, %s766
          $region435: #{tpu_custom_call.1} parent=428 // loop_footer_branch
            %765 = sbr.rel target = $region431
          $region436: #{tpu_custom_call.1} parent=428 // loop_exit
            _
        $region429: #{tpu_custom_call.1} parent=420 // pred_fallthru
          _
        // Predicated region
        $region448: #{tpu_custom_call.1} parent=420 // pred_check
          _
        $region449: #{tpu_custom_call.1} parent=420 // pred_check_branch
          %798 = sbr.rel (0) target = $region451
        $region450: #{tpu_custom_call.1} parent=420 // pred_region
          %799 = vsyncadd %s755, 16
        $region451: #{tpu_custom_call.1} parent=420 // pred_fallthru
          _
      $region421: #{tpu_custom_call.1} parent=414 // pred_fallthru
        _
      %v800 = vld [vmem:[#allocation4 + $0x5] sm:$0x1]
      %s801 = scalar_lea.vmem [#allocation2], %s735
      %v802 = vld [vmem:[%s801] sm:$0x1]
      %v803 = vadd.f32 %v800, %v802
      %vm804 = vcmask 253952
      %805 = vst.msk [vmem:[#allocation4 + $0x5] sm:$0x1] %vm804, %v803
    $region415: #{tpu_custom_call.1} parent=1 // loop_footer
      %s734 = sadd.s32 1, %s730
    $region416: #{tpu_custom_call.1} parent=1 // loop_footer_branch
      %729 = sbr.rel target = $region412
    $region417: #{tpu_custom_call.1} parent=1 // loop_exit
      _
    %s806 = sadd.s32 %s56, 6
    %s807 = smul.u32 %s806, 128
    %s808 = sld [smem:[#allocation6 + %s807]]
    %s809 = scalar_lea.vmem %s1, %s808
    %p811 = scmp.lt.u32.totalorder 1, 8
    %p812 = pneg %p811
    // Predicated region
    $region452: #{tpu_custom_call.1} parent=1 // pred_check
      _
    $region453: #{tpu_custom_call.1} parent=1 // pred_check_branch
      %814 = sbr.rel (%p811) target = $region455
    $region454: #{tpu_custom_call.1} parent=1 // pred_region
      %s829 = sand.u32 1, 7
      %p830 = scmp.eq.s32.totalorder %s829, 0
      %p831 = pneg %p830
      // Predicated region
      $region467: #{tpu_custom_call.1} parent=454 // pred_check
        _
      $region468: #{tpu_custom_call.1} parent=454 // pred_check_branch
        %833 = sbr.rel (%p830) target = $region470
      $region469: #{tpu_custom_call.1} parent=454 // pred_region
        %s834 = sand.u32 1, 7
        %s835 = ssub.s32 1, %s834
        %s836 = scalar_lea.vmem %s809, %s835
        %s837 = ssub.s32 1, %s834
        %s838 = scalar_lea.vmem [#allocation2], %s837
        %s839 = sshllo.u32 0, %s834
        loop: start=0, step=1, limit=1
        $region471: #{tpu_custom_call.1} parent=469 // loop_pre_header
          _
        $region472: #{tpu_custom_call.1} parent=469 // loop_header
          %s841 = sphi 0, %s845
          %p842 = scmp.ge.s32.totalorder %s841, 1
          %s846 = sphi %s836, %s836
          %s847 = sphi %s838, %s838
        $region473: #{tpu_custom_call.1} parent=469 // loop_header_branch
          %844 = sbr.rel (%p842) target = $region477
        $region474: #{tpu_custom_call.1} parent=469 // loop_body
          %v848 = vld [vmem:[%s846] sm:%s839]
          %849 = vst [vmem:[%s847] sm:%s839] %v848
        $region475: #{tpu_custom_call.1} parent=469 // loop_footer
          %s845 = sadd.s32 1, %s841
        $region476: #{tpu_custom_call.1} parent=469 // loop_footer_branch
          %840 = sbr.rel target = $region472
        $region477: #{tpu_custom_call.1} parent=469 // loop_exit
          _
      $region470: #{tpu_custom_call.1} parent=454 // pred_fallthru
        _
    $region455: #{tpu_custom_call.1} parent=1 // pred_fallthru
      _
    // Predicated region
    $region456: #{tpu_custom_call.1} parent=1 // pred_check
      %p815 = pneg %p811
    $region457: #{tpu_custom_call.1} parent=1 // pred_check_branch
      %817 = sbr.rel (%p815) target = $region459
    $region458: #{tpu_custom_call.1} parent=1 // pred_region
      %s818 = sshllo.u32 0, 1
      loop: start=0, step=1, limit=1
      $region460: #{tpu_custom_call.1} parent=458 // loop_pre_header
        _
      $region461: #{tpu_custom_call.1} parent=458 // loop_header
        %s820 = sphi 0, %s824
        %p821 = scmp.ge.s32.totalorder %s820, 1
        %s825 = sphi %s809, %s809
        %s826 = sphi [#allocation2], [#allocation2]
      $region462: #{tpu_custom_call.1} parent=458 // loop_header_branch
        %823 = sbr.rel (%p821) target = $region466
      $region463: #{tpu_custom_call.1} parent=458 // loop_body
        %v827 = vld [vmem:[%s825] sm:%s818]
        %828 = vst [vmem:[%s826] sm:%s818] %v827
      $region464: #{tpu_custom_call.1} parent=458 // loop_footer
        %s824 = sadd.s32 1, %s820
      $region465: #{tpu_custom_call.1} parent=458 // loop_footer_branch
        %819 = sbr.rel target = $region461
      $region466: #{tpu_custom_call.1} parent=458 // loop_exit
        _
    $region459: #{tpu_custom_call.1} parent=1 // pred_fallthru
      _
    // Predicated region
    $region478: #{tpu_custom_call.1} parent=1 // pred_check
      _
    $region479: #{tpu_custom_call.1} parent=1 // pred_check_branch
      %852 = sbr.rel (0) target = $region481
    $region480: #{tpu_custom_call.1} parent=1 // pred_region
      %853 = vsyncadd [#allocation3], 16
    $region481: #{tpu_custom_call.1} parent=1 // pred_fallthru
      _
    loop: start=0, step=1, limit=16
    $region482: #{tpu_custom_call.1} parent=1 // loop_pre_header
      _
    $region483: #{tpu_custom_call.1} parent=1 // loop_header
      %s855 = sphi 0, %s859
      %p856 = scmp.ge.s32.totalorder %s855, 16
    $region484: #{tpu_custom_call.1} parent=1 // loop_header_branch
      %858 = sbr.rel (%p856) target = $region488
    $region485: #{tpu_custom_call.1} parent=1 // loop_body
      %s860 = sand.u32 %s855, 1
      %s861 = scalar_lea.sflag [#allocation3], %s860
      %863 = dma.done %s861, 16
      %s864 = sadd.s32 %s855, 1
      %p865 = scmp.lt.s32.totalorder %s864, 16
      // Predicated region
      $region489: #{tpu_custom_call.1} parent=485 // pred_check
        %p866 = pneg %p865
      $region490: #{tpu_custom_call.1} parent=485 // pred_check_branch
        %868 = sbr.rel (%p866) target = $region492
      $region491: #{tpu_custom_call.1} parent=485 // pred_region
        %s869 = sshra.s32 %s864, 7
        %s870 = sand.u32 %s864, 127
        %s871 = sadd.s32 %s869, %s806
        %s872 = smul.u32 %s871, 128
        %s873 = sshra.s32 %s864, 7
        %s874 = sand.u32 %s864, 127
        %s875 = sadd.s32 %s872, %s874
        %s876 = sld [smem:[#allocation6 + %s875]]
        %s877 = ssub.s32 1, %s860
        %s878 = scalar_lea.vmem %s1, %s876
        %s879 = scalar_lea.vmem [#allocation2], %s877
        %s880 = scalar_lea.sflag [#allocation3], %s877
        %p882 = scmp.lt.u32.totalorder 1, 8
        %p883 = pneg %p882
        // Predicated region
        $region493: #{tpu_custom_call.1} parent=491 // pred_check
          _
        $region494: #{tpu_custom_call.1} parent=491 // pred_check_branch
          %885 = sbr.rel (%p882) target = $region496
        $region495: #{tpu_custom_call.1} parent=491 // pred_region
          %s900 = sand.u32 1, 7
          %p901 = scmp.eq.s32.totalorder %s900, 0
          %p902 = pneg %p901
          // Predicated region
          $region508: #{tpu_custom_call.1} parent=495 // pred_check
            _
          $region509: #{tpu_custom_call.1} parent=495 // pred_check_branch
            %904 = sbr.rel (%p901) target = $region511
          $region510: #{tpu_custom_call.1} parent=495 // pred_region
            %s905 = sand.u32 1, 7
            %s906 = ssub.s32 1, %s905
            %s907 = scalar_lea.vmem %s878, %s906
            %s908 = ssub.s32 1, %s905
            %s909 = scalar_lea.vmem %s879, %s908 [#allocation2]
            %s910 = sshllo.u32 0, %s905
            loop: start=0, step=1, limit=1
            $region512: #{tpu_custom_call.1} parent=510 // loop_pre_header
              _
            $region513: #{tpu_custom_call.1} parent=510 // loop_header
              %s912 = sphi 0, %s916
              %p913 = scmp.ge.s32.totalorder %s912, 1
              %s917 = sphi %s907, %s907
              %s918 = sphi %s909, %s909
            $region514: #{tpu_custom_call.1} parent=510 // loop_header_branch
              %915 = sbr.rel (%p913) target = $region518
            $region515: #{tpu_custom_call.1} parent=510 // loop_body
              %v919 = vld [vmem:[%s917] sm:%s910]
              %920 = vst [vmem:[%s918] sm:%s910] %v919
            $region516: #{tpu_custom_call.1} parent=510 // loop_footer
              %s916 = sadd.s32 1, %s912
            $region517: #{tpu_custom_call.1} parent=510 // loop_footer_branch
              %911 = sbr.rel target = $region513
            $region518: #{tpu_custom_call.1} parent=510 // loop_exit
              _
          $region511: #{tpu_custom_call.1} parent=495 // pred_fallthru
            _
        $region496: #{tpu_custom_call.1} parent=491 // pred_fallthru
          _
        // Predicated region
        $region497: #{tpu_custom_call.1} parent=491 // pred_check
          %p886 = pneg %p882
        $region498: #{tpu_custom_call.1} parent=491 // pred_check_branch
          %888 = sbr.rel (%p886) target = $region500
        $region499: #{tpu_custom_call.1} parent=491 // pred_region
          %s889 = sshllo.u32 0, 1
          loop: start=0, step=1, limit=1
          $region501: #{tpu_custom_call.1} parent=499 // loop_pre_header
            _
          $region502: #{tpu_custom_call.1} parent=499 // loop_header
            %s891 = sphi 0, %s895
            %p892 = scmp.ge.s32.totalorder %s891, 1
            %s896 = sphi %s878, %s878
            %s897 = sphi %s879, %s879
          $region503: #{tpu_custom_call.1} parent=499 // loop_header_branch
            %894 = sbr.rel (%p892) target = $region507
          $region504: #{tpu_custom_call.1} parent=499 // loop_body
            %v898 = vld [vmem:[%s896] sm:%s889]
            %899 = vst [vmem:[%s897] sm:%s889] %v898
          $region505: #{tpu_custom_call.1} parent=499 // loop_footer
            %s895 = sadd.s32 1, %s891
          $region506: #{tpu_custom_call.1} parent=499 // loop_footer_branch
            %890 = sbr.rel target = $region502
          $region507: #{tpu_custom_call.1} parent=499 // loop_exit
            _
        $region500: #{tpu_custom_call.1} parent=491 // pred_fallthru
          _
        // Predicated region
        $region519: #{tpu_custom_call.1} parent=491 // pred_check
          _
        $region520: #{tpu_custom_call.1} parent=491 // pred_check_branch
          %923 = sbr.rel (0) target = $region522
        $region521: #{tpu_custom_call.1} parent=491 // pred_region
          %924 = vsyncadd %s880, 16
        $region522: #{tpu_custom_call.1} parent=491 // pred_fallthru
          _
      $region492: #{tpu_custom_call.1} parent=485 // pred_fallthru
        _
      %v925 = vld [vmem:[#allocation4 + $0x6] sm:$0x1]
      %s926 = scalar_lea.vmem [#allocation2], %s860
      %v927 = vld [vmem:[%s926] sm:$0x1]
      %v928 = vadd.f32 %v925, %v927
      %vm929 = vcmask 253952
      %930 = vst.msk [vmem:[#allocation4 + $0x6] sm:$0x1] %vm929, %v928
    $region486: #{tpu_custom_call.1} parent=1 // loop_footer
      %s859 = sadd.s32 1, %s855
    $region487: #{tpu_custom_call.1} parent=1 // loop_footer_branch
      %854 = sbr.rel target = $region483
    $region488: #{tpu_custom_call.1} parent=1 // loop_exit
      _
    %s931 = sadd.s32 %s56, 7
    %s932 = smul.u32 %s931, 128
    %s933 = sld [smem:[#allocation6 + %s932]]
    %s934 = scalar_lea.vmem %s1, %s933
    %p936 = scmp.lt.u32.totalorder 1, 8
    %p937 = pneg %p936
    // Predicated region
    $region523: #{tpu_custom_call.1} parent=1 // pred_check
      _
    $region524: #{tpu_custom_call.1} parent=1 // pred_check_branch
      %939 = sbr.rel (%p936) target = $region526
    $region525: #{tpu_custom_call.1} parent=1 // pred_region
      %s954 = sand.u32 1, 7
      %p955 = scmp.eq.s32.totalorder %s954, 0
      %p956 = pneg %p955
      // Predicated region
      $region538: #{tpu_custom_call.1} parent=525 // pred_check
        _
      $region539: #{tpu_custom_call.1} parent=525 // pred_check_branch
        %958 = sbr.rel (%p955) target = $region541
      $region540: #{tpu_custom_call.1} parent=525 // pred_region
        %s959 = sand.u32 1, 7
        %s960 = ssub.s32 1, %s959
        %s961 = scalar_lea.vmem %s934, %s960
        %s962 = ssub.s32 1, %s959
        %s963 = scalar_lea.vmem [#allocation2], %s962
        %s964 = sshllo.u32 0, %s959
        loop: start=0, step=1, limit=1
        $region542: #{tpu_custom_call.1} parent=540 // loop_pre_header
          _
        $region543: #{tpu_custom_call.1} parent=540 // loop_header
          %s966 = sphi 0, %s970
          %p967 = scmp.ge.s32.totalorder %s966, 1
          %s971 = sphi %s961, %s961
          %s972 = sphi %s963, %s963
        $region544: #{tpu_custom_call.1} parent=540 // loop_header_branch
          %969 = sbr.rel (%p967) target = $region548
        $region545: #{tpu_custom_call.1} parent=540 // loop_body
          %v973 = vld [vmem:[%s971] sm:%s964]
          %974 = vst [vmem:[%s972] sm:%s964] %v973
        $region546: #{tpu_custom_call.1} parent=540 // loop_footer
          %s970 = sadd.s32 1, %s966
        $region547: #{tpu_custom_call.1} parent=540 // loop_footer_branch
          %965 = sbr.rel target = $region543
        $region548: #{tpu_custom_call.1} parent=540 // loop_exit
          _
      $region541: #{tpu_custom_call.1} parent=525 // pred_fallthru
        _
    $region526: #{tpu_custom_call.1} parent=1 // pred_fallthru
      _
    // Predicated region
    $region527: #{tpu_custom_call.1} parent=1 // pred_check
      %p940 = pneg %p936
    $region528: #{tpu_custom_call.1} parent=1 // pred_check_branch
      %942 = sbr.rel (%p940) target = $region530
    $region529: #{tpu_custom_call.1} parent=1 // pred_region
      %s943 = sshllo.u32 0, 1
      loop: start=0, step=1, limit=1
      $region531: #{tpu_custom_call.1} parent=529 // loop_pre_header
        _
      $region532: #{tpu_custom_call.1} parent=529 // loop_header
        %s945 = sphi 0, %s949
        %p946 = scmp.ge.s32.totalorder %s945, 1
        %s950 = sphi %s934, %s934
        %s951 = sphi [#allocation2], [#allocation2]
      $region533: #{tpu_custom_call.1} parent=529 // loop_header_branch
        %948 = sbr.rel (%p946) target = $region537
      $region534: #{tpu_custom_call.1} parent=529 // loop_body
        %v952 = vld [vmem:[%s950] sm:%s943]
        %953 = vst [vmem:[%s951] sm:%s943] %v952
      $region535: #{tpu_custom_call.1} parent=529 // loop_footer
        %s949 = sadd.s32 1, %s945
      $region536: #{tpu_custom_call.1} parent=529 // loop_footer_branch
        %944 = sbr.rel target = $region532
      $region537: #{tpu_custom_call.1} parent=529 // loop_exit
        _
    $region530: #{tpu_custom_call.1} parent=1 // pred_fallthru
      _
    // Predicated region
    $region549: #{tpu_custom_call.1} parent=1 // pred_check
      _
    $region550: #{tpu_custom_call.1} parent=1 // pred_check_branch
      %977 = sbr.rel (0) target = $region552
    $region551: #{tpu_custom_call.1} parent=1 // pred_region
      %978 = vsyncadd [#allocation3], 16
    $region552: #{tpu_custom_call.1} parent=1 // pred_fallthru
      _
    loop: start=0, step=1, limit=16
    $region553: #{tpu_custom_call.1} parent=1 // loop_pre_header
      _
    $region554: #{tpu_custom_call.1} parent=1 // loop_header
      %s980 = sphi 0, %s984
      %p981 = scmp.ge.s32.totalorder %s980, 16
    $region555: #{tpu_custom_call.1} parent=1 // loop_header_branch
      %983 = sbr.rel (%p981) target = $region559
    $region556: #{tpu_custom_call.1} parent=1 // loop_body
      %s985 = sand.u32 %s980, 1
      %s986 = scalar_lea.sflag [#allocation3], %s985
      %988 = dma.done %s986, 16
      %s989 = sadd.s32 %s980, 1
      %p990 = scmp.lt.s32.totalorder %s989, 16
      // Predicated region
      $region560: #{tpu_custom_call.1} parent=556 // pred_check
        %p991 = pneg %p990
      $region561: #{tpu_custom_call.1} parent=556 // pred_check_branch
        %993 = sbr.rel (%p991) target = $region563
      $region562: #{tpu_custom_call.1} parent=556 // pred_region
        %s994 = sshra.s32 %s989, 7
        %s995 = sand.u32 %s989, 127
        %s996 = sadd.s32 %s994, %s931
        %s997 = smul.u32 %s996, 128
        %s998 = sshra.s32 %s989, 7
        %s999 = sand.u32 %s989, 127
        %s1000 = sadd.s32 %s997, %s999
        %s1001 = sld [smem:[#allocation6 + %s1000]]
        %s1002 = ssub.s32 1, %s985
        %s1003 = scalar_lea.vmem %s1, %s1001
        %s1004 = scalar_lea.vmem [#allocation2], %s1002
        %s1005 = scalar_lea.sflag [#allocation3], %s1002
        %p1007 = scmp.lt.u32.totalorder 1, 8
        %p1008 = pneg %p1007
        // Predicated region
        $region564: #{tpu_custom_call.1} parent=562 // pred_check
          _
        $region565: #{tpu_custom_call.1} parent=562 // pred_check_branch
          %1010 = sbr.rel (%p1007) target = $region567
        $region566: #{tpu_custom_call.1} parent=562 // pred_region
          %s1025 = sand.u32 1, 7
          %p1026 = scmp.eq.s32.totalorder %s1025, 0
          %p1027 = pneg %p1026
          // Predicated region
          $region579: #{tpu_custom_call.1} parent=566 // pred_check
            _
          $region580: #{tpu_custom_call.1} parent=566 // pred_check_branch
            %1029 = sbr.rel (%p1026) target = $region582
          $region581: #{tpu_custom_call.1} parent=566 // pred_region
            %s1030 = sand.u32 1, 7
            %s1031 = ssub.s32 1, %s1030
            %s1032 = scalar_lea.vmem %s1003, %s1031
            %s1033 = ssub.s32 1, %s1030
            %s1034 = scalar_lea.vmem %s1004, %s1033 [#allocation2]
            %s1035 = sshllo.u32 0, %s1030
            loop: start=0, step=1, limit=1
            $region583: #{tpu_custom_call.1} parent=581 // loop_pre_header
              _
            $region584: #{tpu_custom_call.1} parent=581 // loop_header
              %s1037 = sphi 0, %s1041
              %p1038 = scmp.ge.s32.totalorder %s1037, 1
              %s1042 = sphi %s1032, %s1032
              %s1043 = sphi %s1034, %s1034
            $region585: #{tpu_custom_call.1} parent=581 // loop_header_branch
              %1040 = sbr.rel (%p1038) target = $region589
            $region586: #{tpu_custom_call.1} parent=581 // loop_body
              %v1044 = vld [vmem:[%s1042] sm:%s1035]
              %1045 = vst [vmem:[%s1043] sm:%s1035] %v1044
            $region587: #{tpu_custom_call.1} parent=581 // loop_footer
              %s1041 = sadd.s32 1, %s1037
            $region588: #{tpu_custom_call.1} parent=581 // loop_footer_branch
              %1036 = sbr.rel target = $region584
            $region589: #{tpu_custom_call.1} parent=581 // loop_exit
              _
          $region582: #{tpu_custom_call.1} parent=566 // pred_fallthru
            _
        $region567: #{tpu_custom_call.1} parent=562 // pred_fallthru
          _
        // Predicated region
        $region568: #{tpu_custom_call.1} parent=562 // pred_check
          %p1011 = pneg %p1007
        $region569: #{tpu_custom_call.1} parent=562 // pred_check_branch
          %1013 = sbr.rel (%p1011) target = $region571
        $region570: #{tpu_custom_call.1} parent=562 // pred_region
          %s1014 = sshllo.u32 0, 1
          loop: start=0, step=1, limit=1
          $region572: #{tpu_custom_call.1} parent=570 // loop_pre_header
            _
          $region573: #{tpu_custom_call.1} parent=570 // loop_header
            %s1016 = sphi 0, %s1020
            %p1017 = scmp.ge.s32.totalorder %s1016, 1
            %s1021 = sphi %s1003, %s1003
            %s1022 = sphi %s1004, %s1004
          $region574: #{tpu_custom_call.1} parent=570 // loop_header_branch
            %1019 = sbr.rel (%p1017) target = $region578
          $region575: #{tpu_custom_call.1} parent=570 // loop_body
            %v1023 = vld [vmem:[%s1021] sm:%s1014]
            %1024 = vst [vmem:[%s1022] sm:%s1014] %v1023
          $region576: #{tpu_custom_call.1} parent=570 // loop_footer
            %s1020 = sadd.s32 1, %s1016
          $region577: #{tpu_custom_call.1} parent=570 // loop_footer_branch
            %1015 = sbr.rel target = $region573
          $region578: #{tpu_custom_call.1} parent=570 // loop_exit
            _
        $region571: #{tpu_custom_call.1} parent=562 // pred_fallthru
          _
        // Predicated region
        $region590: #{tpu_custom_call.1} parent=562 // pred_check
          _
        $region591: #{tpu_custom_call.1} parent=562 // pred_check_branch
          %1048 = sbr.rel (0) target = $region593
        $region592: #{tpu_custom_call.1} parent=562 // pred_region
          %1049 = vsyncadd %s1005, 16
        $region593: #{tpu_custom_call.1} parent=562 // pred_fallthru
          _
      $region563: #{tpu_custom_call.1} parent=556 // pred_fallthru
        _
      %v1050 = vld [vmem:[#allocation4 + $0x7] sm:$0x1]
      %s1051 = scalar_lea.vmem [#allocation2], %s985
      %v1052 = vld [vmem:[%s1051] sm:$0x1]
      %v1053 = vadd.f32 %v1050, %v1052
      %vm1054 = vcmask 253952
      %1055 = vst.msk [vmem:[#allocation4 + $0x7] sm:$0x1] %vm1054, %v1053
    $region557: #{tpu_custom_call.1} parent=1 // loop_footer
      %s984 = sadd.s32 1, %s980
    $region558: #{tpu_custom_call.1} parent=1 // loop_footer_branch
      %979 = sbr.rel target = $region554
    $region559: #{tpu_custom_call.1} parent=1 // loop_exit
      _
    %v1056 = vld [vmem:[#allocation4] sm:$0xff]
    %v1057 = vmul.f32 %v1056, 0.0625
    %v1058 = vsel %vm54, %v1057, 0.0
    %1059 = vadd.xlane.f32.xlu0 %v1058
    %v1060 = vpop.xlane.xlu0 %1059
    %v1061 = vrcp.pop 32.0
    %v1062 = vmul.f32 %v1060, %v1061
    %v1063 = vsub.f32 %v1057, %v1062
    %v1064 = vmul.f32 %v1063, %v1063
    %v1065 = vsel %vm54, %v1064, 0.0
    %1066 = vadd.xlane.f32.xlu0 %v1065
    %v1067 = vpop.xlane.xlu0 %1066
    %v1068 = vmul.f32 %v1067, %v1061
    %v1069 = vadd.f32 %v1068, 1e-05
    %v1070 = vrsqrt.pop %v1069
    %v1071 = vmul.f32 %v1063, %v1070
    %v1072 = vld [vmem:[%s2] sm:$0xff]
    %v1073 = vld [vmem:[%s2 + $0x8] sm:$0xff]
    %v1074 = vld [vmem:[%s2 + $0x10] sm:$0xff]
    %v1075 = vld [vmem:[%s2 + $0x18] sm:$0xff]
    %v1076 = vld [vmem:[%s3] sm:$0x1]
    %v1078 = vlaneseq
    %v1079 = vshrl.u32 %v1078, 7
    %v1080 = vsub.s32 0, %v1079
    %v1081 = vrot.slane %v1076, %v1080
    %v1084 = vsel %vm54, %v1071, 0
    %1086 = vmatprep.subr.mxu0 0.0
    %1087 = vmatpush1.msra.mxu0 %v1072
    %1088 = vmatprep.subr.mxu0 0.0
    %1089 = vmatpush1.msra.mxu0 %v1073
    %1090 = vmatprep.subr.mxu0 0.0
    %1091 = vmatpush1.msra.mxu0 %v1074
    %1092 = vmatprep.subr.mxu0 0.0
    %1093 = vmatpush1.msra.mxu0 %v1075
    %1094 = vmatprep.subr.mxu0 0.0
    %1095 = vmatpush1.msra.mxu0 0.0
    %1096 = vmatprep.subr.mxu0 0.0
    %1097 = vmatpush1.msra.mxu0 0.0
    %1098 = vmatprep.subr.mxu0 0.0
    %1099 = vmatpush1.msra.mxu0 0.0
    %1100 = vmatprep.subr.mxu0 0.0
    %1101 = vmatpush1.msra.mxu0 0.0
    %1102 = vmatprep.subr.mxu0 0.0
    %1103 = vmatpush1.msra.mxu0 0.0
    %1104 = vmatprep.subr.mxu0 0.0
    %1105 = vmatpush1.msra.mxu0 0.0
    %1106 = vmatprep.subr.mxu0 0.0
    %1107 = vmatpush1.msra.mxu0 0.0
    %1108 = vmatprep.subr.mxu0 0.0
    %1109 = vmatpush1.msra.mxu0 0.0
    %1110 = vmatprep.subr.mxu0 0.0
    %1111 = vmatpush1.msra.mxu0 0.0
    %1112 = vmatprep.subr.mxu0 0.0
    %1113 = vmatpush1.msra.mxu0 0.0
    %1114 = vmatprep.subr.mxu0 0.0
    %1115 = vmatpush1.msra.mxu0 0.0
    %1116 = vmatprep.subr.mxu0 0.0
    %1117 = vmatpush1.msra.mxu0 0.0
    %1118 = vmatprep.subr.mxu0 0.0
    %1119 = vmatpush1.msra.mxu0 0.0
    %1120 = vmatprep.subr.mxu0 0.0
    %1121 = vmatpush1.msra.mxu0 0.0
    %1122 = vmatprep.subr.mxu0 0.0
    %1123 = vmatpush1.msra.mxu0 0.0
    %1124 = vmatprep.subr.mxu0 0.0
    %1125 = vmatpush1.msra.mxu0 0.0
    %1126 = vmatprep.subr.mxu0 0.0
    %1127 = vmatpush1.msra.mxu0 0.0
    %1128 = vmatprep.subr.mxu0 0.0
    %1129 = vmatpush1.msra.mxu0 0.0
    %1130 = vmatprep.subr.mxu0 0.0
    %1131 = vmatpush1.msra.mxu0 0.0
    %1132 = vmatprep.subr.mxu0 0.0
    %1133 = vmatpush1.msra.mxu0 0.0
    %1134 = vmatprep.subr.mxu0 0.0
    %1135 = vmatpush1.msra.mxu0 0.0
    %1136 = vmatprep.subr.mxu0 0.0
    %1137 = vmatpush1.msra.mxu0 0.0
    %1138 = vmatprep.subr.mxu0 0.0
    %1139 = vmatpush1.msra.mxu0 0.0
    %1140 = vmatprep.subr.mxu0 0.0
    %1141 = vmatpush1.msra.mxu0 0.0
    %1142 = vmatprep.subr.mxu0 0.0
    %1143 = vmatpush1.msra.mxu0 0.0
    %1144 = vmatprep.subr.mxu0 0.0
    %1145 = vmatpush1.msra.mxu0 0.0
    %1146 = vmatprep.subr.mxu0 0.0
    %1147 = vmatpush1.msra.mxu0 0.0
    %1148 = vmatprep.subr.mxu0 0.0
    %1149 = vmatpush1.msra.mxu0 0.0
    %1150 = vmatprep.mubr.f32.mxu0 0.0
    %1151 = vmatmul.mubr.f32.gmra.mrb[0].mxu0 %v1084
    %v1152 = vpop.f32.mrb[0].mxu0
    %v1153 = vadd.f32 %v1081, %v1152
    %v1154 = vpop.f32.mrb[0].mxu0
    %1155 = vdwg.mxu0
    %v1156 = vmin.f32 %v1153, 0.0
    %v1157 = vand.u32 2147483647, %v1153
    %v1158 = vsub.f32 0.0, %v1157
    %v1159 = vmul.f32 %v1158, 1.442695
    %v1160 = vpow.pop %v1159
    %v1161 = vadd.f32 %v1160, 1.0
    %v1162 = vlog2.pop %v1161
    %v1163 = vmul.f32 %v1162, 0.6931472
    %v1164 = vmul.f32 -0.5, %v1160
    %v1165 = vadd.f32 %v1164, 1.0
    %v1166 = vmul.f32 %v1165, %v1160
    %v1167 = vand.u32 2147483647, %v1160
    %vm1168 = vcmp.lt.f32.partialorder %v1167, 0.0004427343
    %v1169 = vsel %vm1168, %v1166, %v1163
    %v1170 = vsub.f32 %v1156, %v1169
    %v1171 = vld [vmem:[#allocation10] sm:$0xff]
    %v1172 = vld [vmem:[#allocation10 + $0x8] sm:$0xff]
    %v1173 = vld [vmem:[#allocation10 + $0x10] sm:$0xff]
    %v1174 = vld [vmem:[#allocation10 + $0x18] sm:$0xff]
    %v1175 = vld [vmem:[#allocation10 + $0x20] sm:$0xff]
    %v1176 = vld [vmem:[#allocation10 + $0x28] sm:$0xff]
    %v1177 = vld [vmem:[#allocation10 + $0x30] sm:$0xff]
    %v1178 = vld [vmem:[#allocation10 + $0x38] sm:$0xff]
    %v1179 = vld [vmem:[#allocation10 + $0x40] sm:$0xff]
    %v1180 = vld [vmem:[#allocation10 + $0x48] sm:$0xff]
    %v1181 = vld [vmem:[#allocation10 + $0x50] sm:$0xff]
    %v1182 = vld [vmem:[#allocation10 + $0x58] sm:$0xff]
    %v1183 = vld [vmem:[#allocation10 + $0x60] sm:$0xff]
    %v1184 = vld [vmem:[#allocation10 + $0x68] sm:$0xff]
    %v1185 = vld [vmem:[#allocation10 + $0x70] sm:$0xff]
    %v1186 = vld [vmem:[#allocation10 + $0x78] sm:$0xff]
    %1187 = vmatprep.subr.mxu0 0.0
    %1188 = vmatpush1.msra.mxu0 %v1171
    %1189 = vmatprep.subr.mxu0 0.0
    %1190 = vmatpush1.msra.mxu0 %v1172
    %1191 = vmatprep.subr.mxu0 0.0
    %1192 = vmatpush1.msra.mxu0 %v1173
    %1193 = vmatprep.subr.mxu0 0.0
    %1194 = vmatpush1.msra.mxu0 %v1174
    %1195 = vmatprep.subr.mxu0 0.0
    %1196 = vmatpush1.msra.mxu0 %v1175
    %1197 = vmatprep.subr.mxu0 0.0
    %1198 = vmatpush1.msra.mxu0 %v1176
    %1199 = vmatprep.subr.mxu0 0.0
    %1200 = vmatpush1.msra.mxu0 %v1177
    %1201 = vmatprep.subr.mxu0 0.0
    %1202 = vmatpush1.msra.mxu0 %v1178
    %1203 = vmatprep.subr.mxu0 0.0
    %1204 = vmatpush1.msra.mxu0 %v1179
    %1205 = vmatprep.subr.mxu0 0.0
    %1206 = vmatpush1.msra.mxu0 %v1180
    %1207 = vmatprep.subr.mxu0 0.0
    %1208 = vmatpush1.msra.mxu0 %v1181
    %1209 = vmatprep.subr.mxu0 0.0
    %1210 = vmatpush1.msra.mxu0 %v1182
    %1211 = vmatprep.subr.mxu0 0.0
    %1212 = vmatpush1.msra.mxu0 %v1183
    %1213 = vmatprep.subr.mxu0 0.0
    %1214 = vmatpush1.msra.mxu0 %v1184
    %1215 = vmatprep.subr.mxu0 0.0
    %1216 = vmatpush1.msra.mxu0 %v1185
    %1217 = vmatprep.subr.mxu0 0.0
    %1218 = vmatpush1.msra.mxu0 %v1186
    %1219 = vmatprep.subr.mxu0 0.0
    %1220 = vmatpush1.msra.mxu0 0.0
    %1221 = vmatprep.subr.mxu0 0.0
    %1222 = vmatpush1.msra.mxu0 0.0
    %1223 = vmatprep.subr.mxu0 0.0
    %1224 = vmatpush1.msra.mxu0 0.0
    %1225 = vmatprep.subr.mxu0 0.0
    %1226 = vmatpush1.msra.mxu0 0.0
    %1227 = vmatprep.subr.mxu0 0.0
    %1228 = vmatpush1.msra.mxu0 0.0
    %1229 = vmatprep.subr.mxu0 0.0
    %1230 = vmatpush1.msra.mxu0 0.0
    %1231 = vmatprep.subr.mxu0 0.0
    %1232 = vmatpush1.msra.mxu0 0.0
    %1233 = vmatprep.subr.mxu0 0.0
    %1234 = vmatpush1.msra.mxu0 0.0
    %1235 = vmatprep.subr.mxu0 0.0
    %1236 = vmatpush1.msra.mxu0 0.0
    %1237 = vmatprep.subr.mxu0 0.0
    %1238 = vmatpush1.msra.mxu0 0.0
    %1239 = vmatprep.subr.mxu0 0.0
    %1240 = vmatpush1.msra.mxu0 0.0
    %1241 = vmatprep.subr.mxu0 0.0
    %1242 = vmatpush1.msra.mxu0 0.0
    %1243 = vmatprep.subr.mxu0 0.0
    %1244 = vmatpush1.msra.mxu0 0.0
    %1245 = vmatprep.subr.mxu0 0.0
    %1246 = vmatpush1.msra.mxu0 0.0
    %1247 = vmatprep.subr.mxu0 0.0
    %1248 = vmatpush1.msra.mxu0 0.0
    %1249 = vmatprep.subr.mxu0 0.0
    %1250 = vmatpush1.msra.mxu0 0.0
    %1251 = vmatprep.mubr.f32.mxu0 0.0
    %1252 = vmatmul.mubr.f32.gmra.mrb[0].mxu0 %v1170
    %v1253 = vpop.f32.mrb[0].mxu0
    %v1254 = vadd.f32 0.0, %v1253
    %v1255 = vpop.f32.mrb[0].mxu0
    %1256 = vdwg.mxu0
    %v1257 = vld [vmem:[#allocation7] sm:$0xff]
    %v1258 = vld [vmem:[#allocation7 + $0x8] sm:$0xff]
    %v1259 = vld [vmem:[#allocation7 + $0x10] sm:$0xff]
    %v1260 = vld [vmem:[#allocation7 + $0x18] sm:$0xff]
    %v1261 = vld [vmem:[#allocation7 + $0x20] sm:$0xff]
    %v1262 = vld [vmem:[#allocation7 + $0x28] sm:$0xff]
    %v1263 = vld [vmem:[#allocation7 + $0x30] sm:$0xff]
    %v1264 = vld [vmem:[#allocation7 + $0x38] sm:$0xff]
    %v1265 = vld [vmem:[#allocation7 + $0x40] sm:$0xff]
    %v1266 = vld [vmem:[#allocation7 + $0x48] sm:$0xff]
    %v1267 = vld [vmem:[#allocation7 + $0x50] sm:$0xff]
    %v1268 = vld [vmem:[#allocation7 + $0x58] sm:$0xff]
    %v1269 = vld [vmem:[#allocation7 + $0x60] sm:$0xff]
    %v1270 = vld [vmem:[#allocation7 + $0x68] sm:$0xff]
    %v1271 = vld [vmem:[#allocation7 + $0x70] sm:$0xff]
    %v1272 = vld [vmem:[#allocation7 + $0x78] sm:$0xff]
    %1273 = vmatprep.subr.mxu0 0.0
    %1274 = vmatpush1.msra.mxu0 %v1257
    %1275 = vmatprep.subr.mxu0 0.0
    %1276 = vmatpush1.msra.mxu0 %v1258
    %1277 = vmatprep.subr.mxu0 0.0
    %1278 = vmatpush1.msra.mxu0 %v1259
    %1279 = vmatprep.subr.mxu0 0.0
    %1280 = vmatpush1.msra.mxu0 %v1260
    %1281 = vmatprep.subr.mxu0 0.0
    %1282 = vmatpush1.msra.mxu0 %v1261
    %1283 = vmatprep.subr.mxu0 0.0
    %1284 = vmatpush1.msra.mxu0 %v1262
    %1285 = vmatprep.subr.mxu0 0.0
    %1286 = vmatpush1.msra.mxu0 %v1263
    %1287 = vmatprep.subr.mxu0 0.0
    %1288 = vmatpush1.msra.mxu0 %v1264
    %1289 = vmatprep.subr.mxu0 0.0
    %1290 = vmatpush1.msra.mxu0 %v1265
    %1291 = vmatprep.subr.mxu0 0.0
    %1292 = vmatpush1.msra.mxu0 %v1266
    %1293 = vmatprep.subr.mxu0 0.0
    %1294 = vmatpush1.msra.mxu0 %v1267
    %1295 = vmatprep.subr.mxu0 0.0
    %1296 = vmatpush1.msra.mxu0 %v1268
    %1297 = vmatprep.subr.mxu0 0.0
    %1298 = vmatpush1.msra.mxu0 %v1269
    %1299 = vmatprep.subr.mxu0 0.0
    %1300 = vmatpush1.msra.mxu0 %v1270
    %1301 = vmatprep.subr.mxu0 0.0
    %1302 = vmatpush1.msra.mxu0 %v1271
    %1303 = vmatprep.subr.mxu0 0.0
    %1304 = vmatpush1.msra.mxu0 %v1272
    %1305 = vmatprep.subr.mxu0 0.0
    %1306 = vmatpush1.msra.mxu0 0.0
    %1307 = vmatprep.subr.mxu0 0.0
    %1308 = vmatpush1.msra.mxu0 0.0
    %1309 = vmatprep.subr.mxu0 0.0
    %1310 = vmatpush1.msra.mxu0 0.0
    %1311 = vmatprep.subr.mxu0 0.0
    %1312 = vmatpush1.msra.mxu0 0.0
    %1313 = vmatprep.subr.mxu0 0.0
    %1314 = vmatpush1.msra.mxu0 0.0
    %1315 = vmatprep.subr.mxu0 0.0
    %1316 = vmatpush1.msra.mxu0 0.0
    %1317 = vmatprep.subr.mxu0 0.0
    %1318 = vmatpush1.msra.mxu0 0.0
    %1319 = vmatprep.subr.mxu0 0.0
    %1320 = vmatpush1.msra.mxu0 0.0
    %1321 = vmatprep.subr.mxu0 0.0
    %1322 = vmatpush1.msra.mxu0 0.0
    %1323 = vmatprep.subr.mxu0 0.0
    %1324 = vmatpush1.msra.mxu0 0.0
    %1325 = vmatprep.subr.mxu0 0.0
    %1326 = vmatpush1.msra.mxu0 0.0
    %1327 = vmatprep.subr.mxu0 0.0
    %1328 = vmatpush1.msra.mxu0 0.0
    %1329 = vmatprep.subr.mxu0 0.0
    %1330 = vmatpush1.msra.mxu0 0.0
    %1331 = vmatprep.subr.mxu0 0.0
    %1332 = vmatpush1.msra.mxu0 0.0
    %1333 = vmatprep.subr.mxu0 0.0
    %1334 = vmatpush1.msra.mxu0 0.0
    %1335 = vmatprep.subr.mxu0 0.0
    %1336 = vmatpush1.msra.mxu0 0.0
    %1337 = vmatprep.mubr.f32.mxu0 0.0
    %1338 = vmatmul.mubr.f32.gmra.mrb[0].mxu0 %v1153
    %v1339 = vpop.f32.mrb[0].mxu0
    %v1340 = vadd.f32 0.0, %v1339
    %v1341 = vpop.f32.mrb[0].mxu0
    %1342 = vdwg.mxu0
    %v1343 = vsub.f32 %v1254, %v1340
    %v1344 = vmul.f32 %v1343, 1.442695
    %v1345 = vpow.pop %v1344
    %1346 = vst [vmem:[#allocation12] sm:$0xff] %v1345
    // Predicated region
    $region594: #{tpu_custom_call.1} parent=1 // pred_check
      _
    $region595: #{tpu_custom_call.1} parent=1 // pred_check_branch
      %1348 = sbr.rel (0) target = $region597
    $region596: #{tpu_custom_call.1} parent=1 // pred_region
      %s1350 = ssub.s32 128, 128
      %1351 = vsyncadd [#allocation9], %s1350
      %s1353 = sshll.u32 [#allocation12], 4
      %s1354 = int_to_ptr.vmem [resolvable:$true] %s1353
      %1356 = dma.vmem_to_hbm [thread:$0]  %s1354, 128, %s6, [#allocation9]
    $region597: #{tpu_custom_call.1} parent=1 // pred_fallthru
      _
    // Predicated region
    $region598: #{tpu_custom_call.1} parent=1 // pred_check
      _
    $region599: #{tpu_custom_call.1} parent=1 // pred_check_branch
      %1358 = sbr.rel (0) target = $region601
    $region600: #{tpu_custom_call.1} parent=1 // pred_region
      %1359 = dma.done [#allocation9], 128
    $region601: #{tpu_custom_call.1} parent=1 // pred_fallthru
      _
    %1360 = vsyncpa [#allocation8], 1
    %1361 = vsyncpa [#allocation11], 1
    %1362 = vsyncpa [#allocation9], 1
  %1363 = vsyncmov [#allocation3]
  %s1364 = vpop.sfrf %1363
  %p1365 = scmp.eq.s32.totalorder %s1364, 0
  %p1366 = pneg %p1365
  %1368 = shalt.err (%p1366)
  %s1369 = scalar_lea.sflag [#allocation3], 1
  %1370 = vsyncmov %s1369
  %s1371 = vpop.sfrf %1370
  %p1372 = scmp.eq.s32.totalorder %s1371, 0
  %p1373 = pneg %p1372
  %1375 = shalt.err (%p1373)

</llo_original>
